<compile_context>
chip_gen: v6e
topology: v6e:2x2x1
jax: 0.10.0
libtpu: 0.0.40
codegen_flags: <defaults>
</compile_context>

<pallas_src>
import jax
import jax.numpy as jnp
from jax.experimental import pallas as pl
from jax.experimental.pallas import tpu as pltpu

# ------------------------- static model configuration -----------------------
PATCH = 4
IN_CHANS = 3
NUM_CLASSES = 1
D0 = 32            # encoder stage-1 / decoder feature dim
D1 = 2 * D0        # bottleneck feature dim
C_FINAL = 16       # channels before the (folded) segmentation head
DEPTH_ENC1 = 2
DEPTH_ENC2 = 2
DEPTH_DEC1 = 2

ROW_TILE_TARGET = 512                 # f32 rows -> sublane multiple of 8
VMEM_LIMIT_BYTES = 32 * 1024 * 1024   # safe on v5e/v6e (128 MiB) and v7x (64 MiB)

_EPS = 1e-5


# ------------------------------ kernel helpers ------------------------------

def _layernorm(y, gamma, beta):
    mu = jnp.mean(y, axis=-1, keepdims=True)
    d = y - mu
    var = jnp.mean(d * d, axis=-1, keepdims=True)
    return d * jax.lax.rsqrt(var + _EPS) * gamma + beta


def _vss_block(x, ln_g, ln_b, wgv, bgv, wo, bo):
    """Residual gated block: x + Wo(SiLU(Wg h) * (Wv h)), h = LN(x).

    wgv is the fused [Wg | Wv] weight (dim, 2e): one MXU matmul instead of two
    (with d0=32 / e=64 its N=128 output exactly fills the 128-lane vreg).
    MXU operands are bf16 with f32 accumulation; elementwise math stays f32.
    """
    h = _layernorm(x, ln_g, ln_b)
    gv = jnp.dot(h.astype(jnp.bfloat16), wgv,
                 preferred_element_type=jnp.float32) + bgv
    e = wgv.shape[-1] // 2
    g, v = gv[:, :e], gv[:, e:]
    g = g * jax.nn.sigmoid(g)                      # SiLU (f32)
    y = jnp.dot((g * v).astype(jnp.bfloat16), wo,
                preferred_element_type=jnp.float32) + bo
    return x + y


# ------------------------------ Pallas kernels ------------------------------

def embed_enc1_kernel(tok_ref, pe_w_ref, pe_b_ref, pe_g_ref, pe_beta_ref,
                      lng_ref, lnb_ref, wgv_ref, bgv_ref, wo_ref, bo_ref,
                      o_ref):
    # patch embed: LN(tok @ pe_w + pe_b), then encoder stage-1 blocks, fused.
    t = jnp.dot(tok_ref[...].astype(jnp.bfloat16), pe_w_ref[...],
                preferred_element_type=jnp.float32) + pe_b_ref[...]
    x = _layernorm(t, pe_g_ref[...], pe_beta_ref[...])
    for d in range(wgv_ref.shape[0]):              # static depth, unrolled
        x = _vss_block(x, lng_ref[d], lnb_ref[d], wgv_ref[d], bgv_ref[d],
                       wo_ref[d], bo_ref[d])
    o_ref[...] = x


def merge_enc2_expand_kernel(x_ref, pm_w_ref, pm_b_ref, pm_g_ref, pm_beta_ref,
                             lng_ref, lnb_ref, wgv_ref, bgv_ref, wo_ref,
                             bo_ref, pexp_w_ref, pexp_b_ref, o_ref):
    # patch-merge linear+LN, bottleneck blocks, 2x patch-expand linear; the
    # 128-wide output keeps stores lane-dense.
    t = jnp.dot(x_ref[...].astype(jnp.bfloat16), pm_w_ref[...],
                preferred_element_type=jnp.float32) + pm_b_ref[...]
    x = _layernorm(t, pm_g_ref[...], pm_beta_ref[...])
    for d in range(wgv_ref.shape[0]):
        x = _vss_block(x, lng_ref[d], lnb_ref[d], wgv_ref[d], bgv_ref[d],
                       wo_ref[d], bo_ref[d])
    o_ref[...] = jnp.dot(x.astype(jnp.bfloat16), pexp_w_ref[...],
                         preferred_element_type=jnp.float32) + pexp_b_ref[...]


def dec1_head_kernel(x_ref, lng_ref, lnb_ref, wgv_ref, bgv_ref, wo_ref, bo_ref,
                     comb_w_ref, comb_b_ref, o_ref):
    # decoder blocks + (final 4x expand composed with the 1-class head) +
    # sigmoid, all fused; comb_w = reshape(fexp_w) @ head_w (exact).
    x = x_ref[...]
    for d in range(wgv_ref.shape[0]):
        x = _vss_block(x, lng_ref[d], lnb_ref[d], wgv_ref[d], bgv_ref[d],
                       wo_ref[d], bo_ref[d])
    y = jnp.dot(x.astype(jnp.bfloat16), comb_w_ref[...],
                preferred_element_type=jnp.float32) + comb_b_ref[...]
    o_ref[...] = jax.nn.sigmoid(y)


# ------------------------------ pallas_call glue -----------------------------

def _row_tile(rows, target=ROW_TILE_TARGET):
    if rows <= target:
        return rows                                # full-extent block
    t = (target // 8) * 8
    while t >= 8:
        if rows % t == 0:
            return t
        t -= 8
    return rows


def _resident_spec(arr):
    nd = arr.ndim
    return pl.BlockSpec(arr.shape, lambda i, _nd=nd: (0,) * _nd)


def _pcall(kernel, x, resident, out_cols):
    rows, in_cols = x.shape
    tile = _row_tile(rows)
    grid = (rows // tile,)
    in_specs = [pl.BlockSpec((tile, in_cols), lambda i: (i, 0))]
    in_specs += [_resident_spec(a) for a in resident]
    return pl.pallas_call(
        kernel,
        out_shape=jax.ShapeDtypeStruct((rows, out_cols), jnp.float32),
        grid=grid,
        in_specs=in_specs,
        out_specs=pl.BlockSpec((tile, out_cols), lambda i: (i, 0)),
        compiler_params=pltpu.CompilerParams(
            dimension_semantics=("parallel",),
            vmem_limit_bytes=VMEM_LIMIT_BYTES),
    )(x, *resident)


# ------------------------------ parameter setup ------------------------------

def _dense(key, fan_in, fan_out):
    w = 0.02 * jax.random.normal(key, (fan_in, fan_out), jnp.float32)
    b = jnp.zeros((1, fan_out), jnp.float32)
    return w, b


def _stage_params(key, depth, dim, expand=2):
    e = dim * expand
    wgv, bgv, wo, bo, lng, lnb = [], [], [], [], [], []
    for k in jax.random.split(key, depth):
        k1, k2, k3 = jax.random.split(k, 3)
        wg, _ = _dense(k1, dim, e)
        wv, _ = _dense(k2, dim, e)
        w_o, b_o = _dense(k3, e, dim)
        wgv.append(jnp.concatenate([wg, wv], axis=1))      # fused [Wg|Wv]
        bgv.append(jnp.zeros((1, 2 * e), jnp.float32))
        wo.append(w_o)
        bo.append(b_o)
        lng.append(jnp.ones((1, dim), jnp.float32))
        lnb.append(jnp.zeros((1, dim), jnp.float32))
    return dict(
        ln_g=jnp.stack(lng), ln_b=jnp.stack(lnb),
        wgv=jnp.stack(wgv).astype(jnp.bfloat16), bgv=jnp.stack(bgv),
        wo=jnp.stack(wo).astype(jnp.bfloat16), bo=jnp.stack(bo))


def init_params(key):
    keys = jax.random.split(key, 8)
    p = {}
    # patch embed: (PATCH*PATCH*IN_CHANS) -> D0, + LayerNorm
    pe_w, pe_b = _dense(keys[0], PATCH * PATCH * IN_CHANS, D0)
    p["pe_w"] = pe_w.astype(jnp.bfloat16)
    p["pe_b"], p["pe_g"] = pe_b, jnp.ones((1, D0), jnp.float32)
    p["pe_beta"] = jnp.zeros((1, D0), jnp.float32)
    # encoder stage 1
    p["enc1"] = _stage_params(keys[1], DEPTH_ENC1, D0)
    # patch merging: 4*D0 -> D1, + LayerNorm
    pm_w, pm_b = _dense(keys[2], 4 * D0, D1)
    p["pm_w"] = pm_w.astype(jnp.bfloat16)
    p["pm_b"], p["pm_g"] = pm_b, jnp.ones((1, D1), jnp.float32)
    p["pm_beta"] = jnp.zeros((1, D1), jnp.float32)
    # encoder stage 2 (bottleneck)
    p["enc2"] = _stage_params(keys[3], DEPTH_ENC2, D1)
    # decoder 2x patch expand: D1 -> 2*D1 (rearranged to 2x2 spatial of D0)
    pexp_w, pexp_b = _dense(keys[4], D1, 2 * D1)
    p["pexp_w"] = pexp_w.astype(jnp.bfloat16)
    p["pexp_b"] = pexp_b
    # decoder stage 1
    p["dec1"] = _stage_params(keys[5], DEPTH_DEC1, D0)
    # final 4x expand folded with the segmentation head (both linear -> exact)
    fexp_w, fexp_b = _dense(keys[6], D0, PATCH * PATCH * C_FINAL)
    head_w, head_b = _dense(keys[7], C_FINAL, NUM_CLASSES)
    w_comb = jnp.einsum(
        "dkc,cn->dkn",
        fexp_w.reshape(D0, PATCH * PATCH, C_FINAL), head_w,
    ).reshape(D0, PATCH * PATCH * NUM_CLASSES)
    b_comb = (fexp_b.reshape(PATCH * PATCH, C_FINAL) @ head_w
              + head_b).reshape(1, PATCH * PATCH * NUM_CLASSES)
    p["comb_w"] = w_comb.astype(jnp.bfloat16)
    p["comb_b"] = b_comb
    return p


# -------------------------------- forward pass -------------------------------

@jax.jit
def lmfnet_forward(x, params):
    """x: (B, C, H, W) float32 (NCHW). Returns sigmoid logits (B, 1, H, W)."""
    B, C, H, W = x.shape
    if C == 1:                                   # torch: x.repeat(1, 3, 1, 1)
        x = jnp.repeat(x, 3, axis=1)
        C = 3

    Hp, Wp = H // PATCH, W // PATCH
    H2, W2 = Hp // 2, Wp // 2
    n1, n2 = B * Hp * Wp, B * H2 * W2

    # NCHW -> NHWC -> 4x4 patch tokens (B*Hp*Wp, 16*C)
    xh = jnp.transpose(x, (0, 2, 3, 1))
    tok = xh.reshape(B, Hp, PATCH, Wp, PATCH, C)
    tok = tok.transpose(0, 1, 3, 2, 4, 5).reshape(n1, PATCH * PATCH * C)

    # --- kernel A: patch embed + LN + encoder stage-1 blocks (fused) ---
    e1 = params["enc1"]
    t = _pcall(embed_enc1_kernel, tok,
               (params["pe_w"], params["pe_b"], params["pe_g"],
                params["pe_beta"], e1["ln_g"], e1["ln_b"], e1["wgv"],
                e1["bgv"], e1["wo"], e1["bo"]),
               D0)                                               # (n1, D0)

    # patch merging gather: concat each 2x2 neighborhood
    t = t.reshape(B, H2, 2, W2, 2, D0).transpose(0, 1, 3, 2, 4, 5)
    t = t.reshape(n2, 4 * D0)

    # --- kernel B: merge linear+LN + bottleneck blocks + 2x expand (fused) ---
    e2 = params["enc2"]
    t = _pcall(merge_enc2_expand_kernel, t,
               (params["pm_w"], params["pm_b"], params["pm_g"],
                params["pm_beta"], e2["ln_g"], e2["ln_b"], e2["wgv"],
                e2["bgv"], e2["wo"], e2["bo"],
                params["pexp_w"], params["pexp_b"]),
               2 * D1)                                           # (n2, 2*D1)

    # rearrange expanded features into 2x2 spatial of D0
    t = t.reshape(B, H2, W2, 2, 2, D0).transpose(0, 1, 3, 2, 4, 5)
    t = t.reshape(n1, D0)

    # --- kernel C: decoder blocks + (4x expand ∘ head) + sigmoid (fused) ---
    dp = params["dec1"]
    y = _pcall(dec1_head_kernel, t,
               (dp["ln_g"], dp["ln_b"], dp["wgv"], dp["bgv"],
                dp["wo"], dp["bo"], params["comb_w"], params["comb_b"]),
               PATCH * PATCH * NUM_CLASSES)                      # (n1, 16)

    # per-token 4x4 pixels back to full resolution, NCHW (NUM_CLASSES == 1)
    y = y.reshape(B, Hp, Wp, PATCH, PATCH).transpose(0, 1, 3, 2, 4)
    return y.reshape(B, NUM_CLASSES, H, W)


# ------------------------------------ main -----------------------------------

if __name__ == "__main__":
    key = jax.random.PRNGKey(0)
    k_x, k_p = jax.random.split(key)

    # Single-channel input exercises the x.repeat(1, 3, 1, 1) branch.
    x = jax.random.normal(k_x, (2, 1, 16, 16), jnp.float32)
    params = init_params(k_p)

    out = lmfnet_forward(x, params)
    out = jax.block_until_ready(out)

    assert out.shape == (2, NUM_CLASSES, 16, 16)
    assert bool(jnp.all(out >= 0.0)) and bool(jnp.all(out <= 1.0))  # sigmoid
    print("KERNEL_OK")
</pallas_src>

<mosaic_0001>
module attributes {stable_mosaic.version = 11 : i64} {
  func.func @embed_enc1_kernel(%arg0: i32, %arg1: memref<32x48xf32, #tpu.memory_space<vmem>>, %arg2: memref<48x32xbf16, #tpu.memory_space<vmem>>, %arg3: memref<1x32xf32, #tpu.memory_space<vmem>>, %arg4: memref<1x32xf32, #tpu.memory_space<vmem>>, %arg5: memref<1x32xf32, #tpu.memory_space<vmem>>, %arg6: memref<2x1x32xf32, #tpu.memory_space<vmem>>, %arg7: memref<2x1x32xf32, #tpu.memory_space<vmem>>, %arg8: memref<2x32x128xbf16, #tpu.memory_space<vmem>>, %arg9: memref<2x1x128xf32, #tpu.memory_space<vmem>>, %arg10: memref<2x64x32xbf16, #tpu.memory_space<vmem>>, %arg11: memref<2x1x32xf32, #tpu.memory_space<vmem>>, %arg12: memref<32x32xf32, #tpu.memory_space<vmem>>) attributes {dimension_semantics = [#tpu.dimension_semantics<parallel>], iteration_bounds = array<i64: 1>, scalar_prefetch = 0 : i64, scratch_operands = 0 : i64, tpu.core_type = #tpu.core_type<tc>, window_params = [{transform_indices = @transform_0, window_bounds = array<i64: 32, 48>}, {pipeline_mode = #tpu.pipeline_mode<synchronous>, transform_indices = @transform_1, window_bounds = array<i64: 48, 32>}, {pipeline_mode = #tpu.pipeline_mode<synchronous>, transform_indices = @transform_2, window_bounds = array<i64: 1, 32>}, {pipeline_mode = #tpu.pipeline_mode<synchronous>, transform_indices = @transform_3, window_bounds = array<i64: 1, 32>}, {pipeline_mode = #tpu.pipeline_mode<synchronous>, transform_indices = @transform_4, window_bounds = array<i64: 1, 32>}, {pipeline_mode = #tpu.pipeline_mode<synchronous>, transform_indices = @transform_5, window_bounds = array<i64: 2, 1, 32>}, {pipeline_mode = #tpu.pipeline_mode<synchronous>, transform_indices = @transform_6, window_bounds = array<i64: 2, 1, 32>}, {pipeline_mode = #tpu.pipeline_mode<synchronous>, transform_indices = @transform_7, window_bounds = array<i64: 2, 32, 128>}, {pipeline_mode = #tpu.pipeline_mode<synchronous>, transform_indices = @transform_8, window_bounds = array<i64: 2, 1, 128>}, {pipeline_mode = #tpu.pipeline_mode<synchronous>, transform_indices = @transform_9, window_bounds = array<i64: 2, 64, 32>}, {pipeline_mode = #tpu.pipeline_mode<synchronous>, transform_indices = @transform_10, window_bounds = array<i64: 2, 1, 32>}, {transform_indices = @transform_11, window_bounds = array<i64: 32, 32>}]} {
    %c0 = arith.constant 0 : index
    %c0_0 = arith.constant 0 : index
    %0 = vector.load %arg1[%c0, %c0_0] : memref<32x48xf32, #tpu.memory_space<vmem>>, vector<32x48xf32>
    %1 = arith.truncf %0 : vector<32x48xf32> to vector<32x48xbf16>
    %c0_1 = arith.constant 0 : index
    %c0_2 = arith.constant 0 : index
    %2 = vector.load %arg2[%c0_1, %c0_2] : memref<48x32xbf16, #tpu.memory_space<vmem>>, vector<48x32xbf16>
    %cst = arith.constant dense<0.000000e+00> : vector<32x32xf32>
    %3 = tpu.matmul %1, %2, %cst {dimension_numbers = #tpu.dot_dimension_numbers<[1], [0], [0], [1], [0, 0, 1, 1], [], []>} : vector<32x48xbf16>, vector<48x32xbf16>, vector<32x32xf32> -> vector<32x32xf32>
    %c0_3 = arith.constant 0 : index
    %c0_4 = arith.constant 0 : index
    %4 = vector.load %arg3[%c0_3, %c0_4] : memref<1x32xf32, #tpu.memory_space<vmem>>, vector<1x32xf32>
    %5 = vector.broadcast %4 : vector<1x32xf32> to vector<32x32xf32>
    %6 = arith.addf %3, %5 : vector<32x32xf32>
    %c0_5 = arith.constant 0 : index
    %c0_6 = arith.constant 0 : index
    %7 = vector.load %arg4[%c0_5, %c0_6] : memref<1x32xf32, #tpu.memory_space<vmem>>, vector<1x32xf32>
    %c0_7 = arith.constant 0 : index
    %c0_8 = arith.constant 0 : index
    %8 = vector.load %arg5[%c0_7, %c0_8] : memref<1x32xf32, #tpu.memory_space<vmem>>, vector<1x32xf32>
    %cst_9 = arith.constant dense<0.000000e+00> : vector<32xf32>
    %9 = vector.multi_reduction <add>, %6, %cst_9 [1] : vector<32x32xf32> to vector<32xf32>
    %10 = vector.shape_cast %9 : vector<32xf32> to vector<32x1xf32>
    %cst_10 = arith.constant 3.200000e+01 : f32
    %11 = vector.broadcast %cst_10 : f32 to vector<32x1xf32>
    %12 = arith.divf %10, %11 : vector<32x1xf32>
    %13 = vector.broadcast %12 : vector<32x1xf32> to vector<32x32xf32>
    %14 = arith.subf %6, %13 : vector<32x32xf32>
    %15 = arith.mulf %14, %14 : vector<32x32xf32>
    %cst_11 = arith.constant dense<0.000000e+00> : vector<32xf32>
    %16 = vector.multi_reduction <add>, %15, %cst_11 [1] : vector<32x32xf32> to vector<32xf32>
    %17 = vector.shape_cast %16 : vector<32xf32> to vector<32x1xf32>
    %cst_12 = arith.constant 3.200000e+01 : f32
    %18 = vector.broadcast %cst_12 : f32 to vector<32x1xf32>
    %19 = arith.divf %17, %18 : vector<32x1xf32>
    %cst_13 = arith.constant 9.99999974E-6 : f32
    %20 = vector.broadcast %cst_13 : f32 to vector<32x1xf32>
    %21 = arith.addf %19, %20 : vector<32x1xf32>
    %22 = math.rsqrt %21 : vector<32x1xf32>
    %23 = vector.broadcast %22 : vector<32x1xf32> to vector<32x32xf32>
    %24 = arith.mulf %14, %23 : vector<32x32xf32>
    %25 = vector.broadcast %7 : vector<1x32xf32> to vector<32x32xf32>
    %26 = arith.mulf %24, %25 : vector<32x32xf32>
    %27 = vector.broadcast %8 : vector<1x32xf32> to vector<32x32xf32>
    %28 = arith.addf %26, %27 : vector<32x32xf32>
    %c0_14 = arith.constant 0 : index
    %c0_15 = arith.constant 0 : index
    %c0_16 = arith.constant 0 : index
    %29 = vector.load %arg6[%c0_14, %c0_15, %c0_16] : memref<2x1x32xf32, #tpu.memory_space<vmem>>, vector<1x1x32xf32>
    %30 = vector.shape_cast %29 : vector<1x1x32xf32> to vector<1x32xf32>
    %c0_17 = arith.constant 0 : index
    %c0_18 = arith.constant 0 : index
    %c0_19 = arith.constant 0 : index
    %31 = vector.load %arg7[%c0_17, %c0_18, %c0_19] : memref<2x1x32xf32, #tpu.memory_space<vmem>>, vector<1x1x32xf32>
    %32 = vector.shape_cast %31 : vector<1x1x32xf32> to vector<1x32xf32>
    %c0_20 = arith.constant 0 : index
    %c0_21 = arith.constant 0 : index
    %c0_22 = arith.constant 0 : index
    %33 = vector.load %arg8[%c0_20, %c0_21, %c0_22] : memref<2x32x128xbf16, #tpu.memory_space<vmem>>, vector<1x32x128xbf16>
    %34 = vector.shape_cast %33 : vector<1x32x128xbf16> to vector<32x128xbf16>
    %c0_23 = arith.constant 0 : index
    %c0_24 = arith.constant 0 : index
    %c0_25 = arith.constant 0 : index
    %35 = vector.load %arg9[%c0_23, %c0_24, %c0_25] : memref<2x1x128xf32, #tpu.memory_space<vmem>>, vector<1x1x128xf32>
    %36 = vector.shape_cast %35 : vector<1x1x128xf32> to vector<1x128xf32>
    %c0_26 = arith.constant 0 : index
    %c0_27 = arith.constant 0 : index
    %c0_28 = arith.constant 0 : index
    %37 = vector.load %arg10[%c0_26, %c0_27, %c0_28] : memref<2x64x32xbf16, #tpu.memory_space<vmem>>, vector<1x64x32xbf16>
    %38 = vector.shape_cast %37 : vector<1x64x32xbf16> to vector<64x32xbf16>
    %c0_29 = arith.constant 0 : index
    %c0_30 = arith.constant 0 : index
    %c0_31 = arith.constant 0 : index
    %39 = vector.load %arg11[%c0_29, %c0_30, %c0_31] : memref<2x1x32xf32, #tpu.memory_space<vmem>>, vector<1x1x32xf32>
    %40 = vector.shape_cast %39 : vector<1x1x32xf32> to vector<1x32xf32>
    %cst_32 = arith.constant dense<0.000000e+00> : vector<32xf32>
    %41 = vector.multi_reduction <add>, %28, %cst_32 [1] : vector<32x32xf32> to vector<32xf32>
    %42 = vector.shape_cast %41 : vector<32xf32> to vector<32x1xf32>
    %cst_33 = arith.constant 3.200000e+01 : f32
    %43 = vector.broadcast %cst_33 : f32 to vector<32x1xf32>
    %44 = arith.divf %42, %43 : vector<32x1xf32>
    %45 = vector.broadcast %44 : vector<32x1xf32> to vector<32x32xf32>
    %46 = arith.subf %28, %45 : vector<32x32xf32>
    %47 = arith.mulf %46, %46 : vector<32x32xf32>
    %cst_34 = arith.constant dense<0.000000e+00> : vector<32xf32>
    %48 = vector.multi_reduction <add>, %47, %cst_34 [1] : vector<32x32xf32> to vector<32xf32>
    %49 = vector.shape_cast %48 : vector<32xf32> to vector<32x1xf32>
    %cst_35 = arith.constant 3.200000e+01 : f32
    %50 = vector.broadcast %cst_35 : f32 to vector<32x1xf32>
    %51 = arith.divf %49, %50 : vector<32x1xf32>
    %cst_36 = arith.constant 9.99999974E-6 : f32
    %52 = vector.broadcast %cst_36 : f32 to vector<32x1xf32>
    %53 = arith.addf %51, %52 : vector<32x1xf32>
    %54 = math.rsqrt %53 : vector<32x1xf32>
    %55 = vector.broadcast %54 : vector<32x1xf32> to vector<32x32xf32>
    %56 = arith.mulf %46, %55 : vector<32x32xf32>
    %57 = vector.broadcast %30 : vector<1x32xf32> to vector<32x32xf32>
    %58 = arith.mulf %56, %57 : vector<32x32xf32>
    %59 = vector.broadcast %32 : vector<1x32xf32> to vector<32x32xf32>
    %60 = arith.addf %58, %59 : vector<32x32xf32>
    %61 = arith.truncf %60 : vector<32x32xf32> to vector<32x32xbf16>
    %cst_37 = arith.constant dense<0.000000e+00> : vector<32x128xf32>
    %62 = tpu.matmul %61, %34, %cst_37 {dimension_numbers = #tpu.dot_dimension_numbers<[1], [0], [0], [1], [0, 0, 1, 1], [], []>} : vector<32x32xbf16>, vector<32x128xbf16>, vector<32x128xf32> -> vector<32x128xf32>
    %63 = vector.broadcast %36 : vector<1x128xf32> to vector<32x128xf32>
    %64 = arith.addf %62, %63 : vector<32x128xf32>
    %65 = vector.extract_strided_slice %64 {offsets = [0, 0], sizes = [32, 64], strides = [1, 1]} : vector<32x128xf32> to vector<32x64xf32>
    %66 = vector.extract_strided_slice %64 {offsets = [0, 64], sizes = [32, 64], strides = [1, 1]} : vector<32x128xf32> to vector<32x64xf32>
    %67 = arith.negf %65 : vector<32x64xf32>
    %68 = math.exp %67 : vector<32x64xf32>
    %cst_38 = arith.constant 1.000000e+00 : f32
    %69 = vector.broadcast %cst_38 : f32 to vector<32x64xf32>
    %70 = arith.addf %69, %68 : vector<32x64xf32>
    %71 = arith.divf %69, %70 : vector<32x64xf32>
    %72 = arith.mulf %65, %71 : vector<32x64xf32>
    %73 = arith.mulf %72, %66 : vector<32x64xf32>
    %74 = arith.truncf %73 : vector<32x64xf32> to vector<32x64xbf16>
    %cst_39 = arith.constant dense<0.000000e+00> : vector<32x32xf32>
    %75 = tpu.matmul %74, %38, %cst_39 {dimension_numbers = #tpu.dot_dimension_numbers<[1], [0], [0], [1], [0, 0, 1, 1], [], []>} : vector<32x64xbf16>, vector<64x32xbf16>, vector<32x32xf32> -> vector<32x32xf32>
    %76 = vector.broadcast %40 : vector<1x32xf32> to vector<32x32xf32>
    %77 = arith.addf %75, %76 : vector<32x32xf32>
    %78 = arith.addf %28, %77 : vector<32x32xf32>
    %c1 = arith.constant 1 : index
    %c0_40 = arith.constant 0 : index
    %c0_41 = arith.constant 0 : index
    %79 = vector.load %arg6[%c1, %c0_40, %c0_41] : memref<2x1x32xf32, #tpu.memory_space<vmem>>, vector<1x1x32xf32>
    %80 = vector.shape_cast %79 : vector<1x1x32xf32> to vector<1x32xf32>
    %c1_42 = arith.constant 1 : index
    %c0_43 = arith.constant 0 : index
    %c0_44 = arith.constant 0 : index
    %81 = vector.load %arg7[%c1_42, %c0_43, %c0_44] : memref<2x1x32xf32, #tpu.memory_space<vmem>>, vector<1x1x32xf32>
    %82 = vector.shape_cast %81 : vector<1x1x32xf32> to vector<1x32xf32>
    %c1_45 = arith.constant 1 : index
    %c0_46 = arith.constant 0 : index
    %c0_47 = arith.constant 0 : index
    %83 = vector.load %arg8[%c1_45, %c0_46, %c0_47] : memref<2x32x128xbf16, #tpu.memory_space<vmem>>, vector<1x32x128xbf16>
    %84 = vector.shape_cast %83 : vector<1x32x128xbf16> to vector<32x128xbf16>
    %c1_48 = arith.constant 1 : index
    %c0_49 = arith.constant 0 : index
    %c0_50 = arith.constant 0 : index
    %85 = vector.load %arg9[%c1_48, %c0_49, %c0_50] : memref<2x1x128xf32, #tpu.memory_space<vmem>>, vector<1x1x128xf32>
    %86 = vector.shape_cast %85 : vector<1x1x128xf32> to vector<1x128xf32>
    %c1_51 = arith.constant 1 : index
    %c0_52 = arith.constant 0 : index
    %c0_53 = arith.constant 0 : index
    %87 = vector.load %arg10[%c1_51, %c0_52, %c0_53] : memref<2x64x32xbf16, #tpu.memory_space<vmem>>, vector<1x64x32xbf16>
    %88 = vector.shape_cast %87 : vector<1x64x32xbf16> to vector<64x32xbf16>
    %c1_54 = arith.constant 1 : index
    %c0_55 = arith.constant 0 : index
    %c0_56 = arith.constant 0 : index
    %89 = vector.load %arg11[%c1_54, %c0_55, %c0_56] : memref<2x1x32xf32, #tpu.memory_space<vmem>>, vector<1x1x32xf32>
    %90 = vector.shape_cast %89 : vector<1x1x32xf32> to vector<1x32xf32>
    %cst_57 = arith.constant dense<0.000000e+00> : vector<32xf32>
    %91 = vector.multi_reduction <add>, %78, %cst_57 [1] : vector<32x32xf32> to vector<32xf32>
    %92 = vector.shape_cast %91 : vector<32xf32> to vector<32x1xf32>
    %cst_58 = arith.constant 3.200000e+01 : f32
    %93 = vector.broadcast %cst_58 : f32 to vector<32x1xf32>
    %94 = arith.divf %92, %93 : vector<32x1xf32>
    %95 = vector.broadcast %94 : vector<32x1xf32> to vector<32x32xf32>
    %96 = arith.subf %78, %95 : vector<32x32xf32>
    %97 = arith.mulf %96, %96 : vector<32x32xf32>
    %cst_59 = arith.constant dense<0.000000e+00> : vector<32xf32>
    %98 = vector.multi_reduction <add>, %97, %cst_59 [1] : vector<32x32xf32> to vector<32xf32>
    %99 = vector.shape_cast %98 : vector<32xf32> to vector<32x1xf32>
    %cst_60 = arith.constant 3.200000e+01 : f32
    %100 = vector.broadcast %cst_60 : f32 to vector<32x1xf32>
    %101 = arith.divf %99, %100 : vector<32x1xf32>
    %cst_61 = arith.constant 9.99999974E-6 : f32
    %102 = vector.broadcast %cst_61 : f32 to vector<32x1xf32>
    %103 = arith.addf %101, %102 : vector<32x1xf32>
    %104 = math.rsqrt %103 : vector<32x1xf32>
    %105 = vector.broadcast %104 : vector<32x1xf32> to vector<32x32xf32>
    %106 = arith.mulf %96, %105 : vector<32x32xf32>
    %107 = vector.broadcast %80 : vector<1x32xf32> to vector<32x32xf32>
    %108 = arith.mulf %106, %107 : vector<32x32xf32>
    %109 = vector.broadcast %82 : vector<1x32xf32> to vector<32x32xf32>
    %110 = arith.addf %108, %109 : vector<32x32xf32>
    %111 = arith.truncf %110 : vector<32x32xf32> to vector<32x32xbf16>
    %cst_62 = arith.constant dense<0.000000e+00> : vector<32x128xf32>
    %112 = tpu.matmul %111, %84, %cst_62 {dimension_numbers = #tpu.dot_dimension_numbers<[1], [0], [0], [1], [0, 0, 1, 1], [], []>} : vector<32x32xbf16>, vector<32x128xbf16>, vector<32x128xf32> -> vector<32x128xf32>
    %113 = vector.broadcast %86 : vector<1x128xf32> to vector<32x128xf32>
    %114 = arith.addf %112, %113 : vector<32x128xf32>
    %115 = vector.extract_strided_slice %114 {offsets = [0, 0], sizes = [32, 64], strides = [1, 1]} : vector<32x128xf32> to vector<32x64xf32>
    %116 = vector.extract_strided_slice %114 {offsets = [0, 64], sizes = [32, 64], strides = [1, 1]} : vector<32x128xf32> to vector<32x64xf32>
    %117 = arith.negf %115 : vector<32x64xf32>
    %118 = math.exp %117 : vector<32x64xf32>
    %cst_63 = arith.constant 1.000000e+00 : f32
    %119 = vector.broadcast %cst_63 : f32 to vector<32x64xf32>
    %120 = arith.addf %119, %118 : vector<32x64xf32>
    %121 = arith.divf %119, %120 : vector<32x64xf32>
    %122 = arith.mulf %115, %121 : vector<32x64xf32>
    %123 = arith.mulf %122, %116 : vector<32x64xf32>
    %124 = arith.truncf %123 : vector<32x64xf32> to vector<32x64xbf16>
    %cst_64 = arith.constant dense<0.000000e+00> : vector<32x32xf32>
    %125 = tpu.matmul %124, %88, %cst_64 {dimension_numbers = #tpu.dot_dimension_numbers<[1], [0], [0], [1], [0, 0, 1, 1], [], []>} : vector<32x64xbf16>, vector<64x32xbf16>, vector<32x32xf32> -> vector<32x32xf32>
    %126 = vector.broadcast %90 : vector<1x32xf32> to vector<32x32xf32>
    %127 = arith.addf %125, %126 : vector<32x32xf32>
    %128 = arith.addf %78, %127 : vector<32x32xf32>
    %c0_65 = arith.constant 0 : index
    %c0_66 = arith.constant 0 : index
    %129 = vector.load %arg12[%c0_65, %c0_66] : memref<32x32xf32, #tpu.memory_space<vmem>>, vector<32x32xf32>
    tpu.vector_store %arg12[%c0_65, %c0_66], %128 {strides = array<i32>} : memref<32x32xf32, #tpu.memory_space<vmem>>, vector<32x32xf32>,
    return
  }
  func.func @transform_0(%arg0: i32) -> (i32, i32) {
    %c0_i32 = arith.constant 0 : i32
    %c0_i32_0 = arith.constant 0 : i32
    return %arg0, %c0_i32 : i32, i32
  }
  func.func @transform_1(%arg0: i32) -> (i32, i32) {
    %c0_i32 = arith.constant 0 : i32
    %c0_i32_0 = arith.constant 0 : i32
    %c0_i32_1 = arith.constant 0 : i32
    return %c0_i32, %c0_i32_0 : i32, i32
  }
  func.func @transform_2(%arg0: i32) -> (i32, i32) {
    %c0_i32 = arith.constant 0 : i32
    %c0_i32_0 = arith.constant 0 : i32
    %c0_i32_1 = arith.constant 0 : i32
    return %c0_i32, %c0_i32_0 : i32, i32
  }
  func.func @transform_3(%arg0: i32) -> (i32, i32) {
    %c0_i32 = arith.constant 0 : i32
    %c0_i32_0 = arith.constant 0 : i32
    %c0_i32_1 = arith.constant 0 : i32
    return %c0_i32, %c0_i32_0 : i32, i32
  }
  func.func @transform_4(%arg0: i32) -> (i32, i32) {
    %c0_i32 = arith.constant 0 : i32
    %c0_i32_0 = arith.constant 0 : i32
    %c0_i32_1 = arith.constant 0 : i32
    return %c0_i32, %c0_i32_0 : i32, i32
  }
  func.func @transform_5(%arg0: i32) -> (i32, i32, i32) {
    %c0_i32 = arith.constant 0 : i32
    %c0_i32_0 = arith.constant 0 : i32
    %c0_i32_1 = arith.constant 0 : i32
    %c0_i32_2 = arith.constant 0 : i32
    return %c0_i32, %c0_i32_0, %c0_i32_1 : i32, i32, i32
  }
  func.func @transform_6(%arg0: i32) -> (i32, i32, i32) {
    %c0_i32 = arith.constant 0 : i32
    %c0_i32_0 = arith.constant 0 : i32
    %c0_i32_1 = arith.constant 0 : i32
    %c0_i32_2 = arith.constant 0 : i32
    return %c0_i32, %c0_i32_0, %c0_i32_1 : i32, i32, i32
  }
  func.func @transform_7(%arg0: i32) -> (i32, i32, i32) {
    %c0_i32 = arith.constant 0 : i32
    %c0_i32_0 = arith.constant 0 : i32
    %c0_i32_1 = arith.constant 0 : i32
    %c0_i32_2 = arith.constant 0 : i32
    return %c0_i32, %c0_i32_0, %c0_i32_1 : i32, i32, i32
  }
  func.func @transform_8(%arg0: i32) -> (i32, i32, i32) {
    %c0_i32 = arith.constant 0 : i32
    %c0_i32_0 = arith.constant 0 : i32
    %c0_i32_1 = arith.constant 0 : i32
    %c0_i32_2 = arith.constant 0 : i32
    return %c0_i32, %c0_i32_0, %c0_i32_1 : i32, i32, i32
  }
  func.func @transform_9(%arg0: i32) -> (i32, i32, i32) {
    %c0_i32 = arith.constant 0 : i32
    %c0_i32_0 = arith.constant 0 : i32
    %c0_i32_1 = arith.constant 0 : i32
    %c0_i32_2 = arith.constant 0 : i32
    return %c0_i32, %c0_i32_0, %c0_i32_1 : i32, i32, i32
  }
  func.func @transform_10(%arg0: i32) -> (i32, i32, i32) {
    %c0_i32 = arith.constant 0 : i32
    %c0_i32_0 = arith.constant 0 : i32
    %c0_i32_1 = arith.constant 0 : i32
    %c0_i32_2 = arith.constant 0 : i32
    return %c0_i32, %c0_i32_0, %c0_i32_1 : i32, i32, i32
  }
  func.func @transform_11(%arg0: i32) -> (i32, i32) {
    %c0_i32 = arith.constant 0 : i32
    %c0_i32_0 = arith.constant 0 : i32
    return %arg0, %c0_i32 : i32, i32
  }
}

module attributes {stable_mosaic.version = 11 : i64} {
  func.func @merge_enc2_expand_kernel(%arg0: i32, %arg1: memref<8x128xf32, #tpu.memory_space<vmem>>, %arg2: memref<128x64xbf16, #tpu.memory_space<vmem>>, %arg3: memref<1x64xf32, #tpu.memory_space<vmem>>, %arg4: memref<1x64xf32, #tpu.memory_space<vmem>>, %arg5: memref<1x64xf32, #tpu.memory_space<vmem>>, %arg6: memref<2x1x64xf32, #tpu.memory_space<vmem>>, %arg7: memref<2x1x64xf32, #tpu.memory_space<vmem>>, %arg8: memref<2x64x256xbf16, #tpu.memory_space<vmem>>, %arg9: memref<2x1x256xf32, #tpu.memory_space<vmem>>, %arg10: memref<2x128x64xbf16, #tpu.memory_space<vmem>>, %arg11: memref<2x1x64xf32, #tpu.memory_space<vmem>>, %arg12: memref<64x128xbf16, #tpu.memory_space<vmem>>, %arg13: memref<1x128xf32, #tpu.memory_space<vmem>>, %arg14: memref<8x128xf32, #tpu.memory_space<vmem>>) attributes {dimension_semantics = [#tpu.dimension_semantics<parallel>], iteration_bounds = array<i64: 1>, scalar_prefetch = 0 : i64, scratch_operands = 0 : i64, tpu.core_type = #tpu.core_type<tc>, window_params = [{transform_indices = @transform_0, window_bounds = array<i64: 8, 128>}, {pipeline_mode = #tpu.pipeline_mode<synchronous>, transform_indices = @transform_1, window_bounds = array<i64: 128, 64>}, {pipeline_mode = #tpu.pipeline_mode<synchronous>, transform_indices = @transform_2, window_bounds = array<i64: 1, 64>}, {pipeline_mode = #tpu.pipeline_mode<synchronous>, transform_indices = @transform_3, window_bounds = array<i64: 1, 64>}, {pipeline_mode = #tpu.pipeline_mode<synchronous>, transform_indices = @transform_4, window_bounds = array<i64: 1, 64>}, {pipeline_mode = #tpu.pipeline_mode<synchronous>, transform_indices = @transform_5, window_bounds = array<i64: 2, 1, 64>}, {pipeline_mode = #tpu.pipeline_mode<synchronous>, transform_indices = @transform_6, window_bounds = array<i64: 2, 1, 64>}, {pipeline_mode = #tpu.pipeline_mode<synchronous>, transform_indices = @transform_7, window_bounds = array<i64: 2, 64, 256>}, {pipeline_mode = #tpu.pipeline_mode<synchronous>, transform_indices = @transform_8, window_bounds = array<i64: 2, 1, 256>}, {pipeline_mode = #tpu.pipeline_mode<synchronous>, transform_indices = @transform_9, window_bounds = array<i64: 2, 128, 64>}, {pipeline_mode = #tpu.pipeline_mode<synchronous>, transform_indices = @transform_10, window_bounds = array<i64: 2, 1, 64>}, {pipeline_mode = #tpu.pipeline_mode<synchronous>, transform_indices = @transform_11, window_bounds = array<i64: 64, 128>}, {pipeline_mode = #tpu.pipeline_mode<synchronous>, transform_indices = @transform_12, window_bounds = array<i64: 1, 128>}, {transform_indices = @transform_13, window_bounds = array<i64: 8, 128>}]} {
    %c0 = arith.constant 0 : index
    %c0_0 = arith.constant 0 : index
    %0 = vector.load %arg1[%c0, %c0_0] : memref<8x128xf32, #tpu.memory_space<vmem>>, vector<8x128xf32>
    %1 = arith.truncf %0 : vector<8x128xf32> to vector<8x128xbf16>
    %c0_1 = arith.constant 0 : index
    %c0_2 = arith.constant 0 : index
    %2 = vector.load %arg2[%c0_1, %c0_2] : memref<128x64xbf16, #tpu.memory_space<vmem>>, vector<128x64xbf16>
    %cst = arith.constant dense<0.000000e+00> : vector<8x64xf32>
    %3 = tpu.matmul %1, %2, %cst {dimension_numbers = #tpu.dot_dimension_numbers<[1], [0], [0], [1], [0, 0, 1, 1], [], []>} : vector<8x128xbf16>, vector<128x64xbf16>, vector<8x64xf32> -> vector<8x64xf32>
    %c0_3 = arith.constant 0 : index
    %c0_4 = arith.constant 0 : index
    %4 = vector.load %arg3[%c0_3, %c0_4] : memref<1x64xf32, #tpu.memory_space<vmem>>, vector<1x64xf32>
    %5 = vector.broadcast %4 : vector<1x64xf32> to vector<8x64xf32>
    %6 = arith.addf %3, %5 : vector<8x64xf32>
    %c0_5 = arith.constant 0 : index
    %c0_6 = arith.constant 0 : index
    %7 = vector.load %arg4[%c0_5, %c0_6] : memref<1x64xf32, #tpu.memory_space<vmem>>, vector<1x64xf32>
    %c0_7 = arith.constant 0 : index
    %c0_8 = arith.constant 0 : index
    %8 = vector.load %arg5[%c0_7, %c0_8] : memref<1x64xf32, #tpu.memory_space<vmem>>, vector<1x64xf32>
    %cst_9 = arith.constant dense<0.000000e+00> : vector<8xf32>
    %9 = vector.multi_reduction <add>, %6, %cst_9 [1] : vector<8x64xf32> to vector<8xf32>
    %10 = vector.shape_cast %9 : vector<8xf32> to vector<8x1xf32>
    %cst_10 = arith.constant 6.400000e+01 : f32
    %11 = vector.broadcast %cst_10 : f32 to vector<8x1xf32>
    %12 = arith.divf %10, %11 : vector<8x1xf32>
    %13 = vector.broadcast %12 : vector<8x1xf32> to vector<8x64xf32>
    %14 = arith.subf %6, %13 : vector<8x64xf32>
    %15 = arith.mulf %14, %14 : vector<8x64xf32>
    %cst_11 = arith.constant dense<0.000000e+00> : vector<8xf32>
    %16 = vector.multi_reduction <add>, %15, %cst_11 [1] : vector<8x64xf32> to vector<8xf32>
    %17 = vector.shape_cast %16 : vector<8xf32> to vector<8x1xf32>
    %cst_12 = arith.constant 6.400000e+01 : f32
    %18 = vector.broadcast %cst_12 : f32 to vector<8x1xf32>
    %19 = arith.divf %17, %18 : vector<8x1xf32>
    %cst_13 = arith.constant 9.99999974E-6 : f32
    %20 = vector.broadcast %cst_13 : f32 to vector<8x1xf32>
    %21 = arith.addf %19, %20 : vector<8x1xf32>
    %22 = math.rsqrt %21 : vector<8x1xf32>
    %23 = vector.broadcast %22 : vector<8x1xf32> to vector<8x64xf32>
    %24 = arith.mulf %14, %23 : vector<8x64xf32>
    %25 = vector.broadcast %7 : vector<1x64xf32> to vector<8x64xf32>
    %26 = arith.mulf %24, %25 : vector<8x64xf32>
    %27 = vector.broadcast %8 : vector<1x64xf32> to vector<8x64xf32>
    %28 = arith.addf %26, %27 : vector<8x64xf32>
    %c0_14 = arith.constant 0 : index
    %c0_15 = arith.constant 0 : index
    %c0_16 = arith.constant 0 : index
    %29 = vector.load %arg6[%c0_14, %c0_15, %c0_16] : memref<2x1x64xf32, #tpu.memory_space<vmem>>, vector<1x1x64xf32>
    %30 = vector.shape_cast %29 : vector<1x1x64xf32> to vector<1x64xf32>
    %c0_17 = arith.constant 0 : index
    %c0_18 = arith.constant 0 : index
    %c0_19 = arith.constant 0 : index
    %31 = vector.load %arg7[%c0_17, %c0_18, %c0_19] : memref<2x1x64xf32, #tpu.memory_space<vmem>>, vector<1x1x64xf32>
    %32 = vector.shape_cast %31 : vector<1x1x64xf32> to vector<1x64xf32>
    %c0_20 = arith.constant 0 : index
    %c0_21 = arith.constant 0 : index
    %c0_22 = arith.constant 0 : index
    %33 = vector.load %arg8[%c0_20, %c0_21, %c0_22] : memref<2x64x256xbf16, #tpu.memory_space<vmem>>, vector<1x64x256xbf16>
    %34 = vector.shape_cast %33 : vector<1x64x256xbf16> to vector<64x256xbf16>
    %c0_23 = arith.constant 0 : index
    %c0_24 = arith.constant 0 : index
    %c0_25 = arith.constant 0 : index
    %35 = vector.load %arg9[%c0_23, %c0_24, %c0_25] : memref<2x1x256xf32, #tpu.memory_space<vmem>>, vector<1x1x256xf32>
    %36 = vector.shape_cast %35 : vector<1x1x256xf32> to vector<1x256xf32>
    %c0_26 = arith.constant 0 : index
    %c0_27 = arith.constant 0 : index
    %c0_28 = arith.constant 0 : index
    %37 = vector.load %arg10[%c0_26, %c0_27, %c0_28] : memref<2x128x64xbf16, #tpu.memory_space<vmem>>, vector<1x128x64xbf16>
    %38 = vector.shape_cast %37 : vector<1x128x64xbf16> to vector<128x64xbf16>
    %c0_29 = arith.constant 0 : index
    %c0_30 = arith.constant 0 : index
    %c0_31 = arith.constant 0 : index
    %39 = vector.load %arg11[%c0_29, %c0_30, %c0_31] : memref<2x1x64xf32, #tpu.memory_space<vmem>>, vector<1x1x64xf32>
    %40 = vector.shape_cast %39 : vector<1x1x64xf32> to vector<1x64xf32>
    %cst_32 = arith.constant dense<0.000000e+00> : vector<8xf32>
    %41 = vector.multi_reduction <add>, %28, %cst_32 [1] : vector<8x64xf32> to vector<8xf32>
    %42 = vector.shape_cast %41 : vector<8xf32> to vector<8x1xf32>
    %cst_33 = arith.constant 6.400000e+01 : f32
    %43 = vector.broadcast %cst_33 : f32 to vector<8x1xf32>
    %44 = arith.divf %42, %43 : vector<8x1xf32>
    %45 = vector.broadcast %44 : vector<8x1xf32> to vector<8x64xf32>
    %46 = arith.subf %28, %45 : vector<8x64xf32>
    %47 = arith.mulf %46, %46 : vector<8x64xf32>
    %cst_34 = arith.constant dense<0.000000e+00> : vector<8xf32>
    %48 = vector.multi_reduction <add>, %47, %cst_34 [1] : vector<8x64xf32> to vector<8xf32>
    %49 = vector.shape_cast %48 : vector<8xf32> to vector<8x1xf32>
    %cst_35 = arith.constant 6.400000e+01 : f32
    %50 = vector.broadcast %cst_35 : f32 to vector<8x1xf32>
    %51 = arith.divf %49, %50 : vector<8x1xf32>
    %cst_36 = arith.constant 9.99999974E-6 : f32
    %52 = vector.broadcast %cst_36 : f32 to vector<8x1xf32>
    %53 = arith.addf %51, %52 : vector<8x1xf32>
    %54 = math.rsqrt %53 : vector<8x1xf32>
    %55 = vector.broadcast %54 : vector<8x1xf32> to vector<8x64xf32>
    %56 = arith.mulf %46, %55 : vector<8x64xf32>
    %57 = vector.broadcast %30 : vector<1x64xf32> to vector<8x64xf32>
    %58 = arith.mulf %56, %57 : vector<8x64xf32>
    %59 = vector.broadcast %32 : vector<1x64xf32> to vector<8x64xf32>
    %60 = arith.addf %58, %59 : vector<8x64xf32>
    %61 = arith.truncf %60 : vector<8x64xf32> to vector<8x64xbf16>
    %cst_37 = arith.constant dense<0.000000e+00> : vector<8x256xf32>
    %62 = tpu.matmul %61, %34, %cst_37 {dimension_numbers = #tpu.dot_dimension_numbers<[1], [0], [0], [1], [0, 0, 1, 1], [], []>} : vector<8x64xbf16>, vector<64x256xbf16>, vector<8x256xf32> -> vector<8x256xf32>
    %63 = vector.broadcast %36 : vector<1x256xf32> to vector<8x256xf32>
    %64 = arith.addf %62, %63 : vector<8x256xf32>
    %65 = vector.extract_strided_slice %64 {offsets = [0, 0], sizes = [8, 128], strides = [1, 1]} : vector<8x256xf32> to vector<8x128xf32>
    %66 = vector.extract_strided_slice %64 {offsets = [0, 128], sizes = [8, 128], strides = [1, 1]} : vector<8x256xf32> to vector<8x128xf32>
    %67 = arith.negf %65 : vector<8x128xf32>
    %68 = math.exp %67 : vector<8x128xf32>
    %cst_38 = arith.constant 1.000000e+00 : f32
    %69 = vector.broadcast %cst_38 : f32 to vector<8x128xf32>
    %70 = arith.addf %69, %68 : vector<8x128xf32>
    %71 = arith.divf %69, %70 : vector<8x128xf32>
    %72 = arith.mulf %65, %71 : vector<8x128xf32>
    %73 = arith.mulf %72, %66 : vector<8x128xf32>
    %74 = arith.truncf %73 : vector<8x128xf32> to vector<8x128xbf16>
    %cst_39 = arith.constant dense<0.000000e+00> : vector<8x64xf32>
    %75 = tpu.matmul %74, %38, %cst_39 {dimension_numbers = #tpu.dot_dimension_numbers<[1], [0], [0], [1], [0, 0, 1, 1], [], []>} : vector<8x128xbf16>, vector<128x64xbf16>, vector<8x64xf32> -> vector<8x64xf32>
    %76 = vector.broadcast %40 : vector<1x64xf32> to vector<8x64xf32>
    %77 = arith.addf %75, %76 : vector<8x64xf32>
    %78 = arith.addf %28, %77 : vector<8x64xf32>
    %c1 = arith.constant 1 : index
    %c0_40 = arith.constant 0 : index
    %c0_41 = arith.constant 0 : index
    %79 = vector.load %arg6[%c1, %c0_40, %c0_41] : memref<2x1x64xf32, #tpu.memory_space<vmem>>, vector<1x1x64xf32>
    %80 = vector.shape_cast %79 : vector<1x1x64xf32> to vector<1x64xf32>
    %c1_42 = arith.constant 1 : index
    %c0_43 = arith.constant 0 : index
    %c0_44 = arith.constant 0 : index
    %81 = vector.load %arg7[%c1_42, %c0_43, %c0_44] : memref<2x1x64xf32, #tpu.memory_space<vmem>>, vector<1x1x64xf32>
    %82 = vector.shape_cast %81 : vector<1x1x64xf32> to vector<1x64xf32>
    %c1_45 = arith.constant 1 : index
    %c0_46 = arith.constant 0 : index
    %c0_47 = arith.constant 0 : index
    %83 = vector.load %arg8[%c1_45, %c0_46, %c0_47] : memref<2x64x256xbf16, #tpu.memory_space<vmem>>, vector<1x64x256xbf16>
    %84 = vector.shape_cast %83 : vector<1x64x256xbf16> to vector<64x256xbf16>
    %c1_48 = arith.constant 1 : index
    %c0_49 = arith.constant 0 : index
    %c0_50 = arith.constant 0 : index
    %85 = vector.load %arg9[%c1_48, %c0_49, %c0_50] : memref<2x1x256xf32, #tpu.memory_space<vmem>>, vector<1x1x256xf32>
    %86 = vector.shape_cast %85 : vector<1x1x256xf32> to vector<1x256xf32>
    %c1_51 = arith.constant 1 : index
    %c0_52 = arith.constant 0 : index
    %c0_53 = arith.constant 0 : index
    %87 = vector.load %arg10[%c1_51, %c0_52, %c0_53] : memref<2x128x64xbf16, #tpu.memory_space<vmem>>, vector<1x128x64xbf16>
    %88 = vector.shape_cast %87 : vector<1x128x64xbf16> to vector<128x64xbf16>
    %c1_54 = arith.constant 1 : index
    %c0_55 = arith.constant 0 : index
    %c0_56 = arith.constant 0 : index
    %89 = vector.load %arg11[%c1_54, %c0_55, %c0_56] : memref<2x1x64xf32, #tpu.memory_space<vmem>>, vector<1x1x64xf32>
    %90 = vector.shape_cast %89 : vector<1x1x64xf32> to vector<1x64xf32>
    %cst_57 = arith.constant dense<0.000000e+00> : vector<8xf32>
    %91 = vector.multi_reduction <add>, %78, %cst_57 [1] : vector<8x64xf32> to vector<8xf32>
    %92 = vector.shape_cast %91 : vector<8xf32> to vector<8x1xf32>
    %cst_58 = arith.constant 6.400000e+01 : f32
    %93 = vector.broadcast %cst_58 : f32 to vector<8x1xf32>
    %94 = arith.divf %92, %93 : vector<8x1xf32>
    %95 = vector.broadcast %94 : vector<8x1xf32> to vector<8x64xf32>
    %96 = arith.subf %78, %95 : vector<8x64xf32>
    %97 = arith.mulf %96, %96 : vector<8x64xf32>
    %cst_59 = arith.constant dense<0.000000e+00> : vector<8xf32>
    %98 = vector.multi_reduction <add>, %97, %cst_59 [1] : vector<8x64xf32> to vector<8xf32>
    %99 = vector.shape_cast %98 : vector<8xf32> to vector<8x1xf32>
    %cst_60 = arith.constant 6.400000e+01 : f32
    %100 = vector.broadcast %cst_60 : f32 to vector<8x1xf32>
    %101 = arith.divf %99, %100 : vector<8x1xf32>
    %cst_61 = arith.constant 9.99999974E-6 : f32
    %102 = vector.broadcast %cst_61 : f32 to vector<8x1xf32>
    %103 = arith.addf %101, %102 : vector<8x1xf32>
    %104 = math.rsqrt %103 : vector<8x1xf32>
    %105 = vector.broadcast %104 : vector<8x1xf32> to vector<8x64xf32>
    %106 = arith.mulf %96, %105 : vector<8x64xf32>
    %107 = vector.broadcast %80 : vector<1x64xf32> to vector<8x64xf32>
    %108 = arith.mulf %106, %107 : vector<8x64xf32>
    %109 = vector.broadcast %82 : vector<1x64xf32> to vector<8x64xf32>
    %110 = arith.addf %108, %109 : vector<8x64xf32>
    %111 = arith.truncf %110 : vector<8x64xf32> to vector<8x64xbf16>
    %cst_62 = arith.constant dense<0.000000e+00> : vector<8x256xf32>
    %112 = tpu.matmul %111, %84, %cst_62 {dimension_numbers = #tpu.dot_dimension_numbers<[1], [0], [0], [1], [0, 0, 1, 1], [], []>} : vector<8x64xbf16>, vector<64x256xbf16>, vector<8x256xf32> -> vector<8x256xf32>
    %113 = vector.broadcast %86 : vector<1x256xf32> to vector<8x256xf32>
    %114 = arith.addf %112, %113 : vector<8x256xf32>
    %115 = vector.extract_strided_slice %114 {offsets = [0, 0], sizes = [8, 128], strides = [1, 1]} : vector<8x256xf32> to vector<8x128xf32>
    %116 = vector.extract_strided_slice %114 {offsets = [0, 128], sizes = [8, 128], strides = [1, 1]} : vector<8x256xf32> to vector<8x128xf32>
    %117 = arith.negf %115 : vector<8x128xf32>
    %118 = math.exp %117 : vector<8x128xf32>
    %cst_63 = arith.constant 1.000000e+00 : f32
    %119 = vector.broadcast %cst_63 : f32 to vector<8x128xf32>
    %120 = arith.addf %119, %118 : vector<8x128xf32>
    %121 = arith.divf %119, %120 : vector<8x128xf32>
    %122 = arith.mulf %115, %121 : vector<8x128xf32>
    %123 = arith.mulf %122, %116 : vector<8x128xf32>
    %124 = arith.truncf %123 : vector<8x128xf32> to vector<8x128xbf16>
    %cst_64 = arith.constant dense<0.000000e+00> : vector<8x64xf32>
    %125 = tpu.matmul %124, %88, %cst_64 {dimension_numbers = #tpu.dot_dimension_numbers<[1], [0], [0], [1], [0, 0, 1, 1], [], []>} : vector<8x128xbf16>, vector<128x64xbf16>, vector<8x64xf32> -> vector<8x64xf32>
    %126 = vector.broadcast %90 : vector<1x64xf32> to vector<8x64xf32>
    %127 = arith.addf %125, %126 : vector<8x64xf32>
    %128 = arith.addf %78, %127 : vector<8x64xf32>
    %129 = arith.truncf %128 : vector<8x64xf32> to vector<8x64xbf16>
    %c0_65 = arith.constant 0 : index
    %c0_66 = arith.constant 0 : index
    %130 = vector.load %arg12[%c0_65, %c0_66] : memref<64x128xbf16, #tpu.memory_space<vmem>>, vector<64x128xbf16>
    %cst_67 = arith.constant dense<0.000000e+00> : vector<8x128xf32>
    %131 = tpu.matmul %129, %130, %cst_67 {dimension_numbers = #tpu.dot_dimension_numbers<[1], [0], [0], [1], [0, 0, 1, 1], [], []>} : vector<8x64xbf16>, vector<64x128xbf16>, vector<8x128xf32> -> vector<8x128xf32>
    %c0_68 = arith.constant 0 : index
    %c0_69 = arith.constant 0 : index
    %132 = vector.load %arg13[%c0_68, %c0_69] : memref<1x128xf32, #tpu.memory_space<vmem>>, vector<1x128xf32>
    %133 = vector.broadcast %132 : vector<1x128xf32> to vector<8x128xf32>
    %134 = arith.addf %131, %133 : vector<8x128xf32>
    %c0_70 = arith.constant 0 : index
    %c0_71 = arith.constant 0 : index
    %135 = vector.load %arg14[%c0_70, %c0_71] : memref<8x128xf32, #tpu.memory_space<vmem>>, vector<8x128xf32>
    tpu.vector_store %arg14[%c0_70, %c0_71], %134 {strides = array<i32>} : memref<8x128xf32, #tpu.memory_space<vmem>>, vector<8x128xf32>,
    return
  }
  func.func @transform_0(%arg0: i32) -> (i32, i32) {
    %c0_i32 = arith.constant 0 : i32
    %c0_i32_0 = arith.constant 0 : i32
    return %arg0, %c0_i32 : i32, i32
  }
  func.func @transform_1(%arg0: i32) -> (i32, i32) {
    %c0_i32 = arith.constant 0 : i32
    %c0_i32_0 = arith.constant 0 : i32
    %c0_i32_1 = arith.constant 0 : i32
    return %c0_i32, %c0_i32_0 : i32, i32
  }
  func.func @transform_2(%arg0: i32) -> (i32, i32) {
    %c0_i32 = arith.constant 0 : i32
    %c0_i32_0 = arith.constant 0 : i32
    %c0_i32_1 = arith.constant 0 : i32
    return %c0_i32, %c0_i32_0 : i32, i32
  }
  func.func @transform_3(%arg0: i32) -> (i32, i32) {
    %c0_i32 = arith.constant 0 : i32
    %c0_i32_0 = arith.constant 0 : i32
    %c0_i32_1 = arith.constant 0 : i32
    return %c0_i32, %c0_i32_0 : i32, i32
  }
  func.func @transform_4(%arg0: i32) -> (i32, i32) {
    %c0_i32 = arith.constant 0 : i32
    %c0_i32_0 = arith.constant 0 : i32
    %c0_i32_1 = arith.constant 0 : i32
    return %c0_i32, %c0_i32_0 : i32, i32
  }
  func.func @transform_5(%arg0: i32) -> (i32, i32, i32) {
    %c0_i32 = arith.constant 0 : i32
    %c0_i32_0 = arith.constant 0 : i32
    %c0_i32_1 = arith.constant 0 : i32
    %c0_i32_2 = arith.constant 0 : i32
    return %c0_i32, %c0_i32_0, %c0_i32_1 : i32, i32, i32
  }
  func.func @transform_6(%arg0: i32) -> (i32, i32, i32) {
    %c0_i32 = arith.constant 0 : i32
    %c0_i32_0 = arith.constant 0 : i32
    %c0_i32_1 = arith.constant 0 : i32
    %c0_i32_2 = arith.constant 0 : i32
    return %c0_i32, %c0_i32_0, %c0_i32_1 : i32, i32, i32
  }
  func.func @transform_7(%arg0: i32) -> (i32, i32, i32) {
    %c0_i32 = arith.constant 0 : i32
    %c0_i32_0 = arith.constant 0 : i32
    %c0_i32_1 = arith.constant 0 : i32
    %c0_i32_2 = arith.constant 0 : i32
    return %c0_i32, %c0_i32_0, %c0_i32_1 : i32, i32, i32
  }
  func.func @transform_8(%arg0: i32) -> (i32, i32, i32) {
    %c0_i32 = arith.constant 0 : i32
    %c0_i32_0 = arith.constant 0 : i32
    %c0_i32_1 = arith.constant 0 : i32
    %c0_i32_2 = arith.constant 0 : i32
    return %c0_i32, %c0_i32_0, %c0_i32_1 : i32, i32, i32
  }
  func.func @transform_9(%arg0: i32) -> (i32, i32, i32) {
    %c0_i32 = arith.constant 0 : i32
    %c0_i32_0 = arith.constant 0 : i32
    %c0_i32_1 = arith.constant 0 : i32
    %c0_i32_2 = arith.constant 0 : i32
    return %c0_i32, %c0_i32_0, %c0_i32_1 : i32, i32, i32
  }
  func.func @transform_10(%arg0: i32) -> (i32, i32, i32) {
    %c0_i32 = arith.constant 0 : i32
    %c0_i32_0 = arith.constant 0 : i32
    %c0_i32_1 = arith.constant 0 : i32
    %c0_i32_2 = arith.constant 0 : i32
    return %c0_i32, %c0_i32_0, %c0_i32_1 : i32, i32, i32
  }
  func.func @transform_11(%arg0: i32) -> (i32, i32) {
    %c0_i32 = arith.constant 0 : i32
    %c0_i32_0 = arith.constant 0 : i32
    %c0_i32_1 = arith.constant 0 : i32
    return %c0_i32, %c0_i32_0 : i32, i32
  }
  func.func @transform_12(%arg0: i32) -> (i32, i32) {
    %c0_i32 = arith.constant 0 : i32
    %c0_i32_0 = arith.constant 0 : i32
    %c0_i32_1 = arith.constant 0 : i32
    return %c0_i32, %c0_i32_0 : i32, i32
  }
  func.func @transform_13(%arg0: i32) -> (i32, i32) {
    %c0_i32 = arith.constant 0 : i32
    %c0_i32_0 = arith.constant 0 : i32
    return %arg0, %c0_i32 : i32, i32
  }
}

module attributes {stable_mosaic.version = 11 : i64} {
  func.func @dec1_head_kernel(%arg0: i32, %arg1: memref<32x32xf32, #tpu.memory_space<vmem>>, %arg2: memref<2x1x32xf32, #tpu.memory_space<vmem>>, %arg3: memref<2x1x32xf32, #tpu.memory_space<vmem>>, %arg4: memref<2x32x128xbf16, #tpu.memory_space<vmem>>, %arg5: memref<2x1x128xf32, #tpu.memory_space<vmem>>, %arg6: memref<2x64x32xbf16, #tpu.memory_space<vmem>>, %arg7: memref<2x1x32xf32, #tpu.memory_space<vmem>>, %arg8: memref<32x16xbf16, #tpu.memory_space<vmem>>, %arg9: memref<1x16xf32, #tpu.memory_space<vmem>>, %arg10: memref<32x16xf32, #tpu.memory_space<vmem>>) attributes {dimension_semantics = [#tpu.dimension_semantics<parallel>], iteration_bounds = array<i64: 1>, scalar_prefetch = 0 : i64, scratch_operands = 0 : i64, tpu.core_type = #tpu.core_type<tc>, window_params = [{transform_indices = @transform_0, window_bounds = array<i64: 32, 32>}, {pipeline_mode = #tpu.pipeline_mode<synchronous>, transform_indices = @transform_1, window_bounds = array<i64: 2, 1, 32>}, {pipeline_mode = #tpu.pipeline_mode<synchronous>, transform_indices = @transform_2, window_bounds = array<i64: 2, 1, 32>}, {pipeline_mode = #tpu.pipeline_mode<synchronous>, transform_indices = @transform_3, window_bounds = array<i64: 2, 32, 128>}, {pipeline_mode = #tpu.pipeline_mode<synchronous>, transform_indices = @transform_4, window_bounds = array<i64: 2, 1, 128>}, {pipeline_mode = #tpu.pipeline_mode<synchronous>, transform_indices = @transform_5, window_bounds = array<i64: 2, 64, 32>}, {pipeline_mode = #tpu.pipeline_mode<synchronous>, transform_indices = @transform_6, window_bounds = array<i64: 2, 1, 32>}, {pipeline_mode = #tpu.pipeline_mode<synchronous>, transform_indices = @transform_7, window_bounds = array<i64: 32, 16>}, {pipeline_mode = #tpu.pipeline_mode<synchronous>, transform_indices = @transform_8, window_bounds = array<i64: 1, 16>}, {transform_indices = @transform_9, window_bounds = array<i64: 32, 16>}]} {
    %c0 = arith.constant 0 : index
    %c0_0 = arith.constant 0 : index
    %0 = vector.load %arg1[%c0, %c0_0] : memref<32x32xf32, #tpu.memory_space<vmem>>, vector<32x32xf32>
    %c0_1 = arith.constant 0 : index
    %c0_2 = arith.constant 0 : index
    %c0_3 = arith.constant 0 : index
    %1 = vector.load %arg2[%c0_1, %c0_2, %c0_3] : memref<2x1x32xf32, #tpu.memory_space<vmem>>, vector<1x1x32xf32>
    %2 = vector.shape_cast %1 : vector<1x1x32xf32> to vector<1x32xf32>
    %c0_4 = arith.constant 0 : index
    %c0_5 = arith.constant 0 : index
    %c0_6 = arith.constant 0 : index
    %3 = vector.load %arg3[%c0_4, %c0_5, %c0_6] : memref<2x1x32xf32, #tpu.memory_space<vmem>>, vector<1x1x32xf32>
    %4 = vector.shape_cast %3 : vector<1x1x32xf32> to vector<1x32xf32>
    %c0_7 = arith.constant 0 : index
    %c0_8 = arith.constant 0 : index
    %c0_9 = arith.constant 0 : index
    %5 = vector.load %arg4[%c0_7, %c0_8, %c0_9] : memref<2x32x128xbf16, #tpu.memory_space<vmem>>, vector<1x32x128xbf16>
    %6 = vector.shape_cast %5 : vector<1x32x128xbf16> to vector<32x128xbf16>
    %c0_10 = arith.constant 0 : index
    %c0_11 = arith.constant 0 : index
    %c0_12 = arith.constant 0 : index
    %7 = vector.load %arg5[%c0_10, %c0_11, %c0_12] : memref<2x1x128xf32, #tpu.memory_space<vmem>>, vector<1x1x128xf32>
    %8 = vector.shape_cast %7 : vector<1x1x128xf32> to vector<1x128xf32>
    %c0_13 = arith.constant 0 : index
    %c0_14 = arith.constant 0 : index
    %c0_15 = arith.constant 0 : index
    %9 = vector.load %arg6[%c0_13, %c0_14, %c0_15] : memref<2x64x32xbf16, #tpu.memory_space<vmem>>, vector<1x64x32xbf16>
    %10 = vector.shape_cast %9 : vector<1x64x32xbf16> to vector<64x32xbf16>
    %c0_16 = arith.constant 0 : index
    %c0_17 = arith.constant 0 : index
    %c0_18 = arith.constant 0 : index
    %11 = vector.load %arg7[%c0_16, %c0_17, %c0_18] : memref<2x1x32xf32, #tpu.memory_space<vmem>>, vector<1x1x32xf32>
    %12 = vector.shape_cast %11 : vector<1x1x32xf32> to vector<1x32xf32>
    %cst = arith.constant dense<0.000000e+00> : vector<32xf32>
    %13 = vector.multi_reduction <add>, %0, %cst [1] : vector<32x32xf32> to vector<32xf32>
    %14 = vector.shape_cast %13 : vector<32xf32> to vector<32x1xf32>
    %cst_19 = arith.constant 3.200000e+01 : f32
    %15 = vector.broadcast %cst_19 : f32 to vector<32x1xf32>
    %16 = arith.divf %14, %15 : vector<32x1xf32>
    %17 = vector.broadcast %16 : vector<32x1xf32> to vector<32x32xf32>
    %18 = arith.subf %0, %17 : vector<32x32xf32>
    %19 = arith.mulf %18, %18 : vector<32x32xf32>
    %cst_20 = arith.constant dense<0.000000e+00> : vector<32xf32>
    %20 = vector.multi_reduction <add>, %19, %cst_20 [1] : vector<32x32xf32> to vector<32xf32>
    %21 = vector.shape_cast %20 : vector<32xf32> to vector<32x1xf32>
    %cst_21 = arith.constant 3.200000e+01 : f32
    %22 = vector.broadcast %cst_21 : f32 to vector<32x1xf32>
    %23 = arith.divf %21, %22 : vector<32x1xf32>
    %cst_22 = arith.constant 9.99999974E-6 : f32
    %24 = vector.broadcast %cst_22 : f32 to vector<32x1xf32>
    %25 = arith.addf %23, %24 : vector<32x1xf32>
    %26 = math.rsqrt %25 : vector<32x1xf32>
    %27 = vector.broadcast %26 : vector<32x1xf32> to vector<32x32xf32>
    %28 = arith.mulf %18, %27 : vector<32x32xf32>
    %29 = vector.broadcast %2 : vector<1x32xf32> to vector<32x32xf32>
    %30 = arith.mulf %28, %29 : vector<32x32xf32>
    %31 = vector.broadcast %4 : vector<1x32xf32> to vector<32x32xf32>
    %32 = arith.addf %30, %31 : vector<32x32xf32>
    %33 = arith.truncf %32 : vector<32x32xf32> to vector<32x32xbf16>
    %cst_23 = arith.constant dense<0.000000e+00> : vector<32x128xf32>
    %34 = tpu.matmul %33, %6, %cst_23 {dimension_numbers = #tpu.dot_dimension_numbers<[1], [0], [0], [1], [0, 0, 1, 1], [], []>} : vector<32x32xbf16>, vector<32x128xbf16>, vector<32x128xf32> -> vector<32x128xf32>
    %35 = vector.broadcast %8 : vector<1x128xf32> to vector<32x128xf32>
    %36 = arith.addf %34, %35 : vector<32x128xf32>
    %37 = vector.extract_strided_slice %36 {offsets = [0, 0], sizes = [32, 64], strides = [1, 1]} : vector<32x128xf32> to vector<32x64xf32>
    %38 = vector.extract_strided_slice %36 {offsets = [0, 64], sizes = [32, 64], strides = [1, 1]} : vector<32x128xf32> to vector<32x64xf32>
    %39 = arith.negf %37 : vector<32x64xf32>
    %40 = math.exp %39 : vector<32x64xf32>
    %cst_24 = arith.constant 1.000000e+00 : f32
    %41 = vector.broadcast %cst_24 : f32 to vector<32x64xf32>
    %42 = arith.addf %41, %40 : vector<32x64xf32>
    %43 = arith.divf %41, %42 : vector<32x64xf32>
    %44 = arith.mulf %37, %43 : vector<32x64xf32>
    %45 = arith.mulf %44, %38 : vector<32x64xf32>
    %46 = arith.truncf %45 : vector<32x64xf32> to vector<32x64xbf16>
    %cst_25 = arith.constant dense<0.000000e+00> : vector<32x32xf32>
    %47 = tpu.matmul %46, %10, %cst_25 {dimension_numbers = #tpu.dot_dimension_numbers<[1], [0], [0], [1], [0, 0, 1, 1], [], []>} : vector<32x64xbf16>, vector<64x32xbf16>, vector<32x32xf32> -> vector<32x32xf32>
    %48 = vector.broadcast %12 : vector<1x32xf32> to vector<32x32xf32>
    %49 = arith.addf %47, %48 : vector<32x32xf32>
    %50 = arith.addf %0, %49 : vector<32x32xf32>
    %c1 = arith.constant 1 : index
    %c0_26 = arith.constant 0 : index
    %c0_27 = arith.constant 0 : index
    %51 = vector.load %arg2[%c1, %c0_26, %c0_27] : memref<2x1x32xf32, #tpu.memory_space<vmem>>, vector<1x1x32xf32>
    %52 = vector.shape_cast %51 : vector<1x1x32xf32> to vector<1x32xf32>
    %c1_28 = arith.constant 1 : index
    %c0_29 = arith.constant 0 : index
    %c0_30 = arith.constant 0 : index
    %53 = vector.load %arg3[%c1_28, %c0_29, %c0_30] : memref<2x1x32xf32, #tpu.memory_space<vmem>>, vector<1x1x32xf32>
    %54 = vector.shape_cast %53 : vector<1x1x32xf32> to vector<1x32xf32>
    %c1_31 = arith.constant 1 : index
    %c0_32 = arith.constant 0 : index
    %c0_33 = arith.constant 0 : index
    %55 = vector.load %arg4[%c1_31, %c0_32, %c0_33] : memref<2x32x128xbf16, #tpu.memory_space<vmem>>, vector<1x32x128xbf16>
    %56 = vector.shape_cast %55 : vector<1x32x128xbf16> to vector<32x128xbf16>
    %c1_34 = arith.constant 1 : index
    %c0_35 = arith.constant 0 : index
    %c0_36 = arith.constant 0 : index
    %57 = vector.load %arg5[%c1_34, %c0_35, %c0_36] : memref<2x1x128xf32, #tpu.memory_space<vmem>>, vector<1x1x128xf32>
    %58 = vector.shape_cast %57 : vector<1x1x128xf32> to vector<1x128xf32>
    %c1_37 = arith.constant 1 : index
    %c0_38 = arith.constant 0 : index
    %c0_39 = arith.constant 0 : index
    %59 = vector.load %arg6[%c1_37, %c0_38, %c0_39] : memref<2x64x32xbf16, #tpu.memory_space<vmem>>, vector<1x64x32xbf16>
    %60 = vector.shape_cast %59 : vector<1x64x32xbf16> to vector<64x32xbf16>
    %c1_40 = arith.constant 1 : index
    %c0_41 = arith.constant 0 : index
    %c0_42 = arith.constant 0 : index
    %61 = vector.load %arg7[%c1_40, %c0_41, %c0_42] : memref<2x1x32xf32, #tpu.memory_space<vmem>>, vector<1x1x32xf32>
    %62 = vector.shape_cast %61 : vector<1x1x32xf32> to vector<1x32xf32>
    %cst_43 = arith.constant dense<0.000000e+00> : vector<32xf32>
    %63 = vector.multi_reduction <add>, %50, %cst_43 [1] : vector<32x32xf32> to vector<32xf32>
    %64 = vector.shape_cast %63 : vector<32xf32> to vector<32x1xf32>
    %cst_44 = arith.constant 3.200000e+01 : f32
    %65 = vector.broadcast %cst_44 : f32 to vector<32x1xf32>
    %66 = arith.divf %64, %65 : vector<32x1xf32>
    %67 = vector.broadcast %66 : vector<32x1xf32> to vector<32x32xf32>
    %68 = arith.subf %50, %67 : vector<32x32xf32>
    %69 = arith.mulf %68, %68 : vector<32x32xf32>
    %cst_45 = arith.constant dense<0.000000e+00> : vector<32xf32>
    %70 = vector.multi_reduction <add>, %69, %cst_45 [1] : vector<32x32xf32> to vector<32xf32>
    %71 = vector.shape_cast %70 : vector<32xf32> to vector<32x1xf32>
    %cst_46 = arith.constant 3.200000e+01 : f32
    %72 = vector.broadcast %cst_46 : f32 to vector<32x1xf32>
    %73 = arith.divf %71, %72 : vector<32x1xf32>
    %cst_47 = arith.constant 9.99999974E-6 : f32
    %74 = vector.broadcast %cst_47 : f32 to vector<32x1xf32>
    %75 = arith.addf %73, %74 : vector<32x1xf32>
    %76 = math.rsqrt %75 : vector<32x1xf32>
    %77 = vector.broadcast %76 : vector<32x1xf32> to vector<32x32xf32>
    %78 = arith.mulf %68, %77 : vector<32x32xf32>
    %79 = vector.broadcast %52 : vector<1x32xf32> to vector<32x32xf32>
    %80 = arith.mulf %78, %79 : vector<32x32xf32>
    %81 = vector.broadcast %54 : vector<1x32xf32> to vector<32x32xf32>
    %82 = arith.addf %80, %81 : vector<32x32xf32>
    %83 = arith.truncf %82 : vector<32x32xf32> to vector<32x32xbf16>
    %cst_48 = arith.constant dense<0.000000e+00> : vector<32x128xf32>
    %84 = tpu.matmul %83, %56, %cst_48 {dimension_numbers = #tpu.dot_dimension_numbers<[1], [0], [0], [1], [0, 0, 1, 1], [], []>} : vector<32x32xbf16>, vector<32x128xbf16>, vector<32x128xf32> -> vector<32x128xf32>
    %85 = vector.broadcast %58 : vector<1x128xf32> to vector<32x128xf32>
    %86 = arith.addf %84, %85 : vector<32x128xf32>
    %87 = vector.extract_strided_slice %86 {offsets = [0, 0], sizes = [32, 64], strides = [1, 1]} : vector<32x128xf32> to vector<32x64xf32>
    %88 = vector.extract_strided_slice %86 {offsets = [0, 64], sizes = [32, 64], strides = [1, 1]} : vector<32x128xf32> to vector<32x64xf32>
    %89 = arith.negf %87 : vector<32x64xf32>
    %90 = math.exp %89 : vector<32x64xf32>
    %cst_49 = arith.constant 1.000000e+00 : f32
    %91 = vector.broadcast %cst_49 : f32 to vector<32x64xf32>
    %92 = arith.addf %91, %90 : vector<32x64xf32>
    %93 = arith.divf %91, %92 : vector<32x64xf32>
    %94 = arith.mulf %87, %93 : vector<32x64xf32>
    %95 = arith.mulf %94, %88 : vector<32x64xf32>
    %96 = arith.truncf %95 : vector<32x64xf32> to vector<32x64xbf16>
    %cst_50 = arith.constant dense<0.000000e+00> : vector<32x32xf32>
    %97 = tpu.matmul %96, %60, %cst_50 {dimension_numbers = #tpu.dot_dimension_numbers<[1], [0], [0], [1], [0, 0, 1, 1], [], []>} : vector<32x64xbf16>, vector<64x32xbf16>, vector<32x32xf32> -> vector<32x32xf32>
    %98 = vector.broadcast %62 : vector<1x32xf32> to vector<32x32xf32>
    %99 = arith.addf %97, %98 : vector<32x32xf32>
    %100 = arith.addf %50, %99 : vector<32x32xf32>
    %101 = arith.truncf %100 : vector<32x32xf32> to vector<32x32xbf16>
    %c0_51 = arith.constant 0 : index
    %c0_52 = arith.constant 0 : index
    %102 = vector.load %arg8[%c0_51, %c0_52] : memref<32x16xbf16, #tpu.memory_space<vmem>>, vector<32x16xbf16>
    %cst_53 = arith.constant dense<0.000000e+00> : vector<32x16xf32>
    %103 = tpu.matmul %101, %102, %cst_53 {dimension_numbers = #tpu.dot_dimension_numbers<[1], [0], [0], [1], [0, 0, 1, 1], [], []>} : vector<32x32xbf16>, vector<32x16xbf16>, vector<32x16xf32> -> vector<32x16xf32>
    %c0_54 = arith.constant 0 : index
    %c0_55 = arith.constant 0 : index
    %104 = vector.load %arg9[%c0_54, %c0_55] : memref<1x16xf32, #tpu.memory_space<vmem>>, vector<1x16xf32>
    %105 = vector.broadcast %104 : vector<1x16xf32> to vector<32x16xf32>
    %106 = arith.addf %103, %105 : vector<32x16xf32>
    %107 = arith.negf %106 : vector<32x16xf32>
    %108 = math.exp %107 : vector<32x16xf32>
    %cst_56 = arith.constant 1.000000e+00 : f32
    %109 = vector.broadcast %cst_56 : f32 to vector<32x16xf32>
    %110 = arith.addf %109, %108 : vector<32x16xf32>
    %111 = arith.divf %109, %110 : vector<32x16xf32>
    %c0_57 = arith.constant 0 : index
    %c0_58 = arith.constant 0 : index
    %112 = vector.load %arg10[%c0_57, %c0_58] : memref<32x16xf32, #tpu.memory_space<vmem>>, vector<32x16xf32>
    tpu.vector_store %arg10[%c0_57, %c0_58], %111 {strides = array<i32>} : memref<32x16xf32, #tpu.memory_space<vmem>>, vector<32x16xf32>,
    return
  }
  func.func @transform_0(%arg0: i32) -> (i32, i32) {
    %c0_i32 = arith.constant 0 : i32
    %c0_i32_0 = arith.constant 0 : i32
    return %arg0, %c0_i32 : i32, i32
  }
  func.func @transform_1(%arg0: i32) -> (i32, i32, i32) {
    %c0_i32 = arith.constant 0 : i32
    %c0_i32_0 = arith.constant 0 : i32
    %c0_i32_1 = arith.constant 0 : i32
    %c0_i32_2 = arith.constant 0 : i32
    return %c0_i32, %c0_i32_0, %c0_i32_1 : i32, i32, i32
  }
  func.func @transform_2(%arg0: i32) -> (i32, i32, i32) {
    %c0_i32 = arith.constant 0 : i32
    %c0_i32_0 = arith.constant 0 : i32
    %c0_i32_1 = arith.constant 0 : i32
    %c0_i32_2 = arith.constant 0 : i32
    return %c0_i32, %c0_i32_0, %c0_i32_1 : i32, i32, i32
  }
  func.func @transform_3(%arg0: i32) -> (i32, i32, i32) {
    %c0_i32 = arith.constant 0 : i32
    %c0_i32_0 = arith.constant 0 : i32
    %c0_i32_1 = arith.constant 0 : i32
    %c0_i32_2 = arith.constant 0 : i32
    return %c0_i32, %c0_i32_0, %c0_i32_1 : i32, i32, i32
  }
  func.func @transform_4(%arg0: i32) -> (i32, i32, i32) {
    %c0_i32 = arith.constant 0 : i32
    %c0_i32_0 = arith.constant 0 : i32
    %c0_i32_1 = arith.constant 0 : i32
    %c0_i32_2 = arith.constant 0 : i32
    return %c0_i32, %c0_i32_0, %c0_i32_1 : i32, i32, i32
  }
  func.func @transform_5(%arg0: i32) -> (i32, i32, i32) {
    %c0_i32 = arith.constant 0 : i32
    %c0_i32_0 = arith.constant 0 : i32
    %c0_i32_1 = arith.constant 0 : i32
    %c0_i32_2 = arith.constant 0 : i32
    return %c0_i32, %c0_i32_0, %c0_i32_1 : i32, i32, i32
  }
  func.func @transform_6(%arg0: i32) -> (i32, i32, i32) {
    %c0_i32 = arith.constant 0 : i32
    %c0_i32_0 = arith.constant 0 : i32
    %c0_i32_1 = arith.constant 0 : i32
    %c0_i32_2 = arith.constant 0 : i32
    return %c0_i32, %c0_i32_0, %c0_i32_1 : i32, i32, i32
  }
  func.func @transform_7(%arg0: i32) -> (i32, i32) {
    %c0_i32 = arith.constant 0 : i32
    %c0_i32_0 = arith.constant 0 : i32
    %c0_i32_1 = arith.constant 0 : i32
    return %c0_i32, %c0_i32_0 : i32, i32
  }
  func.func @transform_8(%arg0: i32) -> (i32, i32) {
    %c0_i32 = arith.constant 0 : i32
    %c0_i32_0 = arith.constant 0 : i32
    %c0_i32_1 = arith.constant 0 : i32
    return %c0_i32, %c0_i32_0 : i32, i32
  }
  func.func @transform_9(%arg0: i32) -> (i32, i32) {
    %c0_i32 = arith.constant 0 : i32
    %c0_i32_0 = arith.constant 0 : i32
    return %arg0, %c0_i32 : i32, i32
  }
}

</mosaic_0001>

<llo_original>
// kernel: lmfnet_forward.3
$region0: #{lmfnet_forward.3}
  #allocation0 [shape = 'u32[]', space=smem, size = 0x4, offset = 0x4, fixed_abs, tag = 'smem constant byte address 0x4 - core index']
  #allocation1 [shape = 'u32[144,128]{1,0:T(1,128)}', space=vmem, size = 0x12000, scoped, tag = 'internal scratch']
  %s0 = inlined_call_operand.vmem [shape: f32[32,48], index: 0, kind: input, shape index: {}]
  %s1 = inlined_call_operand.vmem [shape: bf16[48,32], index: 1, kind: input, shape index: {}]
  %s2 = inlined_call_operand.vmem [shape: f32[1,32], index: 2, kind: input, shape index: {}]
  %s3 = inlined_call_operand.vmem [shape: f32[1,32], index: 3, kind: input, shape index: {}]
  %s4 = inlined_call_operand.vmem [shape: f32[1,32], index: 4, kind: input, shape index: {}]
  %s5 = inlined_call_operand.vmem [shape: f32[2,1,32], index: 5, kind: input, shape index: {}]
  %s6 = inlined_call_operand.vmem [shape: f32[2,1,32], index: 6, kind: input, shape index: {}]
  %s7 = inlined_call_operand.vmem [shape: bf16[2,32,128], index: 7, kind: input, shape index: {}]
  %s8 = inlined_call_operand.vmem [shape: f32[2,1,128], index: 8, kind: input, shape index: {}]
  %s9 = inlined_call_operand.vmem [shape: bf16[2,64,32], index: 9, kind: input, shape index: {}]
  %s10 = inlined_call_operand.vmem [shape: f32[2,1,32], index: 10, kind: input, shape index: {}]
  %s11 = inlined_call_operand.vmem [shape: f32[32,32], index: 11, kind: output, shape index: {}]
  %s12 = sld [smem:[#allocation0]]
  $region54: #{lmfnet_forward.3} parent=0
    _
  %s14 = ssub.s32 1, %s12
  %s15 = scalar_select 0, %s14, %s12
  // Predicated region
  $region2: #{lmfnet_forward.3} parent=0 // pred_check
    _
  $region3: #{lmfnet_forward.3} parent=0 // pred_check_branch
    %17 = sbr.rel (0) target = $region5
  $region4: #{lmfnet_forward.3} parent=0 // pred_region
    _
  $region5: #{lmfnet_forward.3} parent=0 // pred_fallthru
    _
  // Predicated region
  $region6: #{lmfnet_forward.3} parent=0 // pred_check
    _
  $region7: #{lmfnet_forward.3} parent=0 // pred_check_branch
    %19 = sbr.rel (0) target = $region9
  $region8: #{lmfnet_forward.3} parent=0 // pred_region
    _
  $region9: #{lmfnet_forward.3} parent=0 // pred_fallthru
    _
  // Predicated region
  $region10: #{lmfnet_forward.3} parent=0 // pred_check
    _
  $region11: #{lmfnet_forward.3} parent=0 // pred_check_branch
    %21 = sbr.rel (0) target = $region13
  $region12: #{lmfnet_forward.3} parent=0 // pred_region
    _
  $region13: #{lmfnet_forward.3} parent=0 // pred_fallthru
    _
  // Predicated region
  $region14: #{lmfnet_forward.3} parent=0 // pred_check
    _
  $region15: #{lmfnet_forward.3} parent=0 // pred_check_branch
    %23 = sbr.rel (0) target = $region17
  $region16: #{lmfnet_forward.3} parent=0 // pred_region
    _
  $region17: #{lmfnet_forward.3} parent=0 // pred_fallthru
    _
  // Predicated region
  $region18: #{lmfnet_forward.3} parent=0 // pred_check
    _
  $region19: #{lmfnet_forward.3} parent=0 // pred_check_branch
    %25 = sbr.rel (0) target = $region21
  $region20: #{lmfnet_forward.3} parent=0 // pred_region
    _
  $region21: #{lmfnet_forward.3} parent=0 // pred_fallthru
    _
  // Predicated region
  $region22: #{lmfnet_forward.3} parent=0 // pred_check
    _
  $region23: #{lmfnet_forward.3} parent=0 // pred_check_branch
    %27 = sbr.rel (0) target = $region25
  $region24: #{lmfnet_forward.3} parent=0 // pred_region
    _
  $region25: #{lmfnet_forward.3} parent=0 // pred_fallthru
    _
  // Predicated region
  $region26: #{lmfnet_forward.3} parent=0 // pred_check
    _
  $region27: #{lmfnet_forward.3} parent=0 // pred_check_branch
    %29 = sbr.rel (0) target = $region29
  $region28: #{lmfnet_forward.3} parent=0 // pred_region
    _
  $region29: #{lmfnet_forward.3} parent=0 // pred_fallthru
    _
  // Predicated region
  $region30: #{lmfnet_forward.3} parent=0 // pred_check
    _
  $region31: #{lmfnet_forward.3} parent=0 // pred_check_branch
    %31 = sbr.rel (0) target = $region33
  $region32: #{lmfnet_forward.3} parent=0 // pred_region
    _
  $region33: #{lmfnet_forward.3} parent=0 // pred_fallthru
    _
  // Predicated region
  $region34: #{lmfnet_forward.3} parent=0 // pred_check
    _
  $region35: #{lmfnet_forward.3} parent=0 // pred_check_branch
    %33 = sbr.rel (0) target = $region37
  $region36: #{lmfnet_forward.3} parent=0 // pred_region
    _
  $region37: #{lmfnet_forward.3} parent=0 // pred_fallthru
    _
  // Predicated region
  $region38: #{lmfnet_forward.3} parent=0 // pred_check
    _
  $region39: #{lmfnet_forward.3} parent=0 // pred_check_branch
    %35 = sbr.rel (0) target = $region41
  $region40: #{lmfnet_forward.3} parent=0 // pred_region
    _
  $region41: #{lmfnet_forward.3} parent=0 // pred_fallthru
    _
  // Predicated region
  $region42: #{lmfnet_forward.3} parent=0 // pred_check
    _
  $region43: #{lmfnet_forward.3} parent=0 // pred_check_branch
    %37 = sbr.rel (0) target = $region45
  $region44: #{lmfnet_forward.3} parent=0 // pred_region
    _
  $region45: #{lmfnet_forward.3} parent=0 // pred_fallthru
    _
  %v39 = vld [vmem:[%s0] sm:$0xff]
  %v40 = vld [vmem:[%s0 + $0x8] sm:$0xff]
  %v41 = vld [vmem:[%s0 + $0x10] sm:$0xff]
  %v42 = vld [vmem:[%s0 + $0x18] sm:$0xff]
  %v43 = vpack.c.bf16 %v40, %v39
  %v44 = vpack.c.bf16 %v42, %v41
  %v45 = vld [vmem:[%s1] sm:$0xf]
  %v46 = vld [vmem:[%s1 + $0x4] sm:$0xf]
  %v47 = vld [vmem:[%s1 + $0x8] sm:$0xf]
  %v48 = vld [vmem:[%s1 + $0xc] sm:$0xf]
  %v49 = vld [vmem:[%s1 + $0x10] sm:$0xf]
  %v50 = vld [vmem:[%s1 + $0x14] sm:$0xf]
  %v51 = vld [vmem:[%s2] sm:$0x1]
  %v53 = vlaneseq
  %v54 = vshrl.u32 %v53, 7
  %v55 = vsub.s32 0, %v54
  %v56 = vrot.slane %v51, %v55
  %v64 = vunpack.c.l.b16 %v45
  %v65 = vunpack.c.l.b16 %v46
  %v66 = vunpack.c.l.b16 %v47
  %v67 = vunpack.c.l.b16 %v48
  %v68 = vunpack.c.l.b16 %v49
  %v69 = vunpack.c.l.b16 %v50
  %v70 = vpack.c.b16 %v65, %v64
  %v71 = vpack.c.b16 %v67, %v66
  %v72 = vpack.c.b16 %v69, %v68
  %vm76 = vcmask 392192
  %v78 = vsel %vm76, %v43, 0
  %v81 = vsel %vm76, %v44, 0
  %83 = vmatprep.subr.bf16.mxu0 0
  %84 = vmatpush1.bf16.msra.mxu0 0
  %85 = vmatprep.subr.bf16.mxu0 0
  %86 = vmatpush1.bf16.msra.mxu0 0
  %87 = vmatprep.subr.bf16.mxu0 0
  %88 = vmatpush1.bf16.msra.mxu0 0
  %89 = vmatprep.subr.bf16.mxu0 0
  %90 = vmatpush1.bf16.msra.mxu0 0
  %91 = vmatprep.subr.bf16.mxu0 0
  %92 = vmatpush1.bf16.msra.mxu0 0
  %93 = vmatprep.subr.bf16.mxu0 0
  %94 = vmatpush1.bf16.msra.mxu0 %v72
  %95 = vmatprep.subr.bf16.mxu0 0
  %96 = vmatpush1.bf16.msra.mxu0 %v71
  %97 = vmatprep.subr.bf16.mxu0 0
  %98 = vmatpush1.bf16.msra.mxu0 %v70
  %99 = vmatprep.subr.bf16.mxu0 0
  %100 = vmatpush2.bf16.msra.mxu0 0
  %101 = vmatprep.subr.bf16.mxu0 0
  %102 = vmatpush2.bf16.msra.mxu0 0
  %103 = vmatprep.subr.bf16.mxu0 0
  %104 = vmatpush2.bf16.msra.mxu0 0
  %105 = vmatprep.subr.bf16.mxu0 0
  %106 = vmatpush2.bf16.msra.mxu0 0
  %107 = vmatprep.subr.bf16.mxu0 0
  %108 = vmatpush2.bf16.msra.mxu0 0
  %109 = vmatprep.subr.bf16.mxu0 0
  %110 = vmatpush2.bf16.msra.mxu0 0
  %111 = vmatprep.subr.bf16.mxu0 0
  %112 = vmatpush2.bf16.msra.mxu0 0
  %113 = vmatprep.subr.bf16.mxu0 0
  %114 = vmatpush2.bf16.msra.mxu0 0
  %115 = vmatprep.mubr.bf16.mxu0 0
  %116 = vmatmul.mubr.bf16.gmra.mxu0 %v78
  %v117 = vpop.f32.mrf.mxu0
  %v118 = vadd.f32 %v56, %v117
  %v119 = vpop.f32.mrf.mxu0
  %v120 = vpop.f32.mrf.mxu0
  %v121 = vadd.f32 %v56, %v120
  %v122 = vpop.f32.mrf.mxu0
  %123 = vmatprep.mubr.bf16.mxu0 0
  %124 = vmatmul.mubr.bf16.gmra.mxu0 %v81
  %v125 = vpop.f32.mrf.mxu0
  %v126 = vadd.f32 %v56, %v125
  %v127 = vpop.f32.mrf.mxu0
  %v128 = vpop.f32.mrf.mxu0
  %v129 = vadd.f32 %v56, %v128
  %v130 = vpop.f32.mrf.mxu0
  %131 = vdwg.mxu0
  %v132 = vld [vmem:[%s3] sm:$0x1]
  %v133 = vld [vmem:[%s4] sm:$0x1]
  %vm134 = vcmask 261120
  %v135 = vsel %vm134, %v118, 0.0
  %136 = vadd.xlane.f32.xlu0 %v135
  %v137 = vpop.xlane.xlu0 %136
  %v138 = vsel %vm134, %v121, 0.0
  %139 = vadd.xlane.f32.xlu0 %v138
  %v140 = vpop.xlane.xlu0 %139
  %v141 = vsel %vm134, %v126, 0.0
  %142 = vadd.xlane.f32.xlu0 %v141
  %v143 = vpop.xlane.xlu0 %142
  %v144 = vsel %vm134, %v129, 0.0
  %145 = vadd.xlane.f32.xlu0 %v144
  %v146 = vpop.xlane.xlu0 %145
  %v147 = vrcp.pop 32.0
  %v148 = vmul.f32 %v137, %v147
  %v149 = vmul.f32 %v140, %v147
  %v150 = vmul.f32 %v143, %v147
  %v151 = vmul.f32 %v146, %v147
  %v152 = vsub.f32 %v118, %v148
  %v153 = vsub.f32 %v121, %v149
  %v154 = vsub.f32 %v126, %v150
  %v155 = vsub.f32 %v129, %v151
  %v156 = vmul.f32 %v152, %v152
  %v157 = vmul.f32 %v153, %v153
  %v158 = vmul.f32 %v154, %v154
  %v159 = vmul.f32 %v155, %v155
  %v160 = vsel %vm134, %v156, 0.0
  %161 = vadd.xlane.f32.xlu0 %v160
  %v162 = vpop.xlane.xlu0 %161
  %v163 = vsel %vm134, %v157, 0.0
  %164 = vadd.xlane.f32.xlu0 %v163
  %v165 = vpop.xlane.xlu0 %164
  %v166 = vsel %vm134, %v158, 0.0
  %167 = vadd.xlane.f32.xlu0 %v166
  %v168 = vpop.xlane.xlu0 %167
  %v169 = vsel %vm134, %v159, 0.0
  %170 = vadd.xlane.f32.xlu0 %v169
  %v171 = vpop.xlane.xlu0 %170
  %v172 = vmul.f32 %v162, %v147
  %v173 = vmul.f32 %v165, %v147
  %v174 = vmul.f32 %v168, %v147
  %v175 = vmul.f32 %v171, %v147
  %v176 = vadd.f32 %v172, 1e-05
  %v177 = vadd.f32 %v173, 1e-05
  %v178 = vadd.f32 %v174, 1e-05
  %v179 = vadd.f32 %v175, 1e-05
  %v180 = vrsqrt.pop %v176
  %v181 = vrsqrt.pop %v177
  %v182 = vrsqrt.pop %v178
  %v183 = vrsqrt.pop %v179
  %v184 = vmul.f32 %v152, %v180
  %v185 = vmul.f32 %v153, %v181
  %v186 = vmul.f32 %v154, %v182
  %v187 = vmul.f32 %v155, %v183
  %v189 = vlaneseq
  %v190 = vshrl.u32 %v189, 7
  %v191 = vsub.s32 0, %v190
  %v192 = vrot.slane %v132, %v191
  %v194 = vmul.f32 %v184, %v192
  %v195 = vmul.f32 %v185, %v192
  %v196 = vmul.f32 %v186, %v192
  %v197 = vmul.f32 %v187, %v192
  %v199 = vlaneseq
  %v200 = vshrl.u32 %v199, 7
  %v201 = vsub.s32 0, %v200
  %v202 = vrot.slane %v133, %v201
  %v204 = vadd.f32 %v194, %v202
  %v205 = vadd.f32 %v195, %v202
  %v206 = vadd.f32 %v196, %v202
  %v207 = vadd.f32 %v197, %v202
  %v208 = vld [vmem:[%s5] sm:$0x1]
  %v209 = vld [vmem:[%s6] sm:$0x1]
  %v210 = vld [vmem:[%s7] sm:$0xf]
  %v211 = vld [vmem:[%s7 + $0x4] sm:$0xf]
  %v212 = vld [vmem:[%s7 + $0x8] sm:$0xf]
  %v213 = vld [vmem:[%s7 + $0xc] sm:$0xf]
  %v214 = vld [vmem:[%s8] sm:$0x1]
  %v215 = vld [vmem:[%s9] sm:$0xf]
  %v216 = vld [vmem:[%s9 + $0x4] sm:$0xf]
  %v217 = vld [vmem:[%s9 + $0x8] sm:$0xf]
  %v218 = vld [vmem:[%s9 + $0xc] sm:$0xf]
  %v219 = vld [vmem:[%s9 + $0x10] sm:$0xf]
  %v220 = vld [vmem:[%s9 + $0x14] sm:$0xf]
  %v221 = vld [vmem:[%s9 + $0x18] sm:$0xf]
  %v222 = vld [vmem:[%s9 + $0x1c] sm:$0xf]
  %v223 = vld [vmem:[%s10] sm:$0x1]
  %v224 = vsel %vm134, %v204, 0.0
  %225 = vadd.xlane.f32.xlu0 %v224
  %v226 = vpop.xlane.xlu0 %225
  %v227 = vsel %vm134, %v205, 0.0
  %228 = vadd.xlane.f32.xlu0 %v227
  %v229 = vpop.xlane.xlu0 %228
  %v230 = vsel %vm134, %v206, 0.0
  %231 = vadd.xlane.f32.xlu0 %v230
  %v232 = vpop.xlane.xlu0 %231
  %v233 = vsel %vm134, %v207, 0.0
  %234 = vadd.xlane.f32.xlu0 %v233
  %v235 = vpop.xlane.xlu0 %234
  %v236 = vmul.f32 %v226, %v147
  %v237 = vmul.f32 %v229, %v147
  %v238 = vmul.f32 %v232, %v147
  %v239 = vmul.f32 %v235, %v147
  %v240 = vsub.f32 %v204, %v236
  %v241 = vsub.f32 %v205, %v237
  %v242 = vsub.f32 %v206, %v238
  %v243 = vsub.f32 %v207, %v239
  %v244 = vmul.f32 %v240, %v240
  %v245 = vmul.f32 %v241, %v241
  %v246 = vmul.f32 %v242, %v242
  %v247 = vmul.f32 %v243, %v243
  %v248 = vsel %vm134, %v244, 0.0
  %249 = vadd.xlane.f32.xlu0 %v248
  %v250 = vpop.xlane.xlu0 %249
  %v251 = vsel %vm134, %v245, 0.0
  %252 = vadd.xlane.f32.xlu0 %v251
  %v253 = vpop.xlane.xlu0 %252
  %v254 = vsel %vm134, %v246, 0.0
  %255 = vadd.xlane.f32.xlu0 %v254
  %v256 = vpop.xlane.xlu0 %255
  %v257 = vsel %vm134, %v247, 0.0
  %258 = vadd.xlane.f32.xlu0 %v257
  %v259 = vpop.xlane.xlu0 %258
  %v260 = vmul.f32 %v250, %v147
  %v261 = vmul.f32 %v253, %v147
  %v262 = vmul.f32 %v256, %v147
  %v263 = vmul.f32 %v259, %v147
  %v264 = vadd.f32 %v260, 1e-05
  %v265 = vadd.f32 %v261, 1e-05
  %v266 = vadd.f32 %v262, 1e-05
  %v267 = vadd.f32 %v263, 1e-05
  %v268 = vrsqrt.pop %v264
  %v269 = vrsqrt.pop %v265
  %v270 = vrsqrt.pop %v266
  %v271 = vrsqrt.pop %v267
  %v272 = vmul.f32 %v240, %v268
  %v273 = vmul.f32 %v241, %v269
  %v274 = vmul.f32 %v242, %v270
  %v275 = vmul.f32 %v243, %v271
  %v277 = vlaneseq
  %v278 = vshrl.u32 %v277, 7
  %v279 = vsub.s32 0, %v278
  %v280 = vrot.slane %v208, %v279
  %v282 = vmul.f32 %v272, %v280
  %v283 = vmul.f32 %v273, %v280
  %v284 = vmul.f32 %v274, %v280
  %v285 = vmul.f32 %v275, %v280
  %v287 = vlaneseq
  %v288 = vshrl.u32 %v287, 7
  %v289 = vsub.s32 0, %v288
  %v290 = vrot.slane %v209, %v289
  %v292 = vadd.f32 %v282, %v290
  %v293 = vadd.f32 %v283, %v290
  %v294 = vadd.f32 %v284, %v290
  %v295 = vadd.f32 %v285, %v290
  %v296 = vpack.c.bf16 %v293, %v292
  %v297 = vpack.c.bf16 %v295, %v294
  %v299 = vlaneseq
  %v300 = vshrl.u32 %v299, 7
  %v301 = vsub.s32 0, %v300
  %v302 = vrot.slane %v214, %v301
  %v308 = vunpack.c.l.b16 %v210
  %v309 = vunpack.c.l.b16 %v211
  %v310 = vunpack.c.l.b16 %v212
  %v311 = vunpack.c.l.b16 %v213
  %v312 = vpack.c.b16 %v309, %v308
  %v313 = vpack.c.b16 %v311, %v310
  %v317 = vsel %vm134, %v296, 0
  %v320 = vsel %vm134, %v297, 0
  %322 = vmatprep.subr.bf16.mxu0 0
  %323 = vmatpush1.bf16.msra.mxu0 0
  %324 = vmatprep.subr.bf16.mxu0 0
  %325 = vmatpush1.bf16.msra.mxu0 0
  %326 = vmatprep.subr.bf16.mxu0 0
  %327 = vmatpush1.bf16.msra.mxu0 0
  %328 = vmatprep.subr.bf16.mxu0 0
  %329 = vmatpush1.bf16.msra.mxu0 0
  %330 = vmatprep.subr.bf16.mxu0 0
  %331 = vmatpush1.bf16.msra.mxu0 0
  %332 = vmatprep.subr.bf16.mxu0 0
  %333 = vmatpush1.bf16.msra.mxu0 0
  %334 = vmatprep.subr.bf16.mxu0 0
  %335 = vmatpush1.bf16.msra.mxu0 %v313
  %336 = vmatprep.subr.bf16.mxu0 0
  %337 = vmatpush1.bf16.msra.mxu0 %v312
  %338 = vmatprep.subr.bf16.mxu0 0
  %339 = vmatpush2.bf16.msra.mxu0 0
  %340 = vmatprep.subr.bf16.mxu0 0
  %341 = vmatpush2.bf16.msra.mxu0 0
  %342 = vmatprep.subr.bf16.mxu0 0
  %343 = vmatpush2.bf16.msra.mxu0 0
  %344 = vmatprep.subr.bf16.mxu0 0
  %345 = vmatpush2.bf16.msra.mxu0 0
  %346 = vmatprep.subr.bf16.mxu0 0
  %347 = vmatpush2.bf16.msra.mxu0 0
  %348 = vmatprep.subr.bf16.mxu0 0
  %349 = vmatpush2.bf16.msra.mxu0 0
  %350 = vmatprep.subr.bf16.mxu0 0
  %351 = vmatpush2.bf16.msra.mxu0 0
  %352 = vmatprep.subr.bf16.mxu0 0
  %353 = vmatpush2.bf16.msra.mxu0 0
  %354 = vmatprep.mubr.bf16.mxu0 0
  %355 = vmatmul.mubr.bf16.gmra.mxu0 %v317
  %v356 = vpop.f32.mrf.mxu0
  %v357 = vadd.f32 %v302, %v356
  %v358 = vpop.f32.mrf.mxu0
  %v359 = vpop.f32.mrf.mxu0
  %v360 = vadd.f32 %v302, %v359
  %v361 = vpop.f32.mrf.mxu0
  %362 = vmatprep.mubr.bf16.mxu0 0
  %363 = vmatmul.mubr.bf16.gmra.mxu0 %v320
  %v364 = vpop.f32.mrf.mxu0
  %v365 = vadd.f32 %v302, %v364
  %v366 = vpop.f32.mrf.mxu0
  %v367 = vpop.f32.mrf.mxu0
  %v368 = vadd.f32 %v302, %v367
  %v369 = vpop.f32.mrf.mxu0
  %370 = vdwg.mxu0
  %v371 = vxor.u32 %v357, 2147483648
  %v372 = vxor.u32 %v360, 2147483648
  %v373 = vxor.u32 %v365, 2147483648
  %v374 = vxor.u32 %v368, 2147483648
  %v375 = vmul.f32 %v371, 1.442695
  %v376 = vpow.pop %v375
  %v377 = vmul.f32 %v372, 1.442695
  %v378 = vpow.pop %v377
  %v379 = vmul.f32 %v373, 1.442695
  %v380 = vpow.pop %v379
  %v381 = vmul.f32 %v374, 1.442695
  %v382 = vpow.pop %v381
  %v383 = vadd.f32 %v376, 1.0
  %v384 = vadd.f32 %v378, 1.0
  %v385 = vadd.f32 %v380, 1.0
  %v386 = vadd.f32 %v382, 1.0
  %v387 = vrcp.pop %v383
  %v388 = vmul.f32 1.0, %v387
  %v389 = vrcp.pop %v384
  %v390 = vmul.f32 1.0, %v389
  %v391 = vrcp.pop %v385
  %v392 = vmul.f32 1.0, %v391
  %v393 = vrcp.pop %v386
  %v394 = vmul.f32 1.0, %v393
  %v395 = vmul.f32 %v357, %v388
  %v396 = vmul.f32 %v360, %v390
  %v397 = vmul.f32 %v365, %v392
  %v398 = vmul.f32 %v368, %v394
  %403 = vrot.lane.b32.xlu0 %v357, 64
  %v404 = vpop.permute.xlu0 %403
  %405 = vrot.lane.b32.xlu0 %v360, 64
  %v406 = vpop.permute.xlu0 %405
  %407 = vrot.lane.b32.xlu0 %v365, 64
  %v408 = vpop.permute.xlu0 %407
  %409 = vrot.lane.b32.xlu0 %v368, 64
  %v410 = vpop.permute.xlu0 %409
  %v415 = vmul.f32 %v395, %v404
  %v416 = vmul.f32 %v396, %v406
  %v417 = vmul.f32 %v397, %v408
  %v418 = vmul.f32 %v398, %v410
  %v419 = vpack.c.bf16 %v416, %v415
  %v420 = vpack.c.bf16 %v418, %v417
  %v422 = vlaneseq
  %v423 = vshrl.u32 %v422, 7
  %v424 = vsub.s32 0, %v423
  %v425 = vrot.slane %v223, %v424
  %v435 = vunpack.c.l.b16 %v215
  %v436 = vunpack.c.l.b16 %v216
  %v437 = vunpack.c.l.b16 %v217
  %v438 = vunpack.c.l.b16 %v218
  %v439 = vunpack.c.l.b16 %v219
  %v440 = vunpack.c.l.b16 %v220
  %v441 = vunpack.c.l.b16 %v221
  %v442 = vunpack.c.l.b16 %v222
  %v443 = vpack.c.b16 %v436, %v435
  %v444 = vpack.c.b16 %v438, %v437
  %v445 = vpack.c.b16 %v440, %v439
  %v446 = vpack.c.b16 %v442, %v441
  %vm451 = vcmask 523264
  %v453 = vsel %vm451, %v419, 0
  %v456 = vsel %vm451, %v420, 0
  %458 = vmatprep.subr.bf16.mxu0 0
  %459 = vmatpush1.bf16.msra.mxu0 0
  %460 = vmatprep.subr.bf16.mxu0 0
  %461 = vmatpush1.bf16.msra.mxu0 0
  %462 = vmatprep.subr.bf16.mxu0 0
  %463 = vmatpush1.bf16.msra.mxu0 0
  %464 = vmatprep.subr.bf16.mxu0 0
  %465 = vmatpush1.bf16.msra.mxu0 0
  %466 = vmatprep.subr.bf16.mxu0 0
  %467 = vmatpush1.bf16.msra.mxu0 %v446
  %468 = vmatprep.subr.bf16.mxu0 0
  %469 = vmatpush1.bf16.msra.mxu0 %v445
  %470 = vmatprep.subr.bf16.mxu0 0
  %471 = vmatpush1.bf16.msra.mxu0 %v444
  %472 = vmatprep.subr.bf16.mxu0 0
  %473 = vmatpush1.bf16.msra.mxu0 %v443
  %474 = vmatprep.subr.bf16.mxu0 0
  %475 = vmatpush2.bf16.msra.mxu0 0
  %476 = vmatprep.subr.bf16.mxu0 0
  %477 = vmatpush2.bf16.msra.mxu0 0
  %478 = vmatprep.subr.bf16.mxu0 0
  %479 = vmatpush2.bf16.msra.mxu0 0
  %480 = vmatprep.subr.bf16.mxu0 0
  %481 = vmatpush2.bf16.msra.mxu0 0
  %482 = vmatprep.subr.bf16.mxu0 0
  %483 = vmatpush2.bf16.msra.mxu0 0
  %484 = vmatprep.subr.bf16.mxu0 0
  %485 = vmatpush2.bf16.msra.mxu0 0
  %486 = vmatprep.subr.bf16.mxu0 0
  %487 = vmatpush2.bf16.msra.mxu0 0
  %488 = vmatprep.subr.bf16.mxu0 0
  %489 = vmatpush2.bf16.msra.mxu0 0
  %490 = vmatprep.mubr.bf16.mxu0 0
  %491 = vmatmul.mubr.bf16.gmra.mxu0 %v453
  %v492 = vpop.f32.mrf.mxu0
  %v493 = vadd.f32 %v425, %v492
  %v494 = vpop.f32.mrf.mxu0
  %v495 = vpop.f32.mrf.mxu0
  %v496 = vadd.f32 %v425, %v495
  %v497 = vpop.f32.mrf.mxu0
  %498 = vmatprep.mubr.bf16.mxu0 0
  %499 = vmatmul.mubr.bf16.gmra.mxu0 %v456
  %v500 = vpop.f32.mrf.mxu0
  %v501 = vadd.f32 %v425, %v500
  %v502 = vpop.f32.mrf.mxu0
  %v503 = vpop.f32.mrf.mxu0
  %v504 = vadd.f32 %v425, %v503
  %v505 = vpop.f32.mrf.mxu0
  %506 = vdwg.mxu0
  %v507 = vadd.f32 %v204, %v493
  %v508 = vadd.f32 %v205, %v496
  %v509 = vadd.f32 %v206, %v501
  %v510 = vadd.f32 %v207, %v504
  %s511 = scalar_lea.vmem %s5, 1
  %v512 = vld [vmem:[%s511] sm:$0x1]
  %s513 = scalar_lea.vmem %s6, 1
  %v514 = vld [vmem:[%s513] sm:$0x1]
  %s515 = scalar_lea.vmem %s7, 16
  %v516 = vld [vmem:[%s515] sm:$0xf]
  %v517 = vld [vmem:[%s515 + $0x4] sm:$0xf]
  %v518 = vld [vmem:[%s515 + $0x8] sm:$0xf]
  %v519 = vld [vmem:[%s515 + $0xc] sm:$0xf]
  %s520 = scalar_lea.vmem %s8, 1
  %v521 = vld [vmem:[%s520] sm:$0x1]
  %s522 = scalar_lea.vmem %s9, 32
  %v523 = vld [vmem:[%s522] sm:$0xf]
  %v524 = vld [vmem:[%s522 + $0x4] sm:$0xf]
  %v525 = vld [vmem:[%s522 + $0x8] sm:$0xf]
  %v526 = vld [vmem:[%s522 + $0xc] sm:$0xf]
  %v527 = vld [vmem:[%s522 + $0x10] sm:$0xf]
  %v528 = vld [vmem:[%s522 + $0x14] sm:$0xf]
  %v529 = vld [vmem:[%s522 + $0x18] sm:$0xf]
  %v530 = vld [vmem:[%s522 + $0x1c] sm:$0xf]
  %s531 = scalar_lea.vmem %s10, 1
  %v532 = vld [vmem:[%s531] sm:$0x1]
  %v533 = vsel %vm134, %v507, 0.0
  %534 = vadd.xlane.f32.xlu0 %v533
  %v535 = vpop.xlane.xlu0 %534
  %v536 = vsel %vm134, %v508, 0.0
  %537 = vadd.xlane.f32.xlu0 %v536
  %v538 = vpop.xlane.xlu0 %537
  %v539 = vsel %vm134, %v509, 0.0
  %540 = vadd.xlane.f32.xlu0 %v539
  %v541 = vpop.xlane.xlu0 %540
  %v542 = vsel %vm134, %v510, 0.0
  %543 = vadd.xlane.f32.xlu0 %v542
  %v544 = vpop.xlane.xlu0 %543
  %v545 = vmul.f32 %v535, %v147
  %v546 = vmul.f32 %v538, %v147
  %v547 = vmul.f32 %v541, %v147
  %v548 = vmul.f32 %v544, %v147
  %v549 = vsub.f32 %v507, %v545
  %v550 = vsub.f32 %v508, %v546
  %v551 = vsub.f32 %v509, %v547
  %v552 = vsub.f32 %v510, %v548
  %v553 = vmul.f32 %v549, %v549
  %v554 = vmul.f32 %v550, %v550
  %v555 = vmul.f32 %v551, %v551
  %v556 = vmul.f32 %v552, %v552
  %v557 = vsel %vm134, %v553, 0.0
  %558 = vadd.xlane.f32.xlu0 %v557
  %v559 = vpop.xlane.xlu0 %558
  %v560 = vsel %vm134, %v554, 0.0
  %561 = vadd.xlane.f32.xlu0 %v560
  %v562 = vpop.xlane.xlu0 %561
  %v563 = vsel %vm134, %v555, 0.0
  %564 = vadd.xlane.f32.xlu0 %v563
  %v565 = vpop.xlane.xlu0 %564
  %v566 = vsel %vm134, %v556, 0.0
  %567 = vadd.xlane.f32.xlu0 %v566
  %v568 = vpop.xlane.xlu0 %567
  %v569 = vmul.f32 %v559, %v147
  %v570 = vmul.f32 %v562, %v147
  %v571 = vmul.f32 %v565, %v147
  %v572 = vmul.f32 %v568, %v147
  %v573 = vadd.f32 %v569, 1e-05
  %v574 = vadd.f32 %v570, 1e-05
  %v575 = vadd.f32 %v571, 1e-05
  %v576 = vadd.f32 %v572, 1e-05
  %v577 = vrsqrt.pop %v573
  %v578 = vrsqrt.pop %v574
  %v579 = vrsqrt.pop %v575
  %v580 = vrsqrt.pop %v576
  %v581 = vmul.f32 %v549, %v577
  %v582 = vmul.f32 %v550, %v578
  %v583 = vmul.f32 %v551, %v579
  %v584 = vmul.f32 %v552, %v580
  %v586 = vlaneseq
  %v587 = vshrl.u32 %v586, 7
  %v588 = vsub.s32 0, %v587
  %v589 = vrot.slane %v512, %v588
  %v591 = vmul.f32 %v581, %v589
  %v592 = vmul.f32 %v582, %v589
  %v593 = vmul.f32 %v583, %v589
  %v594 = vmul.f32 %v584, %v589
  %v596 = vlaneseq
  %v597 = vshrl.u32 %v596, 7
  %v598 = vsub.s32 0, %v597
  %v599 = vrot.slane %v514, %v598
  %v601 = vadd.f32 %v591, %v599
  %v602 = vadd.f32 %v592, %v599
  %v603 = vadd.f32 %v593, %v599
  %v604 = vadd.f32 %v594, %v599
  %v605 = vpack.c.bf16 %v602, %v601
  %v606 = vpack.c.bf16 %v604, %v603
  %v608 = vlaneseq
  %v609 = vshrl.u32 %v608, 7
  %v610 = vsub.s32 0, %v609
  %v611 = vrot.slane %v521, %v610
  %v617 = vunpack.c.l.b16 %v516
  %v618 = vunpack.c.l.b16 %v517
  %v619 = vunpack.c.l.b16 %v518
  %v620 = vunpack.c.l.b16 %v519
  %v621 = vpack.c.b16 %v618, %v617
  %v622 = vpack.c.b16 %v620, %v619
  %v626 = vsel %vm134, %v605, 0
  %v629 = vsel %vm134, %v606, 0
  %631 = vmatprep.subr.bf16.mxu0 0
  %632 = vmatpush1.bf16.msra.mxu0 0
  %633 = vmatprep.subr.bf16.mxu0 0
  %634 = vmatpush1.bf16.msra.mxu0 0
  %635 = vmatprep.subr.bf16.mxu0 0
  %636 = vmatpush1.bf16.msra.mxu0 0
  %637 = vmatprep.subr.bf16.mxu0 0
  %638 = vmatpush1.bf16.msra.mxu0 0
  %639 = vmatprep.subr.bf16.mxu0 0
  %640 = vmatpush1.bf16.msra.mxu0 0
  %641 = vmatprep.subr.bf16.mxu0 0
  %642 = vmatpush1.bf16.msra.mxu0 0
  %643 = vmatprep.subr.bf16.mxu0 0
  %644 = vmatpush1.bf16.msra.mxu0 %v622
  %645 = vmatprep.subr.bf16.mxu0 0
  %646 = vmatpush1.bf16.msra.mxu0 %v621
  %647 = vmatprep.subr.bf16.mxu0 0
  %648 = vmatpush2.bf16.msra.mxu0 0
  %649 = vmatprep.subr.bf16.mxu0 0
  %650 = vmatpush2.bf16.msra.mxu0 0
  %651 = vmatprep.subr.bf16.mxu0 0
  %652 = vmatpush2.bf16.msra.mxu0 0
  %653 = vmatprep.subr.bf16.mxu0 0
  %654 = vmatpush2.bf16.msra.mxu0 0
  %655 = vmatprep.subr.bf16.mxu0 0
  %656 = vmatpush2.bf16.msra.mxu0 0
  %657 = vmatprep.subr.bf16.mxu0 0
  %658 = vmatpush2.bf16.msra.mxu0 0
  %659 = vmatprep.subr.bf16.mxu0 0
  %660 = vmatpush2.bf16.msra.mxu0 0
  %661 = vmatprep.subr.bf16.mxu0 0
  %662 = vmatpush2.bf16.msra.mxu0 0
  %663 = vmatprep.mubr.bf16.mxu0 0
  %664 = vmatmul.mubr.bf16.gmra.mxu0 %v626
  %v665 = vpop.f32.mrf.mxu0
  %v666 = vadd.f32 %v611, %v665
  %v667 = vpop.f32.mrf.mxu0
  %v668 = vpop.f32.mrf.mxu0
  %v669 = vadd.f32 %v611, %v668
  %v670 = vpop.f32.mrf.mxu0
  %671 = vmatprep.mubr.bf16.mxu0 0
  %672 = vmatmul.mubr.bf16.gmra.mxu0 %v629
  %v673 = vpop.f32.mrf.mxu0
  %v674 = vadd.f32 %v611, %v673
  %v675 = vpop.f32.mrf.mxu0
  %v676 = vpop.f32.mrf.mxu0
  %v677 = vadd.f32 %v611, %v676
  %v678 = vpop.f32.mrf.mxu0
  %679 = vdwg.mxu0
  %v680 = vxor.u32 %v666, 2147483648
  %v681 = vxor.u32 %v669, 2147483648
  %v682 = vxor.u32 %v674, 2147483648
  %v683 = vxor.u32 %v677, 2147483648
  %v684 = vmul.f32 %v680, 1.442695
  %v685 = vpow.pop %v684
  %v686 = vmul.f32 %v681, 1.442695
  %v687 = vpow.pop %v686
  %v688 = vmul.f32 %v682, 1.442695
  %v689 = vpow.pop %v688
  %v690 = vmul.f32 %v683, 1.442695
  %v691 = vpow.pop %v690
  %v692 = vadd.f32 %v685, 1.0
  %v693 = vadd.f32 %v687, 1.0
  %v694 = vadd.f32 %v689, 1.0
  %v695 = vadd.f32 %v691, 1.0
  %v696 = vrcp.pop %v692
  %v697 = vmul.f32 1.0, %v696
  %v698 = vrcp.pop %v693
  %v699 = vmul.f32 1.0, %v698
  %v700 = vrcp.pop %v694
  %v701 = vmul.f32 1.0, %v700
  %v702 = vrcp.pop %v695
  %v703 = vmul.f32 1.0, %v702
  %v704 = vmul.f32 %v666, %v697
  %v705 = vmul.f32 %v669, %v699
  %v706 = vmul.f32 %v674, %v701
  %v707 = vmul.f32 %v677, %v703
  %712 = vrot.lane.b32.xlu0 %v666, 64
  %v713 = vpop.permute.xlu0 %712
  %714 = vrot.lane.b32.xlu0 %v669, 64
  %v715 = vpop.permute.xlu0 %714
  %716 = vrot.lane.b32.xlu0 %v674, 64
  %v717 = vpop.permute.xlu0 %716
  %718 = vrot.lane.b32.xlu0 %v677, 64
  %v719 = vpop.permute.xlu0 %718
  %v724 = vmul.f32 %v704, %v713
  %v725 = vmul.f32 %v705, %v715
  %v726 = vmul.f32 %v706, %v717
  %v727 = vmul.f32 %v707, %v719
  %v728 = vpack.c.bf16 %v725, %v724
  %v729 = vpack.c.bf16 %v727, %v726
  %v731 = vlaneseq
  %v732 = vshrl.u32 %v731, 7
  %v733 = vsub.s32 0, %v732
  %v734 = vrot.slane %v532, %v733
  %v744 = vunpack.c.l.b16 %v523
  %v745 = vunpack.c.l.b16 %v524
  %v746 = vunpack.c.l.b16 %v525
  %v747 = vunpack.c.l.b16 %v526
  %v748 = vunpack.c.l.b16 %v527
  %v749 = vunpack.c.l.b16 %v528
  %v750 = vunpack.c.l.b16 %v529
  %v751 = vunpack.c.l.b16 %v530
  %v752 = vpack.c.b16 %v745, %v744
  %v753 = vpack.c.b16 %v747, %v746
  %v754 = vpack.c.b16 %v749, %v748
  %v755 = vpack.c.b16 %v751, %v750
  %v761 = vsel %vm451, %v728, 0
  %v764 = vsel %vm451, %v729, 0
  %766 = vmatprep.subr.bf16.mxu0 0
  %767 = vmatpush1.bf16.msra.mxu0 0
  %768 = vmatprep.subr.bf16.mxu0 0
  %769 = vmatpush1.bf16.msra.mxu0 0
  %770 = vmatprep.subr.bf16.mxu0 0
  %771 = vmatpush1.bf16.msra.mxu0 0
  %772 = vmatprep.subr.bf16.mxu0 0
  %773 = vmatpush1.bf16.msra.mxu0 0
  %774 = vmatprep.subr.bf16.mxu0 0
  %775 = vmatpush1.bf16.msra.mxu0 %v755
  %776 = vmatprep.subr.bf16.mxu0 0
  %777 = vmatpush1.bf16.msra.mxu0 %v754
  %778 = vmatprep.subr.bf16.mxu0 0
  %779 = vmatpush1.bf16.msra.mxu0 %v753
  %780 = vmatprep.subr.bf16.mxu0 0
  %781 = vmatpush1.bf16.msra.mxu0 %v752
  %782 = vmatprep.subr.bf16.mxu0 0
  %783 = vmatpush2.bf16.msra.mxu0 0
  %784 = vmatprep.subr.bf16.mxu0 0
  %785 = vmatpush2.bf16.msra.mxu0 0
  %786 = vmatprep.subr.bf16.mxu0 0
  %787 = vmatpush2.bf16.msra.mxu0 0
  %788 = vmatprep.subr.bf16.mxu0 0
  %789 = vmatpush2.bf16.msra.mxu0 0
  %790 = vmatprep.subr.bf16.mxu0 0
  %791 = vmatpush2.bf16.msra.mxu0 0
  %792 = vmatprep.subr.bf16.mxu0 0
  %793 = vmatpush2.bf16.msra.mxu0 0
  %794 = vmatprep.subr.bf16.mxu0 0
  %795 = vmatpush2.bf16.msra.mxu0 0
  %796 = vmatprep.subr.bf16.mxu0 0
  %797 = vmatpush2.bf16.msra.mxu0 0
  %798 = vmatprep.mubr.bf16.mxu0 0
  %799 = vmatmul.mubr.bf16.gmra.mxu0 %v761
  %v800 = vpop.f32.mrf.mxu0
  %v801 = vadd.f32 %v734, %v800
  %v802 = vpop.f32.mrf.mxu0
  %v803 = vpop.f32.mrf.mxu0
  %v804 = vadd.f32 %v734, %v803
  %v805 = vpop.f32.mrf.mxu0
  %806 = vmatprep.mubr.bf16.mxu0 0
  %807 = vmatmul.mubr.bf16.gmra.mxu0 %v764
  %v808 = vpop.f32.mrf.mxu0
  %v809 = vadd.f32 %v734, %v808
  %v810 = vpop.f32.mrf.mxu0
  %v811 = vpop.f32.mrf.mxu0
  %v812 = vadd.f32 %v734, %v811
  %v813 = vpop.f32.mrf.mxu0
  %814 = vdwg.mxu0
  %v815 = vadd.f32 %v507, %v801
  %v816 = vadd.f32 %v508, %v804
  %v817 = vadd.f32 %v509, %v809
  %v818 = vadd.f32 %v510, %v812
  %819 = vst.msk [vmem:[%s11] sm:$0xff] %vm134, %v815
  %820 = vst.msk [vmem:[%s11 + $0x8] sm:$0xff] %vm134, %v816
  %821 = vst.msk [vmem:[%s11 + $0x10] sm:$0xff] %vm134, %v817
  %822 = vst.msk [vmem:[%s11 + $0x18] sm:$0xff] %vm134, %v818
  // Predicated region
  $region46: #{lmfnet_forward.3} parent=0 // pred_check
    _
  $region47: #{lmfnet_forward.3} parent=0 // pred_check_branch
    %824 = sbr.rel (0) target = $region49
  $region48: #{lmfnet_forward.3} parent=0 // pred_region
    _
  $region49: #{lmfnet_forward.3} parent=0 // pred_fallthru
    _
  // Predicated region
  $region50: #{lmfnet_forward.3} parent=0 // pred_check
    _
  $region51: #{lmfnet_forward.3} parent=0 // pred_check_branch
    %826 = sbr.rel (0) target = $region53
  $region52: #{lmfnet_forward.3} parent=0 // pred_region
    _
  $region53: #{lmfnet_forward.3} parent=0 // pred_fallthru
    _

// kernel: lmfnet_forward.4
$region0: #{lmfnet_forward.4}
  #allocation0 [shape = 'u32[]', space=smem, size = 0x4, offset = 0x4, fixed_abs, tag = 'smem constant byte address 0x4 - core index']
  #allocation1 [shape = 'u32[144,128]{1,0:T(1,128)}', space=vmem, size = 0x12000, scoped, tag = 'internal scratch']
  %s0 = inlined_call_operand.vmem [shape: f32[8,128], index: 0, kind: input, shape index: {}]
  %s1 = inlined_call_operand.vmem [shape: bf16[128,64], index: 1, kind: input, shape index: {}]
  %s2 = inlined_call_operand.vmem [shape: f32[1,64], index: 2, kind: input, shape index: {}]
  %s3 = inlined_call_operand.vmem [shape: f32[1,64], index: 3, kind: input, shape index: {}]
  %s4 = inlined_call_operand.vmem [shape: f32[1,64], index: 4, kind: input, shape index: {}]
  %s5 = inlined_call_operand.vmem [shape: f32[2,1,64], index: 5, kind: input, shape index: {}]
  %s6 = inlined_call_operand.vmem [shape: f32[2,1,64], index: 6, kind: input, shape index: {}]
  %s7 = inlined_call_operand.vmem [shape: bf16[2,64,256], index: 7, kind: input, shape index: {}]
  %s8 = inlined_call_operand.vmem [shape: f32[2,1,256], index: 8, kind: input, shape index: {}]
  %s9 = inlined_call_operand.vmem [shape: bf16[2,128,64], index: 9, kind: input, shape index: {}]
  %s10 = inlined_call_operand.vmem [shape: f32[2,1,64], index: 10, kind: input, shape index: {}]
  %s11 = inlined_call_operand.vmem [shape: bf16[64,128], index: 11, kind: input, shape index: {}]
  %s12 = inlined_call_operand.vmem [shape: f32[1,128], index: 12, kind: input, shape index: {}]
  %s13 = inlined_call_operand.vmem [shape: f32[8,128], index: 13, kind: output, shape index: {}]
  %s14 = sld [smem:[#allocation0]]
  $region62: #{lmfnet_forward.4} parent=0
    _
  %s16 = ssub.s32 1, %s14
  %s17 = scalar_select 0, %s16, %s14
  // Predicated region
  $region2: #{lmfnet_forward.4} parent=0 // pred_check
    _
  $region3: #{lmfnet_forward.4} parent=0 // pred_check_branch
    %19 = sbr.rel (0) target = $region5
  $region4: #{lmfnet_forward.4} parent=0 // pred_region
    _
  $region5: #{lmfnet_forward.4} parent=0 // pred_fallthru
    _
  // Predicated region
  $region6: #{lmfnet_forward.4} parent=0 // pred_check
    _
  $region7: #{lmfnet_forward.4} parent=0 // pred_check_branch
    %21 = sbr.rel (0) target = $region9
  $region8: #{lmfnet_forward.4} parent=0 // pred_region
    _
  $region9: #{lmfnet_forward.4} parent=0 // pred_fallthru
    _
  // Predicated region
  $region10: #{lmfnet_forward.4} parent=0 // pred_check
    _
  $region11: #{lmfnet_forward.4} parent=0 // pred_check_branch
    %23 = sbr.rel (0) target = $region13
  $region12: #{lmfnet_forward.4} parent=0 // pred_region
    _
  $region13: #{lmfnet_forward.4} parent=0 // pred_fallthru
    _
  // Predicated region
  $region14: #{lmfnet_forward.4} parent=0 // pred_check
    _
  $region15: #{lmfnet_forward.4} parent=0 // pred_check_branch
    %25 = sbr.rel (0) target = $region17
  $region16: #{lmfnet_forward.4} parent=0 // pred_region
    _
  $region17: #{lmfnet_forward.4} parent=0 // pred_fallthru
    _
  // Predicated region
  $region18: #{lmfnet_forward.4} parent=0 // pred_check
    _
  $region19: #{lmfnet_forward.4} parent=0 // pred_check_branch
    %27 = sbr.rel (0) target = $region21
  $region20: #{lmfnet_forward.4} parent=0 // pred_region
    _
  $region21: #{lmfnet_forward.4} parent=0 // pred_fallthru
    _
  // Predicated region
  $region22: #{lmfnet_forward.4} parent=0 // pred_check
    _
  $region23: #{lmfnet_forward.4} parent=0 // pred_check_branch
    %29 = sbr.rel (0) target = $region25
  $region24: #{lmfnet_forward.4} parent=0 // pred_region
    _
  $region25: #{lmfnet_forward.4} parent=0 // pred_fallthru
    _
  // Predicated region
  $region26: #{lmfnet_forward.4} parent=0 // pred_check
    _
  $region27: #{lmfnet_forward.4} parent=0 // pred_check_branch
    %31 = sbr.rel (0) target = $region29
  $region28: #{lmfnet_forward.4} parent=0 // pred_region
    _
  $region29: #{lmfnet_forward.4} parent=0 // pred_fallthru
    _
  // Predicated region
  $region30: #{lmfnet_forward.4} parent=0 // pred_check
    _
  $region31: #{lmfnet_forward.4} parent=0 // pred_check_branch
    %33 = sbr.rel (0) target = $region33
  $region32: #{lmfnet_forward.4} parent=0 // pred_region
    _
  $region33: #{lmfnet_forward.4} parent=0 // pred_fallthru
    _
  // Predicated region
  $region34: #{lmfnet_forward.4} parent=0 // pred_check
    _
  $region35: #{lmfnet_forward.4} parent=0 // pred_check_branch
    %35 = sbr.rel (0) target = $region37
  $region36: #{lmfnet_forward.4} parent=0 // pred_region
    _
  $region37: #{lmfnet_forward.4} parent=0 // pred_fallthru
    _
  // Predicated region
  $region38: #{lmfnet_forward.4} parent=0 // pred_check
    _
  $region39: #{lmfnet_forward.4} parent=0 // pred_check_branch
    %37 = sbr.rel (0) target = $region41
  $region40: #{lmfnet_forward.4} parent=0 // pred_region
    _
  $region41: #{lmfnet_forward.4} parent=0 // pred_fallthru
    _
  // Predicated region
  $region42: #{lmfnet_forward.4} parent=0 // pred_check
    _
  $region43: #{lmfnet_forward.4} parent=0 // pred_check_branch
    %39 = sbr.rel (0) target = $region45
  $region44: #{lmfnet_forward.4} parent=0 // pred_region
    _
  $region45: #{lmfnet_forward.4} parent=0 // pred_fallthru
    _
  // Predicated region
  $region46: #{lmfnet_forward.4} parent=0 // pred_check
    _
  $region47: #{lmfnet_forward.4} parent=0 // pred_check_branch
    %41 = sbr.rel (0) target = $region49
  $region48: #{lmfnet_forward.4} parent=0 // pred_region
    _
  $region49: #{lmfnet_forward.4} parent=0 // pred_fallthru
    _
  // Predicated region
  $region50: #{lmfnet_forward.4} parent=0 // pred_check
    _
  $region51: #{lmfnet_forward.4} parent=0 // pred_check_branch
    %43 = sbr.rel (0) target = $region53
  $region52: #{lmfnet_forward.4} parent=0 // pred_region
    _
  $region53: #{lmfnet_forward.4} parent=0 // pred_fallthru
    _
  %v45 = vld [vmem:[%s0] sm:$0xff]
  %v46 = vpack.c.bf16 %v45, %v45
  %v47 = vld [vmem:[%s1] sm:$0xf]
  %v48 = vld [vmem:[%s1 + $0x4] sm:$0xf]
  %v49 = vld [vmem:[%s1 + $0x8] sm:$0xf]
  %v50 = vld [vmem:[%s1 + $0xc] sm:$0xf]
  %v51 = vld [vmem:[%s1 + $0x10] sm:$0xf]
  %v52 = vld [vmem:[%s1 + $0x14] sm:$0xf]
  %v53 = vld [vmem:[%s1 + $0x18] sm:$0xf]
  %v54 = vld [vmem:[%s1 + $0x1c] sm:$0xf]
  %v55 = vld [vmem:[%s1 + $0x20] sm:$0xf]
  %v56 = vld [vmem:[%s1 + $0x24] sm:$0xf]
  %v57 = vld [vmem:[%s1 + $0x28] sm:$0xf]
  %v58 = vld [vmem:[%s1 + $0x2c] sm:$0xf]
  %v59 = vld [vmem:[%s1 + $0x30] sm:$0xf]
  %v60 = vld [vmem:[%s1 + $0x34] sm:$0xf]
  %v61 = vld [vmem:[%s1 + $0x38] sm:$0xf]
  %v62 = vld [vmem:[%s1 + $0x3c] sm:$0xf]
  %v63 = vld [vmem:[%s2] sm:$0x1]
  %v65 = vlaneseq
  %v66 = vshrl.u32 %v65, 7
  %v67 = vsub.s32 0, %v66
  %v68 = vrot.slane %v63, %v67
  %v86 = vunpack.c.l.b16 %v47
  %v87 = vunpack.c.l.b16 %v48
  %v88 = vunpack.c.l.b16 %v49
  %v89 = vunpack.c.l.b16 %v50
  %v90 = vunpack.c.l.b16 %v51
  %v91 = vunpack.c.l.b16 %v52
  %v92 = vunpack.c.l.b16 %v53
  %v93 = vunpack.c.l.b16 %v54
  %v94 = vunpack.c.l.b16 %v55
  %v95 = vunpack.c.l.b16 %v56
  %v96 = vunpack.c.l.b16 %v57
  %v97 = vunpack.c.l.b16 %v58
  %v98 = vunpack.c.l.b16 %v59
  %v99 = vunpack.c.l.b16 %v60
  %v100 = vunpack.c.l.b16 %v61
  %v101 = vunpack.c.l.b16 %v62
  %v102 = vpack.c.b16 %v87, %v86
  %v103 = vpack.c.b16 %v89, %v88
  %v104 = vpack.c.b16 %v91, %v90
  %v105 = vpack.c.b16 %v93, %v92
  %v106 = vpack.c.b16 %v95, %v94
  %v107 = vpack.c.b16 %v97, %v96
  %v108 = vpack.c.b16 %v99, %v98
  %v109 = vpack.c.b16 %v101, %v100
  %118 = vmatprep.subr.bf16.mxu0 0
  %119 = vmatpush1.bf16.msra.mxu0 %v109
  %120 = vmatprep.subr.bf16.mxu0 0
  %121 = vmatpush1.bf16.msra.mxu0 %v108
  %122 = vmatprep.subr.bf16.mxu0 0
  %123 = vmatpush1.bf16.msra.mxu0 %v107
  %124 = vmatprep.subr.bf16.mxu0 0
  %125 = vmatpush1.bf16.msra.mxu0 %v106
  %126 = vmatprep.subr.bf16.mxu0 0
  %127 = vmatpush1.bf16.msra.mxu0 %v105
  %128 = vmatprep.subr.bf16.mxu0 0
  %129 = vmatpush1.bf16.msra.mxu0 %v104
  %130 = vmatprep.subr.bf16.mxu0 0
  %131 = vmatpush1.bf16.msra.mxu0 %v103
  %132 = vmatprep.subr.bf16.mxu0 0
  %133 = vmatpush1.bf16.msra.mxu0 %v102
  %134 = vmatprep.subr.bf16.mxu0 0
  %135 = vmatpush2.bf16.msra.mxu0 0
  %136 = vmatprep.subr.bf16.mxu0 0
  %137 = vmatpush2.bf16.msra.mxu0 0
  %138 = vmatprep.subr.bf16.mxu0 0
  %139 = vmatpush2.bf16.msra.mxu0 0
  %140 = vmatprep.subr.bf16.mxu0 0
  %141 = vmatpush2.bf16.msra.mxu0 0
  %142 = vmatprep.subr.bf16.mxu0 0
  %143 = vmatpush2.bf16.msra.mxu0 0
  %144 = vmatprep.subr.bf16.mxu0 0
  %145 = vmatpush2.bf16.msra.mxu0 0
  %146 = vmatprep.subr.bf16.mxu0 0
  %147 = vmatpush2.bf16.msra.mxu0 0
  %148 = vmatprep.subr.bf16.mxu0 0
  %149 = vmatpush2.bf16.msra.mxu0 0
  %150 = vmatprep.mubr.bf16.mxu0 0
  %151 = vmatmul.mubr.bf16.gmra.mxu0 %v46
  %v152 = vpop.f32.mrf.mxu0
  %v153 = vadd.f32 %v68, %v152
  %v154 = vpop.f32.mrf.mxu0
  %v155 = vpop.f32.mrf.mxu0
  %v156 = vpop.f32.mrf.mxu0
  %157 = vdwg.mxu0
  %v158 = vld [vmem:[%s3] sm:$0x1]
  %v159 = vld [vmem:[%s4] sm:$0x1]
  %vm160 = vcmask 523264
  %v161 = vsel %vm160, %v153, 0.0
  %162 = vadd.xlane.f32.xlu0 %v161
  %v163 = vpop.xlane.xlu0 %162
  %v164 = vrcp.pop 64.0
  %v165 = vmul.f32 %v163, %v164
  %v166 = vsub.f32 %v153, %v165
  %v167 = vmul.f32 %v166, %v166
  %v168 = vsel %vm160, %v167, 0.0
  %169 = vadd.xlane.f32.xlu0 %v168
  %v170 = vpop.xlane.xlu0 %169
  %v171 = vmul.f32 %v170, %v164
  %v172 = vadd.f32 %v171, 1e-05
  %v173 = vrsqrt.pop %v172
  %v174 = vmul.f32 %v166, %v173
  %v176 = vlaneseq
  %v177 = vshrl.u32 %v176, 7
  %v178 = vsub.s32 0, %v177
  %v179 = vrot.slane %v158, %v178
  %v181 = vmul.f32 %v174, %v179
  %v183 = vlaneseq
  %v184 = vshrl.u32 %v183, 7
  %v185 = vsub.s32 0, %v184
  %v186 = vrot.slane %v159, %v185
  %v188 = vadd.f32 %v181, %v186
  %v189 = vld [vmem:[%s5] sm:$0x1]
  %v190 = vld [vmem:[%s6] sm:$0x1]
  %v191 = vld [vmem:[%s7] sm:$0xff]
  %v192 = vld [vmem:[%s7 + $0x8] sm:$0xff]
  %v193 = vld [vmem:[%s7 + $0x10] sm:$0xff]
  %v194 = vld [vmem:[%s7 + $0x18] sm:$0xff]
  %v195 = vld [vmem:[%s7 + $0x20] sm:$0xff]
  %v196 = vld [vmem:[%s7 + $0x28] sm:$0xff]
  %v197 = vld [vmem:[%s7 + $0x30] sm:$0xff]
  %v198 = vld [vmem:[%s7 + $0x38] sm:$0xff]
  %v199 = vld [vmem:[%s8] sm:$0x3]
  %v200 = vld [vmem:[%s9] sm:$0xf]
  %v201 = vld [vmem:[%s9 + $0x4] sm:$0xf]
  %v202 = vld [vmem:[%s9 + $0x8] sm:$0xf]
  %v203 = vld [vmem:[%s9 + $0xc] sm:$0xf]
  %v204 = vld [vmem:[%s9 + $0x10] sm:$0xf]
  %v205 = vld [vmem:[%s9 + $0x14] sm:$0xf]
  %v206 = vld [vmem:[%s9 + $0x18] sm:$0xf]
  %v207 = vld [vmem:[%s9 + $0x1c] sm:$0xf]
  %v208 = vld [vmem:[%s9 + $0x20] sm:$0xf]
  %v209 = vld [vmem:[%s9 + $0x24] sm:$0xf]
  %v210 = vld [vmem:[%s9 + $0x28] sm:$0xf]
  %v211 = vld [vmem:[%s9 + $0x2c] sm:$0xf]
  %v212 = vld [vmem:[%s9 + $0x30] sm:$0xf]
  %v213 = vld [vmem:[%s9 + $0x34] sm:$0xf]
  %v214 = vld [vmem:[%s9 + $0x38] sm:$0xf]
  %v215 = vld [vmem:[%s9 + $0x3c] sm:$0xf]
  %v216 = vld [vmem:[%s10] sm:$0x1]
  %v217 = vsel %vm160, %v188, 0.0
  %218 = vadd.xlane.f32.xlu0 %v217
  %v219 = vpop.xlane.xlu0 %218
  %v220 = vmul.f32 %v219, %v164
  %v221 = vsub.f32 %v188, %v220
  %v222 = vmul.f32 %v221, %v221
  %v223 = vsel %vm160, %v222, 0.0
  %224 = vadd.xlane.f32.xlu0 %v223
  %v225 = vpop.xlane.xlu0 %224
  %v226 = vmul.f32 %v225, %v164
  %v227 = vadd.f32 %v226, 1e-05
  %v228 = vrsqrt.pop %v227
  %v229 = vmul.f32 %v221, %v228
  %v231 = vlaneseq
  %v232 = vshrl.u32 %v231, 7
  %v233 = vsub.s32 0, %v232
  %v234 = vrot.slane %v189, %v233
  %v236 = vmul.f32 %v229, %v234
  %v238 = vlaneseq
  %v239 = vshrl.u32 %v238, 7
  %v240 = vsub.s32 0, %v239
  %v241 = vrot.slane %v190, %v240
  %v243 = vadd.f32 %v236, %v241
  %v244 = vpack.c.bf16 %v243, %v243
  %v246 = vlaneseq
  %v247 = vshrl.u32 %v246, 7
  %v248 = vsub.s32 0, %v247
  %v249 = vrot.slane %v199, %v248
  %v250 = vlaneseq
  %v251 = vshrl.u32 %v250, 7
  %v252 = vsub.s32 1, %v251
  %v253 = vrot.slane %v199, %v252
  %v264 = vunpack.c.l.b16 %v191
  %v265 = vunpack.c.h.b16 %v191
  %v266 = vunpack.c.l.b16 %v192
  %v267 = vunpack.c.h.b16 %v192
  %v268 = vunpack.c.l.b16 %v193
  %v269 = vunpack.c.h.b16 %v193
  %v270 = vunpack.c.l.b16 %v194
  %v271 = vunpack.c.h.b16 %v194
  %v272 = vunpack.c.l.b16 %v195
  %v273 = vunpack.c.h.b16 %v195
  %v274 = vunpack.c.l.b16 %v196
  %v275 = vunpack.c.h.b16 %v196
  %v276 = vunpack.c.l.b16 %v197
  %v277 = vunpack.c.h.b16 %v197
  %v278 = vunpack.c.l.b16 %v198
  %v279 = vunpack.c.h.b16 %v198
  %v280 = vpack.c.b16 %v266, %v264
  %v281 = vpack.c.b16 %v267, %v265
  %v282 = vpack.c.b16 %v270, %v268
  %v283 = vpack.c.b16 %v271, %v269
  %v284 = vpack.c.b16 %v274, %v272
  %v285 = vpack.c.b16 %v275, %v273
  %v286 = vpack.c.b16 %v278, %v276
  %v287 = vpack.c.b16 %v279, %v277
  %v297 = vsel %vm160, %v244, 0
  %299 = vmatprep.subr.bf16.mxu0 0
  %300 = vmatpush1.bf16.msra.mxu0 0
  %301 = vmatprep.subr.bf16.mxu0 0
  %302 = vmatpush1.bf16.msra.mxu0 0
  %303 = vmatprep.subr.bf16.mxu0 0
  %304 = vmatpush1.bf16.msra.mxu0 0
  %305 = vmatprep.subr.bf16.mxu0 0
  %306 = vmatpush1.bf16.msra.mxu0 0
  %307 = vmatprep.subr.bf16.mxu0 %v287
  %308 = vmatpush1.bf16.msra.mxu0 %v286
  %309 = vmatprep.subr.bf16.mxu0 %v285
  %310 = vmatpush1.bf16.msra.mxu0 %v284
  %311 = vmatprep.subr.bf16.mxu0 %v283
  %312 = vmatpush1.bf16.msra.mxu0 %v282
  %313 = vmatprep.subr.bf16.mxu0 %v281
  %314 = vmatpush1.bf16.msra.mxu0 %v280
  %315 = vmatprep.subr.bf16.mxu0 0
  %316 = vmatpush2.bf16.msra.mxu0 0
  %317 = vmatprep.subr.bf16.mxu0 0
  %318 = vmatpush2.bf16.msra.mxu0 0
  %319 = vmatprep.subr.bf16.mxu0 0
  %320 = vmatpush2.bf16.msra.mxu0 0
  %321 = vmatprep.subr.bf16.mxu0 0
  %322 = vmatpush2.bf16.msra.mxu0 0
  %323 = vmatprep.subr.bf16.mxu0 0
  %324 = vmatpush2.bf16.msra.mxu0 0
  %325 = vmatprep.subr.bf16.mxu0 0
  %326 = vmatpush2.bf16.msra.mxu0 0
  %327 = vmatprep.subr.bf16.mxu0 0
  %328 = vmatpush2.bf16.msra.mxu0 0
  %329 = vmatprep.subr.bf16.mxu0 0
  %330 = vmatpush2.bf16.msra.mxu0 0
  %331 = vmatprep.mubr.bf16.mxu0 0
  %332 = vmatmul.mubr.bf16.gmra.mxu0 %v297
  %v333 = vpop.f32.mrf.mxu0
  %v334 = vadd.f32 %v249, %v333
  %v335 = vpop.f32.mrf.mxu0
  %v336 = vadd.f32 %v253, %v335
  %v337 = vpop.f32.mrf.mxu0
  %v338 = vpop.f32.mrf.mxu0
  %339 = vdwg.mxu0
  %v340 = vxor.u32 %v334, 2147483648
  %v341 = vmul.f32 %v340, 1.442695
  %v342 = vpow.pop %v341
  %v343 = vadd.f32 %v342, 1.0
  %v344 = vrcp.pop %v343
  %v345 = vmul.f32 1.0, %v344
  %v346 = vmul.f32 %v334, %v345
  %v347 = vmul.f32 %v346, %v336
  %v348 = vpack.c.bf16 %v347, %v347
  %v350 = vlaneseq
  %v351 = vshrl.u32 %v350, 7
  %v352 = vsub.s32 0, %v351
  %v353 = vrot.slane %v216, %v352
  %v371 = vunpack.c.l.b16 %v200
  %v372 = vunpack.c.l.b16 %v201
  %v373 = vunpack.c.l.b16 %v202
  %v374 = vunpack.c.l.b16 %v203
  %v375 = vunpack.c.l.b16 %v204
  %v376 = vunpack.c.l.b16 %v205
  %v377 = vunpack.c.l.b16 %v206
  %v378 = vunpack.c.l.b16 %v207
  %v379 = vunpack.c.l.b16 %v208
  %v380 = vunpack.c.l.b16 %v209
  %v381 = vunpack.c.l.b16 %v210
  %v382 = vunpack.c.l.b16 %v211
  %v383 = vunpack.c.l.b16 %v212
  %v384 = vunpack.c.l.b16 %v213
  %v385 = vunpack.c.l.b16 %v214
  %v386 = vunpack.c.l.b16 %v215
  %v387 = vpack.c.b16 %v372, %v371
  %v388 = vpack.c.b16 %v374, %v373
  %v389 = vpack.c.b16 %v376, %v375
  %v390 = vpack.c.b16 %v378, %v377
  %v391 = vpack.c.b16 %v380, %v379
  %v392 = vpack.c.b16 %v382, %v381
  %v393 = vpack.c.b16 %v384, %v383
  %v394 = vpack.c.b16 %v386, %v385
  %403 = vmatprep.subr.bf16.mxu0 0
  %404 = vmatpush1.bf16.msra.mxu0 %v394
  %405 = vmatprep.subr.bf16.mxu0 0
  %406 = vmatpush1.bf16.msra.mxu0 %v393
  %407 = vmatprep.subr.bf16.mxu0 0
  %408 = vmatpush1.bf16.msra.mxu0 %v392
  %409 = vmatprep.subr.bf16.mxu0 0
  %410 = vmatpush1.bf16.msra.mxu0 %v391
  %411 = vmatprep.subr.bf16.mxu0 0
  %412 = vmatpush1.bf16.msra.mxu0 %v390
  %413 = vmatprep.subr.bf16.mxu0 0
  %414 = vmatpush1.bf16.msra.mxu0 %v389
  %415 = vmatprep.subr.bf16.mxu0 0
  %416 = vmatpush1.bf16.msra.mxu0 %v388
  %417 = vmatprep.subr.bf16.mxu0 0
  %418 = vmatpush1.bf16.msra.mxu0 %v387
  %419 = vmatprep.subr.bf16.mxu0 0
  %420 = vmatpush2.bf16.msra.mxu0 0
  %421 = vmatprep.subr.bf16.mxu0 0
  %422 = vmatpush2.bf16.msra.mxu0 0
  %423 = vmatprep.subr.bf16.mxu0 0
  %424 = vmatpush2.bf16.msra.mxu0 0
  %425 = vmatprep.subr.bf16.mxu0 0
  %426 = vmatpush2.bf16.msra.mxu0 0
  %427 = vmatprep.subr.bf16.mxu0 0
  %428 = vmatpush2.bf16.msra.mxu0 0
  %429 = vmatprep.subr.bf16.mxu0 0
  %430 = vmatpush2.bf16.msra.mxu0 0
  %431 = vmatprep.subr.bf16.mxu0 0
  %432 = vmatpush2.bf16.msra.mxu0 0
  %433 = vmatprep.subr.bf16.mxu0 0
  %434 = vmatpush2.bf16.msra.mxu0 0
  %435 = vmatprep.mubr.bf16.mxu0 0
  %436 = vmatmul.mubr.bf16.gmra.mxu0 %v348
  %v437 = vpop.f32.mrf.mxu0
  %v438 = vadd.f32 %v353, %v437
  %v439 = vpop.f32.mrf.mxu0
  %v440 = vpop.f32.mrf.mxu0
  %v441 = vpop.f32.mrf.mxu0
  %442 = vdwg.mxu0
  %v443 = vadd.f32 %v188, %v438
  %s444 = scalar_lea.vmem %s5, 1
  %v445 = vld [vmem:[%s444] sm:$0x1]
  %s446 = scalar_lea.vmem %s6, 1
  %v447 = vld [vmem:[%s446] sm:$0x1]
  %s448 = scalar_lea.vmem %s7, 64
  %v449 = vld [vmem:[%s448] sm:$0xff]
  %v450 = vld [vmem:[%s448 + $0x8] sm:$0xff]
  %v451 = vld [vmem:[%s448 + $0x10] sm:$0xff]
  %v452 = vld [vmem:[%s448 + $0x18] sm:$0xff]
  %v453 = vld [vmem:[%s448 + $0x20] sm:$0xff]
  %v454 = vld [vmem:[%s448 + $0x28] sm:$0xff]
  %v455 = vld [vmem:[%s448 + $0x30] sm:$0xff]
  %v456 = vld [vmem:[%s448 + $0x38] sm:$0xff]
  %s457 = scalar_lea.vmem %s8, 2
  %v458 = vld [vmem:[%s457] sm:$0x3]
  %s459 = scalar_lea.vmem %s9, 64
  %v460 = vld [vmem:[%s459] sm:$0xf]
  %v461 = vld [vmem:[%s459 + $0x4] sm:$0xf]
  %v462 = vld [vmem:[%s459 + $0x8] sm:$0xf]
  %v463 = vld [vmem:[%s459 + $0xc] sm:$0xf]
  %v464 = vld [vmem:[%s459 + $0x10] sm:$0xf]
  %v465 = vld [vmem:[%s459 + $0x14] sm:$0xf]
  %v466 = vld [vmem:[%s459 + $0x18] sm:$0xf]
  %v467 = vld [vmem:[%s459 + $0x1c] sm:$0xf]
  %v468 = vld [vmem:[%s459 + $0x20] sm:$0xf]
  %v469 = vld [vmem:[%s459 + $0x24] sm:$0xf]
  %v470 = vld [vmem:[%s459 + $0x28] sm:$0xf]
  %v471 = vld [vmem:[%s459 + $0x2c] sm:$0xf]
  %v472 = vld [vmem:[%s459 + $0x30] sm:$0xf]
  %v473 = vld [vmem:[%s459 + $0x34] sm:$0xf]
  %v474 = vld [vmem:[%s459 + $0x38] sm:$0xf]
  %v475 = vld [vmem:[%s459 + $0x3c] sm:$0xf]
  %s476 = scalar_lea.vmem %s10, 1
  %v477 = vld [vmem:[%s476] sm:$0x1]
  %v478 = vsel %vm160, %v443, 0.0
  %479 = vadd.xlane.f32.xlu0 %v478
  %v480 = vpop.xlane.xlu0 %479
  %v481 = vmul.f32 %v480, %v164
  %v482 = vsub.f32 %v443, %v481
  %v483 = vmul.f32 %v482, %v482
  %v484 = vsel %vm160, %v483, 0.0
  %485 = vadd.xlane.f32.xlu0 %v484
  %v486 = vpop.xlane.xlu0 %485
  %v487 = vmul.f32 %v486, %v164
  %v488 = vadd.f32 %v487, 1e-05
  %v489 = vrsqrt.pop %v488
  %v490 = vmul.f32 %v482, %v489
  %v492 = vlaneseq
  %v493 = vshrl.u32 %v492, 7
  %v494 = vsub.s32 0, %v493
  %v495 = vrot.slane %v445, %v494
  %v497 = vmul.f32 %v490, %v495
  %v499 = vlaneseq
  %v500 = vshrl.u32 %v499, 7
  %v501 = vsub.s32 0, %v500
  %v502 = vrot.slane %v447, %v501
  %v504 = vadd.f32 %v497, %v502
  %v505 = vpack.c.bf16 %v504, %v504
  %v507 = vlaneseq
  %v508 = vshrl.u32 %v507, 7
  %v509 = vsub.s32 0, %v508
  %v510 = vrot.slane %v458, %v509
  %v511 = vlaneseq
  %v512 = vshrl.u32 %v511, 7
  %v513 = vsub.s32 1, %v512
  %v514 = vrot.slane %v458, %v513
  %v525 = vunpack.c.l.b16 %v449
  %v526 = vunpack.c.h.b16 %v449
  %v527 = vunpack.c.l.b16 %v450
  %v528 = vunpack.c.h.b16 %v450
  %v529 = vunpack.c.l.b16 %v451
  %v530 = vunpack.c.h.b16 %v451
  %v531 = vunpack.c.l.b16 %v452
  %v532 = vunpack.c.h.b16 %v452
  %v533 = vunpack.c.l.b16 %v453
  %v534 = vunpack.c.h.b16 %v453
  %v535 = vunpack.c.l.b16 %v454
  %v536 = vunpack.c.h.b16 %v454
  %v537 = vunpack.c.l.b16 %v455
  %v538 = vunpack.c.h.b16 %v455
  %v539 = vunpack.c.l.b16 %v456
  %v540 = vunpack.c.h.b16 %v456
  %v541 = vpack.c.b16 %v527, %v525
  %v542 = vpack.c.b16 %v528, %v526
  %v543 = vpack.c.b16 %v531, %v529
  %v544 = vpack.c.b16 %v532, %v530
  %v545 = vpack.c.b16 %v535, %v533
  %v546 = vpack.c.b16 %v536, %v534
  %v547 = vpack.c.b16 %v539, %v537
  %v548 = vpack.c.b16 %v540, %v538
  %v558 = vsel %vm160, %v505, 0
  %560 = vmatprep.subr.bf16.mxu0 0
  %561 = vmatpush1.bf16.msra.mxu0 0
  %562 = vmatprep.subr.bf16.mxu0 0
  %563 = vmatpush1.bf16.msra.mxu0 0
  %564 = vmatprep.subr.bf16.mxu0 0
  %565 = vmatpush1.bf16.msra.mxu0 0
  %566 = vmatprep.subr.bf16.mxu0 0
  %567 = vmatpush1.bf16.msra.mxu0 0
  %568 = vmatprep.subr.bf16.mxu0 %v548
  %569 = vmatpush1.bf16.msra.mxu0 %v547
  %570 = vmatprep.subr.bf16.mxu0 %v546
  %571 = vmatpush1.bf16.msra.mxu0 %v545
  %572 = vmatprep.subr.bf16.mxu0 %v544
  %573 = vmatpush1.bf16.msra.mxu0 %v543
  %574 = vmatprep.subr.bf16.mxu0 %v542
  %575 = vmatpush1.bf16.msra.mxu0 %v541
  %576 = vmatprep.subr.bf16.mxu0 0
  %577 = vmatpush2.bf16.msra.mxu0 0
  %578 = vmatprep.subr.bf16.mxu0 0
  %579 = vmatpush2.bf16.msra.mxu0 0
  %580 = vmatprep.subr.bf16.mxu0 0
  %581 = vmatpush2.bf16.msra.mxu0 0
  %582 = vmatprep.subr.bf16.mxu0 0
  %583 = vmatpush2.bf16.msra.mxu0 0
  %584 = vmatprep.subr.bf16.mxu0 0
  %585 = vmatpush2.bf16.msra.mxu0 0
  %586 = vmatprep.subr.bf16.mxu0 0
  %587 = vmatpush2.bf16.msra.mxu0 0
  %588 = vmatprep.subr.bf16.mxu0 0
  %589 = vmatpush2.bf16.msra.mxu0 0
  %590 = vmatprep.subr.bf16.mxu0 0
  %591 = vmatpush2.bf16.msra.mxu0 0
  %592 = vmatprep.mubr.bf16.mxu0 0
  %593 = vmatmul.mubr.bf16.gmra.mxu0 %v558
  %v594 = vpop.f32.mrf.mxu0
  %v595 = vadd.f32 %v510, %v594
  %v596 = vpop.f32.mrf.mxu0
  %v597 = vadd.f32 %v514, %v596
  %v598 = vpop.f32.mrf.mxu0
  %v599 = vpop.f32.mrf.mxu0
  %600 = vdwg.mxu0
  %v601 = vxor.u32 %v595, 2147483648
  %v602 = vmul.f32 %v601, 1.442695
  %v603 = vpow.pop %v602
  %v604 = vadd.f32 %v603, 1.0
  %v605 = vrcp.pop %v604
  %v606 = vmul.f32 1.0, %v605
  %v607 = vmul.f32 %v595, %v606
  %v608 = vmul.f32 %v607, %v597
  %v609 = vpack.c.bf16 %v608, %v608
  %v611 = vlaneseq
  %v612 = vshrl.u32 %v611, 7
  %v613 = vsub.s32 0, %v612
  %v614 = vrot.slane %v477, %v613
  %v632 = vunpack.c.l.b16 %v460
  %v633 = vunpack.c.l.b16 %v461
  %v634 = vunpack.c.l.b16 %v462
  %v635 = vunpack.c.l.b16 %v463
  %v636 = vunpack.c.l.b16 %v464
  %v637 = vunpack.c.l.b16 %v465
  %v638 = vunpack.c.l.b16 %v466
  %v639 = vunpack.c.l.b16 %v467
  %v640 = vunpack.c.l.b16 %v468
  %v641 = vunpack.c.l.b16 %v469
  %v642 = vunpack.c.l.b16 %v470
  %v643 = vunpack.c.l.b16 %v471
  %v644 = vunpack.c.l.b16 %v472
  %v645 = vunpack.c.l.b16 %v473
  %v646 = vunpack.c.l.b16 %v474
  %v647 = vunpack.c.l.b16 %v475
  %v648 = vpack.c.b16 %v633, %v632
  %v649 = vpack.c.b16 %v635, %v634
  %v650 = vpack.c.b16 %v637, %v636
  %v651 = vpack.c.b16 %v639, %v638
  %v652 = vpack.c.b16 %v641, %v640
  %v653 = vpack.c.b16 %v643, %v642
  %v654 = vpack.c.b16 %v645, %v644
  %v655 = vpack.c.b16 %v647, %v646
  %664 = vmatprep.subr.bf16.mxu0 0
  %665 = vmatpush1.bf16.msra.mxu0 %v655
  %666 = vmatprep.subr.bf16.mxu0 0
  %667 = vmatpush1.bf16.msra.mxu0 %v654
  %668 = vmatprep.subr.bf16.mxu0 0
  %669 = vmatpush1.bf16.msra.mxu0 %v653
  %670 = vmatprep.subr.bf16.mxu0 0
  %671 = vmatpush1.bf16.msra.mxu0 %v652
  %672 = vmatprep.subr.bf16.mxu0 0
  %673 = vmatpush1.bf16.msra.mxu0 %v651
  %674 = vmatprep.subr.bf16.mxu0 0
  %675 = vmatpush1.bf16.msra.mxu0 %v650
  %676 = vmatprep.subr.bf16.mxu0 0
  %677 = vmatpush1.bf16.msra.mxu0 %v649
  %678 = vmatprep.subr.bf16.mxu0 0
  %679 = vmatpush1.bf16.msra.mxu0 %v648
  %680 = vmatprep.subr.bf16.mxu0 0
  %681 = vmatpush2.bf16.msra.mxu0 0
  %682 = vmatprep.subr.bf16.mxu0 0
  %683 = vmatpush2.bf16.msra.mxu0 0
  %684 = vmatprep.subr.bf16.mxu0 0
  %685 = vmatpush2.bf16.msra.mxu0 0
  %686 = vmatprep.subr.bf16.mxu0 0
  %687 = vmatpush2.bf16.msra.mxu0 0
  %688 = vmatprep.subr.bf16.mxu0 0
  %689 = vmatpush2.bf16.msra.mxu0 0
  %690 = vmatprep.subr.bf16.mxu0 0
  %691 = vmatpush2.bf16.msra.mxu0 0
  %692 = vmatprep.subr.bf16.mxu0 0
  %693 = vmatpush2.bf16.msra.mxu0 0
  %694 = vmatprep.subr.bf16.mxu0 0
  %695 = vmatpush2.bf16.msra.mxu0 0
  %696 = vmatprep.mubr.bf16.mxu0 0
  %697 = vmatmul.mubr.bf16.gmra.mxu0 %v609
  %v698 = vpop.f32.mrf.mxu0
  %v699 = vadd.f32 %v614, %v698
  %v700 = vpop.f32.mrf.mxu0
  %v701 = vpop.f32.mrf.mxu0
  %v702 = vpop.f32.mrf.mxu0
  %703 = vdwg.mxu0
  %v704 = vadd.f32 %v443, %v699
  %v705 = vpack.c.bf16 %v704, %v704
  %v706 = vld [vmem:[%s11] sm:$0xf]
  %v707 = vld [vmem:[%s11 + $0x4] sm:$0xf]
  %v708 = vld [vmem:[%s11 + $0x8] sm:$0xf]
  %v709 = vld [vmem:[%s11 + $0xc] sm:$0xf]
  %v710 = vld [vmem:[%s11 + $0x10] sm:$0xf]
  %v711 = vld [vmem:[%s11 + $0x14] sm:$0xf]
  %v712 = vld [vmem:[%s11 + $0x18] sm:$0xf]
  %v713 = vld [vmem:[%s11 + $0x1c] sm:$0xf]
  %v714 = vld [vmem:[%s12] sm:$0x1]
  %v716 = vlaneseq
  %v717 = vshrl.u32 %v716, 7
  %v718 = vsub.s32 0, %v717
  %v719 = vrot.slane %v714, %v718
  %v729 = vunpack.c.l.b16 %v706
  %v730 = vunpack.c.l.b16 %v707
  %v731 = vunpack.c.l.b16 %v708
  %v732 = vunpack.c.l.b16 %v709
  %v733 = vunpack.c.l.b16 %v710
  %v734 = vunpack.c.l.b16 %v711
  %v735 = vunpack.c.l.b16 %v712
  %v736 = vunpack.c.l.b16 %v713
  %v737 = vpack.c.b16 %v730, %v729
  %v738 = vpack.c.b16 %v732, %v731
  %v739 = vpack.c.b16 %v734, %v733
  %v740 = vpack.c.b16 %v736, %v735
  %v746 = vsel %vm160, %v705, 0
  %748 = vmatprep.subr.bf16.mxu0 0
  %749 = vmatpush1.bf16.msra.mxu0 0
  %750 = vmatprep.subr.bf16.mxu0 0
  %751 = vmatpush1.bf16.msra.mxu0 0
  %752 = vmatprep.subr.bf16.mxu0 0
  %753 = vmatpush1.bf16.msra.mxu0 0
  %754 = vmatprep.subr.bf16.mxu0 0
  %755 = vmatpush1.bf16.msra.mxu0 0
  %756 = vmatprep.subr.bf16.mxu0 0
  %757 = vmatpush1.bf16.msra.mxu0 %v740
  %758 = vmatprep.subr.bf16.mxu0 0
  %759 = vmatpush1.bf16.msra.mxu0 %v739
  %760 = vmatprep.subr.bf16.mxu0 0
  %761 = vmatpush1.bf16.msra.mxu0 %v738
  %762 = vmatprep.subr.bf16.mxu0 0
  %763 = vmatpush1.bf16.msra.mxu0 %v737
  %764 = vmatprep.subr.bf16.mxu0 0
  %765 = vmatpush2.bf16.msra.mxu0 0
  %766 = vmatprep.subr.bf16.mxu0 0
  %767 = vmatpush2.bf16.msra.mxu0 0
  %768 = vmatprep.subr.bf16.mxu0 0
  %769 = vmatpush2.bf16.msra.mxu0 0
  %770 = vmatprep.subr.bf16.mxu0 0
  %771 = vmatpush2.bf16.msra.mxu0 0
  %772 = vmatprep.subr.bf16.mxu0 0
  %773 = vmatpush2.bf16.msra.mxu0 0
  %774 = vmatprep.subr.bf16.mxu0 0
  %775 = vmatpush2.bf16.msra.mxu0 0
  %776 = vmatprep.subr.bf16.mxu0 0
  %777 = vmatpush2.bf16.msra.mxu0 0
  %778 = vmatprep.subr.bf16.mxu0 0
  %779 = vmatpush2.bf16.msra.mxu0 0
  %780 = vmatprep.mubr.bf16.mxu0 0
  %781 = vmatmul.mubr.bf16.gmra.mxu0 %v746
  %v782 = vpop.f32.mrf.mxu0
  %v783 = vadd.f32 %v719, %v782
  %v784 = vpop.f32.mrf.mxu0
  %v785 = vpop.f32.mrf.mxu0
  %v786 = vpop.f32.mrf.mxu0
  %787 = vdwg.mxu0
  %788 = vst [vmem:[%s13] sm:$0xff] %v783
  // Predicated region
  $region54: #{lmfnet_forward.4} parent=0 // pred_check
    _
  $region55: #{lmfnet_forward.4} parent=0 // pred_check_branch
    %790 = sbr.rel (0) target = $region57
  $region56: #{lmfnet_forward.4} parent=0 // pred_region
    _
  $region57: #{lmfnet_forward.4} parent=0 // pred_fallthru
    _
  // Predicated region
  $region58: #{lmfnet_forward.4} parent=0 // pred_check
    _
  $region59: #{lmfnet_forward.4} parent=0 // pred_check_branch
    %792 = sbr.rel (0) target = $region61
  $region60: #{lmfnet_forward.4} parent=0 // pred_region
    _
  $region61: #{lmfnet_forward.4} parent=0 // pred_fallthru
    _

// kernel: lmfnet_forward.5
$region0: #{lmfnet_forward.5}
  #allocation0 [shape = 'u32[]', space=smem, size = 0x4, offset = 0x4, fixed_abs, tag = 'smem constant byte address 0x4 - core index']
  #allocation1 [shape = 'u32[144,128]{1,0:T(1,128)}', space=vmem, size = 0x12000, scoped, tag = 'internal scratch']
  %s0 = inlined_call_operand.vmem [shape: f32[32,32], index: 0, kind: input, shape index: {}]
  %s1 = inlined_call_operand.vmem [shape: f32[2,1,32], index: 1, kind: input, shape index: {}]
  %s2 = inlined_call_operand.vmem [shape: f32[2,1,32], index: 2, kind: input, shape index: {}]
  %s3 = inlined_call_operand.vmem [shape: bf16[2,32,128], index: 3, kind: input, shape index: {}]
  %s4 = inlined_call_operand.vmem [shape: f32[2,1,128], index: 4, kind: input, shape index: {}]
  %s5 = inlined_call_operand.vmem [shape: bf16[2,64,32], index: 5, kind: input, shape index: {}]
  %s6 = inlined_call_operand.vmem [shape: f32[2,1,32], index: 6, kind: input, shape index: {}]
  %s7 = inlined_call_operand.vmem [shape: bf16[32,16], index: 7, kind: input, shape index: {}]
  %s8 = inlined_call_operand.vmem [shape: f32[1,16], index: 8, kind: input, shape index: {}]
  %s9 = inlined_call_operand.vmem [shape: f32[32,16], index: 9, kind: output, shape index: {}]
  %s10 = sld [smem:[#allocation0]]
  $region46: #{lmfnet_forward.5} parent=0
    _
  %s12 = ssub.s32 1, %s10
  %s13 = scalar_select 0, %s12, %s10
  // Predicated region
  $region2: #{lmfnet_forward.5} parent=0 // pred_check
    _
  $region3: #{lmfnet_forward.5} parent=0 // pred_check_branch
    %15 = sbr.rel (0) target = $region5
  $region4: #{lmfnet_forward.5} parent=0 // pred_region
    _
  $region5: #{lmfnet_forward.5} parent=0 // pred_fallthru
    _
  // Predicated region
  $region6: #{lmfnet_forward.5} parent=0 // pred_check
    _
  $region7: #{lmfnet_forward.5} parent=0 // pred_check_branch
    %17 = sbr.rel (0) target = $region9
  $region8: #{lmfnet_forward.5} parent=0 // pred_region
    _
  $region9: #{lmfnet_forward.5} parent=0 // pred_fallthru
    _
  // Predicated region
  $region10: #{lmfnet_forward.5} parent=0 // pred_check
    _
  $region11: #{lmfnet_forward.5} parent=0 // pred_check_branch
    %19 = sbr.rel (0) target = $region13
  $region12: #{lmfnet_forward.5} parent=0 // pred_region
    _
  $region13: #{lmfnet_forward.5} parent=0 // pred_fallthru
    _
  // Predicated region
  $region14: #{lmfnet_forward.5} parent=0 // pred_check
    _
  $region15: #{lmfnet_forward.5} parent=0 // pred_check_branch
    %21 = sbr.rel (0) target = $region17
  $region16: #{lmfnet_forward.5} parent=0 // pred_region
    _
  $region17: #{lmfnet_forward.5} parent=0 // pred_fallthru
    _
  // Predicated region
  $region18: #{lmfnet_forward.5} parent=0 // pred_check
    _
  $region19: #{lmfnet_forward.5} parent=0 // pred_check_branch
    %23 = sbr.rel (0) target = $region21
  $region20: #{lmfnet_forward.5} parent=0 // pred_region
    _
  $region21: #{lmfnet_forward.5} parent=0 // pred_fallthru
    _
  // Predicated region
  $region22: #{lmfnet_forward.5} parent=0 // pred_check
    _
  $region23: #{lmfnet_forward.5} parent=0 // pred_check_branch
    %25 = sbr.rel (0) target = $region25
  $region24: #{lmfnet_forward.5} parent=0 // pred_region
    _
  $region25: #{lmfnet_forward.5} parent=0 // pred_fallthru
    _
  // Predicated region
  $region26: #{lmfnet_forward.5} parent=0 // pred_check
    _
  $region27: #{lmfnet_forward.5} parent=0 // pred_check_branch
    %27 = sbr.rel (0) target = $region29
  $region28: #{lmfnet_forward.5} parent=0 // pred_region
    _
  $region29: #{lmfnet_forward.5} parent=0 // pred_fallthru
    _
  // Predicated region
  $region30: #{lmfnet_forward.5} parent=0 // pred_check
    _
  $region31: #{lmfnet_forward.5} parent=0 // pred_check_branch
    %29 = sbr.rel (0) target = $region33
  $region32: #{lmfnet_forward.5} parent=0 // pred_region
    _
  $region33: #{lmfnet_forward.5} parent=0 // pred_fallthru
    _
  // Predicated region
  $region34: #{lmfnet_forward.5} parent=0 // pred_check
    _
  $region35: #{lmfnet_forward.5} parent=0 // pred_check_branch
    %31 = sbr.rel (0) target = $region37
  $region36: #{lmfnet_forward.5} parent=0 // pred_region
    _
  $region37: #{lmfnet_forward.5} parent=0 // pred_fallthru
    _
  %v33 = vld [vmem:[%s0] sm:$0xff]
  %v34 = vld [vmem:[%s0 + $0x8] sm:$0xff]
  %v35 = vld [vmem:[%s0 + $0x10] sm:$0xff]
  %v36 = vld [vmem:[%s0 + $0x18] sm:$0xff]
  %v37 = vld [vmem:[%s1] sm:$0x1]
  %v38 = vld [vmem:[%s2] sm:$0x1]
  %v39 = vld [vmem:[%s3] sm:$0xf]
  %v40 = vld [vmem:[%s3 + $0x4] sm:$0xf]
  %v41 = vld [vmem:[%s3 + $0x8] sm:$0xf]
  %v42 = vld [vmem:[%s3 + $0xc] sm:$0xf]
  %v43 = vld [vmem:[%s4] sm:$0x1]
  %v44 = vld [vmem:[%s5] sm:$0xf]
  %v45 = vld [vmem:[%s5 + $0x4] sm:$0xf]
  %v46 = vld [vmem:[%s5 + $0x8] sm:$0xf]
  %v47 = vld [vmem:[%s5 + $0xc] sm:$0xf]
  %v48 = vld [vmem:[%s5 + $0x10] sm:$0xf]
  %v49 = vld [vmem:[%s5 + $0x14] sm:$0xf]
  %v50 = vld [vmem:[%s5 + $0x18] sm:$0xf]
  %v51 = vld [vmem:[%s5 + $0x1c] sm:$0xf]
  %v52 = vld [vmem:[%s6] sm:$0x1]
  %vm53 = vcmask 261120
  %v54 = vsel %vm53, %v33, 0.0
  %55 = vadd.xlane.f32.xlu0 %v54
  %v56 = vpop.xlane.xlu0 %55
  %v57 = vsel %vm53, %v34, 0.0
  %58 = vadd.xlane.f32.xlu0 %v57
  %v59 = vpop.xlane.xlu0 %58
  %v60 = vsel %vm53, %v35, 0.0
  %61 = vadd.xlane.f32.xlu0 %v60
  %v62 = vpop.xlane.xlu0 %61
  %v63 = vsel %vm53, %v36, 0.0
  %64 = vadd.xlane.f32.xlu0 %v63
  %v65 = vpop.xlane.xlu0 %64
  %v66 = vrcp.pop 32.0
  %v67 = vmul.f32 %v56, %v66
  %v68 = vmul.f32 %v59, %v66
  %v69 = vmul.f32 %v62, %v66
  %v70 = vmul.f32 %v65, %v66
  %v71 = vsub.f32 %v33, %v67
  %v72 = vsub.f32 %v34, %v68
  %v73 = vsub.f32 %v35, %v69
  %v74 = vsub.f32 %v36, %v70
  %v75 = vmul.f32 %v71, %v71
  %v76 = vmul.f32 %v72, %v72
  %v77 = vmul.f32 %v73, %v73
  %v78 = vmul.f32 %v74, %v74
  %v79 = vsel %vm53, %v75, 0.0
  %80 = vadd.xlane.f32.xlu0 %v79
  %v81 = vpop.xlane.xlu0 %80
  %v82 = vsel %vm53, %v76, 0.0
  %83 = vadd.xlane.f32.xlu0 %v82
  %v84 = vpop.xlane.xlu0 %83
  %v85 = vsel %vm53, %v77, 0.0
  %86 = vadd.xlane.f32.xlu0 %v85
  %v87 = vpop.xlane.xlu0 %86
  %v88 = vsel %vm53, %v78, 0.0
  %89 = vadd.xlane.f32.xlu0 %v88
  %v90 = vpop.xlane.xlu0 %89
  %v91 = vmul.f32 %v81, %v66
  %v92 = vmul.f32 %v84, %v66
  %v93 = vmul.f32 %v87, %v66
  %v94 = vmul.f32 %v90, %v66
  %v95 = vadd.f32 %v91, 1e-05
  %v96 = vadd.f32 %v92, 1e-05
  %v97 = vadd.f32 %v93, 1e-05
  %v98 = vadd.f32 %v94, 1e-05
  %v99 = vrsqrt.pop %v95
  %v100 = vrsqrt.pop %v96
  %v101 = vrsqrt.pop %v97
  %v102 = vrsqrt.pop %v98
  %v103 = vmul.f32 %v71, %v99
  %v104 = vmul.f32 %v72, %v100
  %v105 = vmul.f32 %v73, %v101
  %v106 = vmul.f32 %v74, %v102
  %v108 = vlaneseq
  %v109 = vshrl.u32 %v108, 7
  %v110 = vsub.s32 0, %v109
  %v111 = vrot.slane %v37, %v110
  %v113 = vmul.f32 %v103, %v111
  %v114 = vmul.f32 %v104, %v111
  %v115 = vmul.f32 %v105, %v111
  %v116 = vmul.f32 %v106, %v111
  %v118 = vlaneseq
  %v119 = vshrl.u32 %v118, 7
  %v120 = vsub.s32 0, %v119
  %v121 = vrot.slane %v38, %v120
  %v123 = vadd.f32 %v113, %v121
  %v124 = vadd.f32 %v114, %v121
  %v125 = vadd.f32 %v115, %v121
  %v126 = vadd.f32 %v116, %v121
  %v127 = vpack.c.bf16 %v124, %v123
  %v128 = vpack.c.bf16 %v126, %v125
  %v130 = vlaneseq
  %v131 = vshrl.u32 %v130, 7
  %v132 = vsub.s32 0, %v131
  %v133 = vrot.slane %v43, %v132
  %v139 = vunpack.c.l.b16 %v39
  %v140 = vunpack.c.l.b16 %v40
  %v141 = vunpack.c.l.b16 %v41
  %v142 = vunpack.c.l.b16 %v42
  %v143 = vpack.c.b16 %v140, %v139
  %v144 = vpack.c.b16 %v142, %v141
  %v148 = vsel %vm53, %v127, 0
  %v151 = vsel %vm53, %v128, 0
  %153 = vmatprep.subr.bf16.mxu0 0
  %154 = vmatpush1.bf16.msra.mxu0 0
  %155 = vmatprep.subr.bf16.mxu0 0
  %156 = vmatpush1.bf16.msra.mxu0 0
  %157 = vmatprep.subr.bf16.mxu0 0
  %158 = vmatpush1.bf16.msra.mxu0 0
  %159 = vmatprep.subr.bf16.mxu0 0
  %160 = vmatpush1.bf16.msra.mxu0 0
  %161 = vmatprep.subr.bf16.mxu0 0
  %162 = vmatpush1.bf16.msra.mxu0 0
  %163 = vmatprep.subr.bf16.mxu0 0
  %164 = vmatpush1.bf16.msra.mxu0 0
  %165 = vmatprep.subr.bf16.mxu0 0
  %166 = vmatpush1.bf16.msra.mxu0 %v144
  %167 = vmatprep.subr.bf16.mxu0 0
  %168 = vmatpush1.bf16.msra.mxu0 %v143
  %169 = vmatprep.subr.bf16.mxu0 0
  %170 = vmatpush2.bf16.msra.mxu0 0
  %171 = vmatprep.subr.bf16.mxu0 0
  %172 = vmatpush2.bf16.msra.mxu0 0
  %173 = vmatprep.subr.bf16.mxu0 0
  %174 = vmatpush2.bf16.msra.mxu0 0
  %175 = vmatprep.subr.bf16.mxu0 0
  %176 = vmatpush2.bf16.msra.mxu0 0
  %177 = vmatprep.subr.bf16.mxu0 0
  %178 = vmatpush2.bf16.msra.mxu0 0
  %179 = vmatprep.subr.bf16.mxu0 0
  %180 = vmatpush2.bf16.msra.mxu0 0
  %181 = vmatprep.subr.bf16.mxu0 0
  %182 = vmatpush2.bf16.msra.mxu0 0
  %183 = vmatprep.subr.bf16.mxu0 0
  %184 = vmatpush2.bf16.msra.mxu0 0
  %185 = vmatprep.mubr.bf16.mxu0 0
  %186 = vmatmul.mubr.bf16.gmra.mxu0 %v148
  %v187 = vpop.f32.mrf.mxu0
  %v188 = vadd.f32 %v133, %v187
  %v189 = vpop.f32.mrf.mxu0
  %v190 = vpop.f32.mrf.mxu0
  %v191 = vadd.f32 %v133, %v190
  %v192 = vpop.f32.mrf.mxu0
  %193 = vmatprep.mubr.bf16.mxu0 0
  %194 = vmatmul.mubr.bf16.gmra.mxu0 %v151
  %v195 = vpop.f32.mrf.mxu0
  %v196 = vadd.f32 %v133, %v195
  %v197 = vpop.f32.mrf.mxu0
  %v198 = vpop.f32.mrf.mxu0
  %v199 = vadd.f32 %v133, %v198
  %v200 = vpop.f32.mrf.mxu0
  %201 = vdwg.mxu0
  %v202 = vxor.u32 %v188, 2147483648
  %v203 = vxor.u32 %v191, 2147483648
  %v204 = vxor.u32 %v196, 2147483648
  %v205 = vxor.u32 %v199, 2147483648
  %v206 = vmul.f32 %v202, 1.442695
  %v207 = vpow.pop %v206
  %v208 = vmul.f32 %v203, 1.442695
  %v209 = vpow.pop %v208
  %v210 = vmul.f32 %v204, 1.442695
  %v211 = vpow.pop %v210
  %v212 = vmul.f32 %v205, 1.442695
  %v213 = vpow.pop %v212
  %v214 = vadd.f32 %v207, 1.0
  %v215 = vadd.f32 %v209, 1.0
  %v216 = vadd.f32 %v211, 1.0
  %v217 = vadd.f32 %v213, 1.0
  %v218 = vrcp.pop %v214
  %v219 = vmul.f32 1.0, %v218
  %v220 = vrcp.pop %v215
  %v221 = vmul.f32 1.0, %v220
  %v222 = vrcp.pop %v216
  %v223 = vmul.f32 1.0, %v222
  %v224 = vrcp.pop %v217
  %v225 = vmul.f32 1.0, %v224
  %v226 = vmul.f32 %v188, %v219
  %v227 = vmul.f32 %v191, %v221
  %v228 = vmul.f32 %v196, %v223
  %v229 = vmul.f32 %v199, %v225
  %234 = vrot.lane.b32.xlu0 %v188, 64
  %v235 = vpop.permute.xlu0 %234
  %236 = vrot.lane.b32.xlu0 %v191, 64
  %v237 = vpop.permute.xlu0 %236
  %238 = vrot.lane.b32.xlu0 %v196, 64
  %v239 = vpop.permute.xlu0 %238
  %240 = vrot.lane.b32.xlu0 %v199, 64
  %v241 = vpop.permute.xlu0 %240
  %v246 = vmul.f32 %v226, %v235
  %v247 = vmul.f32 %v227, %v237
  %v248 = vmul.f32 %v228, %v239
  %v249 = vmul.f32 %v229, %v241
  %v250 = vpack.c.bf16 %v247, %v246
  %v251 = vpack.c.bf16 %v249, %v248
  %v253 = vlaneseq
  %v254 = vshrl.u32 %v253, 7
  %v255 = vsub.s32 0, %v254
  %v256 = vrot.slane %v52, %v255
  %v266 = vunpack.c.l.b16 %v44
  %v267 = vunpack.c.l.b16 %v45
  %v268 = vunpack.c.l.b16 %v46
  %v269 = vunpack.c.l.b16 %v47
  %v270 = vunpack.c.l.b16 %v48
  %v271 = vunpack.c.l.b16 %v49
  %v272 = vunpack.c.l.b16 %v50
  %v273 = vunpack.c.l.b16 %v51
  %v274 = vpack.c.b16 %v267, %v266
  %v275 = vpack.c.b16 %v269, %v268
  %v276 = vpack.c.b16 %v271, %v270
  %v277 = vpack.c.b16 %v273, %v272
  %vm282 = vcmask 523264
  %v284 = vsel %vm282, %v250, 0
  %v287 = vsel %vm282, %v251, 0
  %289 = vmatprep.subr.bf16.mxu0 0
  %290 = vmatpush1.bf16.msra.mxu0 0
  %291 = vmatprep.subr.bf16.mxu0 0
  %292 = vmatpush1.bf16.msra.mxu0 0
  %293 = vmatprep.subr.bf16.mxu0 0
  %294 = vmatpush1.bf16.msra.mxu0 0
  %295 = vmatprep.subr.bf16.mxu0 0
  %296 = vmatpush1.bf16.msra.mxu0 0
  %297 = vmatprep.subr.bf16.mxu0 0
  %298 = vmatpush1.bf16.msra.mxu0 %v277
  %299 = vmatprep.subr.bf16.mxu0 0
  %300 = vmatpush1.bf16.msra.mxu0 %v276
  %301 = vmatprep.subr.bf16.mxu0 0
  %302 = vmatpush1.bf16.msra.mxu0 %v275
  %303 = vmatprep.subr.bf16.mxu0 0
  %304 = vmatpush1.bf16.msra.mxu0 %v274
  %305 = vmatprep.subr.bf16.mxu0 0
  %306 = vmatpush2.bf16.msra.mxu0 0
  %307 = vmatprep.subr.bf16.mxu0 0
  %308 = vmatpush2.bf16.msra.mxu0 0
  %309 = vmatprep.subr.bf16.mxu0 0
  %310 = vmatpush2.bf16.msra.mxu0 0
  %311 = vmatprep.subr.bf16.mxu0 0
  %312 = vmatpush2.bf16.msra.mxu0 0
  %313 = vmatprep.subr.bf16.mxu0 0
  %314 = vmatpush2.bf16.msra.mxu0 0
  %315 = vmatprep.subr.bf16.mxu0 0
  %316 = vmatpush2.bf16.msra.mxu0 0
  %317 = vmatprep.subr.bf16.mxu0 0
  %318 = vmatpush2.bf16.msra.mxu0 0
  %319 = vmatprep.subr.bf16.mxu0 0
  %320 = vmatpush2.bf16.msra.mxu0 0
  %321 = vmatprep.mubr.bf16.mxu0 0
  %322 = vmatmul.mubr.bf16.gmra.mxu0 %v284
  %v323 = vpop.f32.mrf.mxu0
  %v324 = vadd.f32 %v256, %v323
  %v325 = vpop.f32.mrf.mxu0
  %v326 = vpop.f32.mrf.mxu0
  %v327 = vadd.f32 %v256, %v326
  %v328 = vpop.f32.mrf.mxu0
  %329 = vmatprep.mubr.bf16.mxu0 0
  %330 = vmatmul.mubr.bf16.gmra.mxu0 %v287
  %v331 = vpop.f32.mrf.mxu0
  %v332 = vadd.f32 %v256, %v331
  %v333 = vpop.f32.mrf.mxu0
  %v334 = vpop.f32.mrf.mxu0
  %v335 = vadd.f32 %v256, %v334
  %v336 = vpop.f32.mrf.mxu0
  %337 = vdwg.mxu0
  %v338 = vadd.f32 %v33, %v324
  %v339 = vadd.f32 %v34, %v327
  %v340 = vadd.f32 %v35, %v332
  %v341 = vadd.f32 %v36, %v335
  %s342 = scalar_lea.vmem %s1, 1
  %v343 = vld [vmem:[%s342] sm:$0x1]
  %s344 = scalar_lea.vmem %s2, 1
  %v345 = vld [vmem:[%s344] sm:$0x1]
  %s346 = scalar_lea.vmem %s3, 16
  %v347 = vld [vmem:[%s346] sm:$0xf]
  %v348 = vld [vmem:[%s346 + $0x4] sm:$0xf]
  %v349 = vld [vmem:[%s346 + $0x8] sm:$0xf]
  %v350 = vld [vmem:[%s346 + $0xc] sm:$0xf]
  %s351 = scalar_lea.vmem %s4, 1
  %v352 = vld [vmem:[%s351] sm:$0x1]
  %s353 = scalar_lea.vmem %s5, 32
  %v354 = vld [vmem:[%s353] sm:$0xf]
  %v355 = vld [vmem:[%s353 + $0x4] sm:$0xf]
  %v356 = vld [vmem:[%s353 + $0x8] sm:$0xf]
  %v357 = vld [vmem:[%s353 + $0xc] sm:$0xf]
  %v358 = vld [vmem:[%s353 + $0x10] sm:$0xf]
  %v359 = vld [vmem:[%s353 + $0x14] sm:$0xf]
  %v360 = vld [vmem:[%s353 + $0x18] sm:$0xf]
  %v361 = vld [vmem:[%s353 + $0x1c] sm:$0xf]
  %s362 = scalar_lea.vmem %s6, 1
  %v363 = vld [vmem:[%s362] sm:$0x1]
  %v364 = vsel %vm53, %v338, 0.0
  %365 = vadd.xlane.f32.xlu0 %v364
  %v366 = vpop.xlane.xlu0 %365
  %v367 = vsel %vm53, %v339, 0.0
  %368 = vadd.xlane.f32.xlu0 %v367
  %v369 = vpop.xlane.xlu0 %368
  %v370 = vsel %vm53, %v340, 0.0
  %371 = vadd.xlane.f32.xlu0 %v370
  %v372 = vpop.xlane.xlu0 %371
  %v373 = vsel %vm53, %v341, 0.0
  %374 = vadd.xlane.f32.xlu0 %v373
  %v375 = vpop.xlane.xlu0 %374
  %v376 = vmul.f32 %v366, %v66
  %v377 = vmul.f32 %v369, %v66
  %v378 = vmul.f32 %v372, %v66
  %v379 = vmul.f32 %v375, %v66
  %v380 = vsub.f32 %v338, %v376
  %v381 = vsub.f32 %v339, %v377
  %v382 = vsub.f32 %v340, %v378
  %v383 = vsub.f32 %v341, %v379
  %v384 = vmul.f32 %v380, %v380
  %v385 = vmul.f32 %v381, %v381
  %v386 = vmul.f32 %v382, %v382
  %v387 = vmul.f32 %v383, %v383
  %v388 = vsel %vm53, %v384, 0.0
  %389 = vadd.xlane.f32.xlu0 %v388
  %v390 = vpop.xlane.xlu0 %389
  %v391 = vsel %vm53, %v385, 0.0
  %392 = vadd.xlane.f32.xlu0 %v391
  %v393 = vpop.xlane.xlu0 %392
  %v394 = vsel %vm53, %v386, 0.0
  %395 = vadd.xlane.f32.xlu0 %v394
  %v396 = vpop.xlane.xlu0 %395
  %v397 = vsel %vm53, %v387, 0.0
  %398 = vadd.xlane.f32.xlu0 %v397
  %v399 = vpop.xlane.xlu0 %398
  %v400 = vmul.f32 %v390, %v66
  %v401 = vmul.f32 %v393, %v66
  %v402 = vmul.f32 %v396, %v66
  %v403 = vmul.f32 %v399, %v66
  %v404 = vadd.f32 %v400, 1e-05
  %v405 = vadd.f32 %v401, 1e-05
  %v406 = vadd.f32 %v402, 1e-05
  %v407 = vadd.f32 %v403, 1e-05
  %v408 = vrsqrt.pop %v404
  %v409 = vrsqrt.pop %v405
  %v410 = vrsqrt.pop %v406
  %v411 = vrsqrt.pop %v407
  %v412 = vmul.f32 %v380, %v408
  %v413 = vmul.f32 %v381, %v409
  %v414 = vmul.f32 %v382, %v410
  %v415 = vmul.f32 %v383, %v411
  %v417 = vlaneseq
  %v418 = vshrl.u32 %v417, 7
  %v419 = vsub.s32 0, %v418
  %v420 = vrot.slane %v343, %v419
  %v422 = vmul.f32 %v412, %v420
  %v423 = vmul.f32 %v413, %v420
  %v424 = vmul.f32 %v414, %v420
  %v425 = vmul.f32 %v415, %v420
  %v427 = vlaneseq
  %v428 = vshrl.u32 %v427, 7
  %v429 = vsub.s32 0, %v428
  %v430 = vrot.slane %v345, %v429
  %v432 = vadd.f32 %v422, %v430
  %v433 = vadd.f32 %v423, %v430
  %v434 = vadd.f32 %v424, %v430
  %v435 = vadd.f32 %v425, %v430
  %v436 = vpack.c.bf16 %v433, %v432
  %v437 = vpack.c.bf16 %v435, %v434
  %v439 = vlaneseq
  %v440 = vshrl.u32 %v439, 7
  %v441 = vsub.s32 0, %v440
  %v442 = vrot.slane %v352, %v441
  %v448 = vunpack.c.l.b16 %v347
  %v449 = vunpack.c.l.b16 %v348
  %v450 = vunpack.c.l.b16 %v349
  %v451 = vunpack.c.l.b16 %v350
  %v452 = vpack.c.b16 %v449, %v448
  %v453 = vpack.c.b16 %v451, %v450
  %v457 = vsel %vm53, %v436, 0
  %v460 = vsel %vm53, %v437, 0
  %462 = vmatprep.subr.bf16.mxu0 0
  %463 = vmatpush1.bf16.msra.mxu0 0
  %464 = vmatprep.subr.bf16.mxu0 0
  %465 = vmatpush1.bf16.msra.mxu0 0
  %466 = vmatprep.subr.bf16.mxu0 0
  %467 = vmatpush1.bf16.msra.mxu0 0
  %468 = vmatprep.subr.bf16.mxu0 0
  %469 = vmatpush1.bf16.msra.mxu0 0
  %470 = vmatprep.subr.bf16.mxu0 0
  %471 = vmatpush1.bf16.msra.mxu0 0
  %472 = vmatprep.subr.bf16.mxu0 0
  %473 = vmatpush1.bf16.msra.mxu0 0
  %474 = vmatprep.subr.bf16.mxu0 0
  %475 = vmatpush1.bf16.msra.mxu0 %v453
  %476 = vmatprep.subr.bf16.mxu0 0
  %477 = vmatpush1.bf16.msra.mxu0 %v452
  %478 = vmatprep.subr.bf16.mxu0 0
  %479 = vmatpush2.bf16.msra.mxu0 0
  %480 = vmatprep.subr.bf16.mxu0 0
  %481 = vmatpush2.bf16.msra.mxu0 0
  %482 = vmatprep.subr.bf16.mxu0 0
  %483 = vmatpush2.bf16.msra.mxu0 0
  %484 = vmatprep.subr.bf16.mxu0 0
  %485 = vmatpush2.bf16.msra.mxu0 0
  %486 = vmatprep.subr.bf16.mxu0 0
  %487 = vmatpush2.bf16.msra.mxu0 0
  %488 = vmatprep.subr.bf16.mxu0 0
  %489 = vmatpush2.bf16.msra.mxu0 0
  %490 = vmatprep.subr.bf16.mxu0 0
  %491 = vmatpush2.bf16.msra.mxu0 0
  %492 = vmatprep.subr.bf16.mxu0 0
  %493 = vmatpush2.bf16.msra.mxu0 0
  %494 = vmatprep.mubr.bf16.mxu0 0
  %495 = vmatmul.mubr.bf16.gmra.mxu0 %v457
  %v496 = vpop.f32.mrf.mxu0
  %v497 = vadd.f32 %v442, %v496
  %v498 = vpop.f32.mrf.mxu0
  %v499 = vpop.f32.mrf.mxu0
  %v500 = vadd.f32 %v442, %v499
  %v501 = vpop.f32.mrf.mxu0
  %502 = vmatprep.mubr.bf16.mxu0 0
  %503 = vmatmul.mubr.bf16.gmra.mxu0 %v460
  %v504 = vpop.f32.mrf.mxu0
  %v505 = vadd.f32 %v442, %v504
  %v506 = vpop.f32.mrf.mxu0
  %v507 = vpop.f32.mrf.mxu0
  %v508 = vadd.f32 %v442, %v507
  %v509 = vpop.f32.mrf.mxu0
  %510 = vdwg.mxu0
  %v511 = vxor.u32 %v497, 2147483648
  %v512 = vxor.u32 %v500, 2147483648
  %v513 = vxor.u32 %v505, 2147483648
  %v514 = vxor.u32 %v508, 2147483648
  %v515 = vmul.f32 %v511, 1.442695
  %v516 = vpow.pop %v515
  %v517 = vmul.f32 %v512, 1.442695
  %v518 = vpow.pop %v517
  %v519 = vmul.f32 %v513, 1.442695
  %v520 = vpow.pop %v519
  %v521 = vmul.f32 %v514, 1.442695
  %v522 = vpow.pop %v521
  %v523 = vadd.f32 %v516, 1.0
  %v524 = vadd.f32 %v518, 1.0
  %v525 = vadd.f32 %v520, 1.0
  %v526 = vadd.f32 %v522, 1.0
  %v527 = vrcp.pop %v523
  %v528 = vmul.f32 1.0, %v527
  %v529 = vrcp.pop %v524
  %v530 = vmul.f32 1.0, %v529
  %v531 = vrcp.pop %v525
  %v532 = vmul.f32 1.0, %v531
  %v533 = vrcp.pop %v526
  %v534 = vmul.f32 1.0, %v533
  %v535 = vmul.f32 %v497, %v528
  %v536 = vmul.f32 %v500, %v530
  %v537 = vmul.f32 %v505, %v532
  %v538 = vmul.f32 %v508, %v534
  %543 = vrot.lane.b32.xlu0 %v497, 64
  %v544 = vpop.permute.xlu0 %543
  %545 = vrot.lane.b32.xlu0 %v500, 64
  %v546 = vpop.permute.xlu0 %545
  %547 = vrot.lane.b32.xlu0 %v505, 64
  %v548 = vpop.permute.xlu0 %547
  %549 = vrot.lane.b32.xlu0 %v508, 64
  %v550 = vpop.permute.xlu0 %549
  %v555 = vmul.f32 %v535, %v544
  %v556 = vmul.f32 %v536, %v546
  %v557 = vmul.f32 %v537, %v548
  %v558 = vmul.f32 %v538, %v550
  %v559 = vpack.c.bf16 %v556, %v555
  %v560 = vpack.c.bf16 %v558, %v557
  %v562 = vlaneseq
  %v563 = vshrl.u32 %v562, 7
  %v564 = vsub.s32 0, %v563
  %v565 = vrot.slane %v363, %v564
  %v575 = vunpack.c.l.b16 %v354
  %v576 = vunpack.c.l.b16 %v355
  %v577 = vunpack.c.l.b16 %v356
  %v578 = vunpack.c.l.b16 %v357
  %v579 = vunpack.c.l.b16 %v358
  %v580 = vunpack.c.l.b16 %v359
  %v581 = vunpack.c.l.b16 %v360
  %v582 = vunpack.c.l.b16 %v361
  %v583 = vpack.c.b16 %v576, %v575
  %v584 = vpack.c.b16 %v578, %v577
  %v585 = vpack.c.b16 %v580, %v579
  %v586 = vpack.c.b16 %v582, %v581
  %v592 = vsel %vm282, %v559, 0
  %v595 = vsel %vm282, %v560, 0
  %597 = vmatprep.subr.bf16.mxu0 0
  %598 = vmatpush1.bf16.msra.mxu0 0
  %599 = vmatprep.subr.bf16.mxu0 0
  %600 = vmatpush1.bf16.msra.mxu0 0
  %601 = vmatprep.subr.bf16.mxu0 0
  %602 = vmatpush1.bf16.msra.mxu0 0
  %603 = vmatprep.subr.bf16.mxu0 0
  %604 = vmatpush1.bf16.msra.mxu0 0
  %605 = vmatprep.subr.bf16.mxu0 0
  %606 = vmatpush1.bf16.msra.mxu0 %v586
  %607 = vmatprep.subr.bf16.mxu0 0
  %608 = vmatpush1.bf16.msra.mxu0 %v585
  %609 = vmatprep.subr.bf16.mxu0 0
  %610 = vmatpush1.bf16.msra.mxu0 %v584
  %611 = vmatprep.subr.bf16.mxu0 0
  %612 = vmatpush1.bf16.msra.mxu0 %v583
  %613 = vmatprep.subr.bf16.mxu0 0
  %614 = vmatpush2.bf16.msra.mxu0 0
  %615 = vmatprep.subr.bf16.mxu0 0
  %616 = vmatpush2.bf16.msra.mxu0 0
  %617 = vmatprep.subr.bf16.mxu0 0
  %618 = vmatpush2.bf16.msra.mxu0 0
  %619 = vmatprep.subr.bf16.mxu0 0
  %620 = vmatpush2.bf16.msra.mxu0 0
  %621 = vmatprep.subr.bf16.mxu0 0
  %622 = vmatpush2.bf16.msra.mxu0 0
  %623 = vmatprep.subr.bf16.mxu0 0
  %624 = vmatpush2.bf16.msra.mxu0 0
  %625 = vmatprep.subr.bf16.mxu0 0
  %626 = vmatpush2.bf16.msra.mxu0 0
  %627 = vmatprep.subr.bf16.mxu0 0
  %628 = vmatpush2.bf16.msra.mxu0 0
  %629 = vmatprep.mubr.bf16.mxu0 0
  %630 = vmatmul.mubr.bf16.gmra.mxu0 %v592
  %v631 = vpop.f32.mrf.mxu0
  %v632 = vadd.f32 %v565, %v631
  %v633 = vpop.f32.mrf.mxu0
  %v634 = vpop.f32.mrf.mxu0
  %v635 = vadd.f32 %v565, %v634
  %v636 = vpop.f32.mrf.mxu0
  %637 = vmatprep.mubr.bf16.mxu0 0
  %638 = vmatmul.mubr.bf16.gmra.mxu0 %v595
  %v639 = vpop.f32.mrf.mxu0
  %v640 = vadd.f32 %v565, %v639
  %v641 = vpop.f32.mrf.mxu0
  %v642 = vpop.f32.mrf.mxu0
  %v643 = vadd.f32 %v565, %v642
  %v644 = vpop.f32.mrf.mxu0
  %645 = vdwg.mxu0
  %v646 = vadd.f32 %v338, %v632
  %v647 = vadd.f32 %v339, %v635
  %v648 = vadd.f32 %v340, %v640
  %v649 = vadd.f32 %v341, %v643
  %v650 = vpack.c.bf16 %v647, %v646
  %v651 = vpack.c.bf16 %v649, %v648
  %v652 = vld [vmem:[%s7] sm:$0xf]
  %v653 = vld [vmem:[%s7 + $0x4] sm:$0xf]
  %v654 = vld [vmem:[%s7 + $0x8] sm:$0xf]
  %v655 = vld [vmem:[%s7 + $0xc] sm:$0xf]
  %v656 = vld [vmem:[%s8] sm:$0x1]
  %v658 = vlaneseq
  %v659 = vshrl.u32 %v658, 7
  %v660 = vsub.s32 0, %v659
  %v661 = vrot.slane %v656, %v660
  %v667 = vunpack.c.l.b16 %v652
  %v668 = vunpack.c.l.b16 %v653
  %v669 = vunpack.c.l.b16 %v654
  %v670 = vunpack.c.l.b16 %v655
  %v671 = vpack.c.b16 %v668, %v667
  %v672 = vpack.c.b16 %v670, %v669
  %v676 = vsel %vm53, %v650, 0
  %v679 = vsel %vm53, %v651, 0
  %681 = vmatprep.subr.bf16.mxu0 0
  %682 = vmatpush1.bf16.msra.mxu0 0
  %683 = vmatprep.subr.bf16.mxu0 0
  %684 = vmatpush1.bf16.msra.mxu0 0
  %685 = vmatprep.subr.bf16.mxu0 0
  %686 = vmatpush1.bf16.msra.mxu0 0
  %687 = vmatprep.subr.bf16.mxu0 0
  %688 = vmatpush1.bf16.msra.mxu0 0
  %689 = vmatprep.subr.bf16.mxu0 0
  %690 = vmatpush1.bf16.msra.mxu0 0
  %691 = vmatprep.subr.bf16.mxu0 0
  %692 = vmatpush1.bf16.msra.mxu0 0
  %693 = vmatprep.subr.bf16.mxu0 0
  %694 = vmatpush1.bf16.msra.mxu0 %v672
  %695 = vmatprep.subr.bf16.mxu0 0
  %696 = vmatpush1.bf16.msra.mxu0 %v671
  %697 = vmatprep.subr.bf16.mxu0 0
  %698 = vmatpush2.bf16.msra.mxu0 0
  %699 = vmatprep.subr.bf16.mxu0 0
  %700 = vmatpush2.bf16.msra.mxu0 0
  %701 = vmatprep.subr.bf16.mxu0 0
  %702 = vmatpush2.bf16.msra.mxu0 0
  %703 = vmatprep.subr.bf16.mxu0 0
  %704 = vmatpush2.bf16.msra.mxu0 0
  %705 = vmatprep.subr.bf16.mxu0 0
  %706 = vmatpush2.bf16.msra.mxu0 0
  %707 = vmatprep.subr.bf16.mxu0 0
  %708 = vmatpush2.bf16.msra.mxu0 0
  %709 = vmatprep.subr.bf16.mxu0 0
  %710 = vmatpush2.bf16.msra.mxu0 0
  %711 = vmatprep.subr.bf16.mxu0 0
  %712 = vmatpush2.bf16.msra.mxu0 0
  %713 = vmatprep.mubr.bf16.mxu0 0
  %714 = vmatmul.mubr.bf16.gmra.mxu0 %v676
  %v715 = vpop.f32.mrf.mxu0
  %v716 = vadd.f32 %v661, %v715
  %v717 = vpop.f32.mrf.mxu0
  %v718 = vpop.f32.mrf.mxu0
  %v719 = vadd.f32 %v661, %v718
  %v720 = vpop.f32.mrf.mxu0
  %721 = vmatprep.mubr.bf16.mxu0 0
  %722 = vmatmul.mubr.bf16.gmra.mxu0 %v679
  %v723 = vpop.f32.mrf.mxu0
  %v724 = vadd.f32 %v661, %v723
  %v725 = vpop.f32.mrf.mxu0
  %v726 = vpop.f32.mrf.mxu0
  %v727 = vadd.f32 %v661, %v726
  %v728 = vpop.f32.mrf.mxu0
  %729 = vdwg.mxu0
  %v730 = vxor.u32 %v716, 2147483648
  %v731 = vxor.u32 %v719, 2147483648
  %v732 = vxor.u32 %v724, 2147483648
  %v733 = vxor.u32 %v727, 2147483648
  %v734 = vmul.f32 %v730, 1.442695
  %v735 = vpow.pop %v734
  %v736 = vmul.f32 %v731, 1.442695
  %v737 = vpow.pop %v736
  %v738 = vmul.f32 %v732, 1.442695
  %v739 = vpow.pop %v738
  %v740 = vmul.f32 %v733, 1.442695
  %v741 = vpow.pop %v740
  %v742 = vadd.f32 %v735, 1.0
  %v743 = vadd.f32 %v737, 1.0
  %v744 = vadd.f32 %v739, 1.0
  %v745 = vadd.f32 %v741, 1.0
  %v746 = vrcp.pop %v742
  %v747 = vmul.f32 1.0, %v746
  %v748 = vrcp.pop %v743
  %v749 = vmul.f32 1.0, %v748
  %v750 = vrcp.pop %v744
  %v751 = vmul.f32 1.0, %v750
  %v752 = vrcp.pop %v745
  %v753 = vmul.f32 1.0, %v752
  %vm754 = vcmask 130048
  %755 = vst.msk [vmem:[%s9] sm:$0xff] %vm754, %v747
  %756 = vst.msk [vmem:[%s9 + $0x8] sm:$0xff] %vm754, %v749
  %757 = vst.msk [vmem:[%s9 + $0x10] sm:$0xff] %vm754, %v751
  %758 = vst.msk [vmem:[%s9 + $0x18] sm:$0xff] %vm754, %v753
  // Predicated region
  $region38: #{lmfnet_forward.5} parent=0 // pred_check
    _
  $region39: #{lmfnet_forward.5} parent=0 // pred_check_branch
    %760 = sbr.rel (0) target = $region41
  $region40: #{lmfnet_forward.5} parent=0 // pred_region
    _
  $region41: #{lmfnet_forward.5} parent=0 // pred_fallthru
    _
  // Predicated region
  $region42: #{lmfnet_forward.5} parent=0 // pred_check
    _
  $region43: #{lmfnet_forward.5} parent=0 // pred_check_branch
    %762 = sbr.rel (0) target = $region45
  $region44: #{lmfnet_forward.5} parent=0 // pred_region
    _
  $region45: #{lmfnet_forward.5} parent=0 // pred_fallthru
    _

</llo_original>
